<compile_context>
chip_gen: v5e
topology: v5e:2x2
jax: 0.10.0
libtpu: 0.0.40
codegen_flags: <defaults>
</compile_context>

<pallas_src>
import functools
import math

import jax
import jax.numpy as jnp
from jax import lax
from jax.experimental import pallas as pl
from jax.experimental.pallas import tpu as pltpu


def _conv_up_block_kernel(x_ref, w1_ref, b1_ref, w2_ref, b2_ref, o_ref,
                          xpad_ref, mid_ref, *,
                          H, W, cin, c1, mid, r, cout, KH, KW, tho):
    t = pl.program_id(1)
    Wout = W * r

    # ---------- once per image: conv1 (single im2col matmul) + pixel shuffle ----------
    @pl.when(t == 0)
    def _():
        # zero halo for conv1 built in VMEM (replaces a host-side jnp.pad)
        xpad_ref[...] = jnp.zeros_like(xpad_ref)
        xpad_ref[1:H + 1, 1:W + 1, :] = x_ref[0]
        xp = xpad_ref[...]                                          # (H+2, W+2, cin)

        cols = [xp[kh:kh + H, kw:kw + W, :].reshape(H * W, cin)
                for kh in range(KH) for kw in range(KW)]
        patches = jnp.concatenate(cols, axis=-1)                    # (H*W, KH*KW*cin)
        pre = jnp.dot(patches, w1_ref[...],
                      preferred_element_type=jnp.float32) + b1_ref[...]
        pre = pre.reshape(H, W, c1)        # channels host-permuted to (i, j, c) order

        # pixel shuffle (+r px halo) into the scratch:
        #   mid_ref[hp, i, wp, j, c] == shuffled[(hp-1)*r + i, (wp-1)*r + j, c]
        # written as r*r contiguous-lane slabs (no in-kernel lane splitting needed).
        mid_ref[...] = jnp.zeros_like(mid_ref)
        for i in range(r):
            for j in range(r):
                slab = pre[:, :, (i * r + j) * mid:(i * r + j + 1) * mid]   # (H, W, mid)
                mid_ref[pl.ds(1, H), i, pl.ds(1, W), j, :] = slab

    # ---------- per output-row tile: conv2 (im2col matmul) + bias + GELU ----------
    hp0 = pl.multiple_of(t * (tho // r), tho // r)
    blk = mid_ref[pl.ds(hp0, tho // r + 2)]                # (tho//r+2, r, W+2, r, mid)
    blk = blk.reshape(tho + 2 * r, (W + 2) * r, mid)       # padded shuffled rows/cols

    # Padded-coordinate offset of shuffled row/col 0 is r; a 3x3 tap `a` samples
    # shuffled row (y + a - 1)  ->  padded row (y + a - 1 + r).
    ro = r - 1
    cols2 = [blk[a + ro:a + ro + tho, b + ro:b + ro + Wout, :].reshape(tho * Wout, mid)
             for a in range(KH) for b in range(KW)]
    patches2 = jnp.concatenate(cols2, axis=-1)             # (tho*Wout, KH*KW*mid)
    acc = jnp.dot(patches2, w2_ref[...],
                  preferred_element_type=jnp.float32) + b2_ref[...]
    # exact GELU (torch.nn.GELU default): 0.5 * x * (1 + erf(x / sqrt(2)))
    acc = 0.5 * acc * (1.0 + lax.erf(acc * (1.0 / math.sqrt(2.0))))
    # lane-dense, NCHW-flat store: last axis is tho*Wout (multiple of 128 lanes)
    o_ref[...] = jnp.transpose(acc).reshape(1, cout, tho * Wout).astype(o_ref.dtype)


def conv_up_block_forward(x_nchw, params, *, stride):
    """Conv_Up_Block.forward (non-tuple input): act(norm(conv2(conv1(x))))."""
    w1, b1, w2, b2 = params["w1"], params["b1"], params["w2"], params["b2"]
    KH, KW, cin, c1 = w1.shape
    _, _, mid, cout = w2.shape
    r = stride
    N, _, H, W = x_nchw.shape
    Hout, Wout = H * r, W * r

    # Fold the PixelShuffle channel reordering into w1/b1 host-side:
    # torch order (c, i, j) -> kernel order (i, j, c).  (Free layout plumbing.)
    m = jnp.arange(c1)
    i_idx, j_idx, c_idx = m // (r * mid), (m // mid) % r, m % mid
    perm = c_idx * (r * r) + i_idx * r + j_idx
    w1_mat = w1[..., perm].reshape(KH * KW * cin, c1)
    b1_row = b1[perm].reshape(1, c1)
    w2_mat = w2.reshape(KH * KW * mid, cout)
    b2_row = b2.reshape(1, cout)

    x = jnp.transpose(x_nchw, (0, 2, 3, 1))                         # NCHW -> NHWC

    # Output row-tile: multiple of r, divides Hout, and tho*Wout is a multiple of 128
    # lanes (or the full extent) so the stores stay unmasked.
    tho = Hout
    for cand in range(r, Hout, r):
        if Hout % cand == 0 and (cand * Wout) % 128 == 0:
            tho = cand
            break
    T = Hout // tho

    kernel = functools.partial(
        _conv_up_block_kernel, H=H, W=W, cin=cin, c1=c1, mid=mid, r=r,
        cout=cout, KH=KH, KW=KW, tho=tho)

    out_flat = pl.pallas_call(
        kernel,
        out_shape=jax.ShapeDtypeStruct((N, cout, Hout * Wout), jnp.float32),
        grid_spec=pltpu.PrefetchScalarGridSpec(
            num_scalar_prefetch=0,
            grid=(N, T),
            in_specs=[
                pl.BlockSpec((1, H, W, cin), lambda n, t: (n, 0, 0, 0)),
                pl.BlockSpec((KH * KW * cin, c1), lambda n, t: (0, 0)),
                pl.BlockSpec((1, c1), lambda n, t: (0, 0)),
                pl.BlockSpec((KH * KW * mid, cout), lambda n, t: (0, 0)),
                pl.BlockSpec((1, cout), lambda n, t: (0, 0)),
            ],
            out_specs=pl.BlockSpec((1, cout, tho * Wout), lambda n, t: (n, 0, t)),
            scratch_shapes=[
                pltpu.VMEM((H + 2, W + 2, cin), jnp.float32),           # conv1 halo
                pltpu.VMEM((H + 2, r, W + 2, r, mid), jnp.float32),     # shuffled mid (+halo)
            ],
        ),
        compiler_params=pltpu.CompilerParams(
            dimension_semantics=("parallel", "arbitrary")),
    )(x, w1_mat, b1_row, w2_mat, b2_row)

    # (N, cout, Hout*Wout) is already NCHW-flat -> free reshape, no output transpose.
    return out_flat.reshape(N, cout, Hout, Wout)


# ----------------------------------------------------------------------------
# Reference (plain JAX/XLA) with an *independent* PixelShuffle formulation
# ----------------------------------------------------------------------------
def _ref_forward(x_nchw, params, *, stride):
    dn = ("NHWC", "HWIO", "NHWC")
    r = stride
    x = jnp.transpose(x_nchw, (0, 2, 3, 1))
    y = lax.conv_general_dilated(x, params["w1"], (1, 1), "SAME",
                                 dimension_numbers=dn) + params["b1"]
    # torch.nn.PixelShuffle: out[n, c, h*r+i, w*r+j] = in[n, c*r*r + i*r + j, h, w]
    # (explicit gather; independent of the kernel's shuffle formulation)
    N, H, W, C = y.shape
    c = C // (r * r)
    hr = jnp.arange(H * r)[:, None, None]
    wr = jnp.arange(W * r)[None, :, None]
    cc = jnp.arange(c)[None, None, :]
    y = y[:, hr // r, wr // r, cc * (r * r) + (hr % r) * r + (wr % r)]
    y = lax.conv_general_dilated(y, params["w2"], (1, 1), "SAME",
                                 dimension_numbers=dn) + params["b2"]
    y = 0.5 * y * (1.0 + lax.erf(y * (1.0 / math.sqrt(2.0))))
    return jnp.transpose(y, (0, 3, 1, 2))


if __name__ == "__main__":
    # Small synthetic configuration (ngf <= new_ngf branch of Conv_Up_Block)
    N, ngf, new_ngf = 2, 8, 16
    H = W = 8
    ks, stride = 3, 2
    mid = ngf // 4                                     # factor = 4
    c1_out = mid * stride * stride                     # conv1 channels pre-shuffle

    key = jax.random.PRNGKey(0)
    kx, kw1, kb1, kw2, kb2 = jax.random.split(key, 5)
    x = jax.random.normal(kx, (N, ngf, H, W), dtype=jnp.float32)   # NCHW input

    fan1 = ngf * ks * ks
    fan2 = mid * 3 * 3
    params = {
        "w1": jax.random.uniform(kw1, (ks, ks, ngf, c1_out), jnp.float32,
                                 -1.0 / math.sqrt(fan1), 1.0 / math.sqrt(fan1)),
        "b1": jax.random.uniform(kb1, (c1_out,), jnp.float32,
                                 -1.0 / math.sqrt(fan1), 1.0 / math.sqrt(fan1)),
        "w2": jax.random.uniform(kw2, (3, 3, mid, new_ngf), jnp.float32,
                                 -1.0 / math.sqrt(fan2), 1.0 / math.sqrt(fan2)),
        "b2": jax.random.uniform(kb2, (new_ngf,), jnp.float32,
                                 -1.0 / math.sqrt(fan2), 1.0 / math.sqrt(fan2)),
    }

    out = jax.block_until_ready(conv_up_block_forward(x, params, stride=stride))
    ref = jax.block_until_ready(_ref_forward(x, params, stride=stride))

    assert out.shape == (N, new_ngf, H * stride, W * stride), out.shape
    max_err = float(jnp.abs(out - ref).max())
    assert jnp.allclose(out, ref, atol=5e-4, rtol=5e-4), max_err

    print("KERNEL_OK")
</pallas_src>

<mosaic_0001>
module attributes {stable_mosaic.version = 11 : i64} {
  func.func @_conv_up_block_kernel(%arg0: i32, %arg1: i32, %arg2: memref<1x8x8x8xf32, #tpu.memory_space<vmem>>, %arg3: memref<72x8xf32, #tpu.memory_space<vmem>>, %arg4: memref<1x8xf32, #tpu.memory_space<vmem>>, %arg5: memref<18x16xf32, #tpu.memory_space<vmem>>, %arg6: memref<1x16xf32, #tpu.memory_space<vmem>>, %arg7: memref<1x16x128xf32, #tpu.memory_space<vmem>>, %arg8: memref<10x10x8xf32, #tpu.memory_space<vmem>>, %arg9: memref<10x2x10x2x2xf32, #tpu.memory_space<vmem>>) attributes {dimension_semantics = [#tpu.dimension_semantics<parallel>, #tpu.dimension_semantics<arbitrary>], iteration_bounds = array<i64: 2, 2>, scalar_prefetch = 0 : i64, scratch_operands = 2 : i64, tpu.core_type = #tpu.core_type<tc>, window_params = [{transform_indices = @transform_0, window_bounds = array<i64: 1, 8, 8, 8>}, {pipeline_mode = #tpu.pipeline_mode<synchronous>, transform_indices = @transform_1, window_bounds = array<i64: 72, 8>}, {pipeline_mode = #tpu.pipeline_mode<synchronous>, transform_indices = @transform_2, window_bounds = array<i64: 1, 8>}, {pipeline_mode = #tpu.pipeline_mode<synchronous>, transform_indices = @transform_3, window_bounds = array<i64: 18, 16>}, {pipeline_mode = #tpu.pipeline_mode<synchronous>, transform_indices = @transform_4, window_bounds = array<i64: 1, 16>}, {transform_indices = @transform_5, window_bounds = array<i64: 1, 16, 128>}]} {
    %c0_i32 = arith.constant 0 : i32
    %0 = arith.cmpi eq, %arg1, %c0_i32 : i32
    %1 = arith.extui %0 : i1 to i32
    %c0_i32_0 = arith.constant 0 : i32
    %2 = arith.cmpi ne, %1, %c0_i32_0 : i32
    scf.if %2 {
      %cst_14 = arith.constant 0.000000e+00 : f32
      %43 = vector.broadcast %cst_14 : f32 to vector<10x10x8xf32>
      %c0_15 = arith.constant 0 : index
      %c0_16 = arith.constant 0 : index
      %c0_17 = arith.constant 0 : index
      %44 = vector.load %arg8[%c0_15, %c0_16, %c0_17] : memref<10x10x8xf32, #tpu.memory_space<vmem>>, vector<10x10x8xf32>
      tpu.vector_store %arg8[%c0_15, %c0_16, %c0_17], %43 {strides = array<i32>} : memref<10x10x8xf32, #tpu.memory_space<vmem>>, vector<10x10x8xf32>,
      %c0_18 = arith.constant 0 : index
      %c0_19 = arith.constant 0 : index
      %c0_20 = arith.constant 0 : index
      %c0_21 = arith.constant 0 : index
      %45 = vector.load %arg2[%c0_18, %c0_19, %c0_20, %c0_21] : memref<1x8x8x8xf32, #tpu.memory_space<vmem>>, vector<1x8x8x8xf32>
      %46 = vector.shape_cast %45 : vector<1x8x8x8xf32> to vector<8x8x8xf32>
      %c1 = arith.constant 1 : index
      %c1_22 = arith.constant 1 : index
      %c0_23 = arith.constant 0 : index
      %47 = vector.load %arg8[%c1, %c1_22, %c0_23] : memref<10x10x8xf32, #tpu.memory_space<vmem>>, vector<8x8x8xf32>
      tpu.vector_store %arg8[%c1, %c1_22, %c0_23], %46 {strides = array<i32>} : memref<10x10x8xf32, #tpu.memory_space<vmem>>, vector<8x8x8xf32>,
      %c0_24 = arith.constant 0 : index
      %c0_25 = arith.constant 0 : index
      %c0_26 = arith.constant 0 : index
      %48 = vector.load %arg8[%c0_24, %c0_25, %c0_26] : memref<10x10x8xf32, #tpu.memory_space<vmem>>, vector<10x10x8xf32>
      %49 = vector.extract_strided_slice %48 {offsets = [0, 0, 0], sizes = [8, 8, 8], strides = [1, 1, 1]} : vector<10x10x8xf32> to vector<8x8x8xf32>
      %50 = vector.shape_cast %49 : vector<8x8x8xf32> to vector<64x8xf32>
      %51 = vector.extract_strided_slice %48 {offsets = [0, 1, 0], sizes = [8, 8, 8], strides = [1, 1, 1]} : vector<10x10x8xf32> to vector<8x8x8xf32>
      %52 = vector.shape_cast %51 : vector<8x8x8xf32> to vector<64x8xf32>
      %53 = vector.extract_strided_slice %48 {offsets = [0, 2, 0], sizes = [8, 8, 8], strides = [1, 1, 1]} : vector<10x10x8xf32> to vector<8x8x8xf32>
      %54 = vector.shape_cast %53 : vector<8x8x8xf32> to vector<64x8xf32>
      %55 = vector.extract_strided_slice %48 {offsets = [1, 0, 0], sizes = [8, 8, 8], strides = [1, 1, 1]} : vector<10x10x8xf32> to vector<8x8x8xf32>
      %56 = vector.shape_cast %55 : vector<8x8x8xf32> to vector<64x8xf32>
      %57 = vector.extract_strided_slice %48 {offsets = [1, 1, 0], sizes = [8, 8, 8], strides = [1, 1, 1]} : vector<10x10x8xf32> to vector<8x8x8xf32>
      %58 = vector.shape_cast %57 : vector<8x8x8xf32> to vector<64x8xf32>
      %59 = vector.extract_strided_slice %48 {offsets = [1, 2, 0], sizes = [8, 8, 8], strides = [1, 1, 1]} : vector<10x10x8xf32> to vector<8x8x8xf32>
      %60 = vector.shape_cast %59 : vector<8x8x8xf32> to vector<64x8xf32>
      %61 = vector.extract_strided_slice %48 {offsets = [2, 0, 0], sizes = [8, 8, 8], strides = [1, 1, 1]} : vector<10x10x8xf32> to vector<8x8x8xf32>
      %62 = vector.shape_cast %61 : vector<8x8x8xf32> to vector<64x8xf32>
      %63 = vector.extract_strided_slice %48 {offsets = [2, 1, 0], sizes = [8, 8, 8], strides = [1, 1, 1]} : vector<10x10x8xf32> to vector<8x8x8xf32>
      %64 = vector.shape_cast %63 : vector<8x8x8xf32> to vector<64x8xf32>
      %65 = vector.extract_strided_slice %48 {offsets = [2, 2, 0], sizes = [8, 8, 8], strides = [1, 1, 1]} : vector<10x10x8xf32> to vector<8x8x8xf32>
      %66 = vector.shape_cast %65 : vector<8x8x8xf32> to vector<64x8xf32>
      %67 = tpu.concatenate %50, %52, %54, %56, %58, %60, %62, %64, %66 in 1 : vector<64x8xf32>, vector<64x8xf32>, vector<64x8xf32>, vector<64x8xf32>, vector<64x8xf32>, vector<64x8xf32>, vector<64x8xf32>, vector<64x8xf32>, vector<64x8xf32> -> vector<64x72xf32>
      %c0_27 = arith.constant 0 : index
      %c0_28 = arith.constant 0 : index
      %68 = vector.load %arg3[%c0_27, %c0_28] : memref<72x8xf32, #tpu.memory_space<vmem>>, vector<72x8xf32>
      %cst_29 = arith.constant dense<0.000000e+00> : vector<64x8xf32>
      %69 = tpu.matmul %67, %68, %cst_29 {dimension_numbers = #tpu.dot_dimension_numbers<[1], [0], [0], [1], [0, 0, 1, 1], [], []>} : vector<64x72xf32>, vector<72x8xf32>, vector<64x8xf32> -> vector<64x8xf32>
      %c0_30 = arith.constant 0 : index
      %c0_31 = arith.constant 0 : index
      %70 = vector.load %arg4[%c0_30, %c0_31] : memref<1x8xf32, #tpu.memory_space<vmem>>, vector<1x8xf32>
      %71 = vector.broadcast %70 : vector<1x8xf32> to vector<64x8xf32>
      %72 = arith.addf %69, %71 : vector<64x8xf32>
      %73 = vector.shape_cast %72 : vector<64x8xf32> to vector<8x8x8xf32>
      %cst_32 = arith.constant 0.000000e+00 : f32
      %74 = vector.broadcast %cst_32 : f32 to vector<10x2x10x2x2xf32>
      %c0_33 = arith.constant 0 : index
      %c0_34 = arith.constant 0 : index
      %c0_35 = arith.constant 0 : index
      %c0_36 = arith.constant 0 : index
      %c0_37 = arith.constant 0 : index
      %75 = vector.load %arg9[%c0_33, %c0_34, %c0_35, %c0_36, %c0_37] : memref<10x2x10x2x2xf32, #tpu.memory_space<vmem>>, vector<10x2x10x2x2xf32>
      tpu.vector_store %arg9[%c0_33, %c0_34, %c0_35, %c0_36, %c0_37], %74 {strides = array<i32>} : memref<10x2x10x2x2xf32, #tpu.memory_space<vmem>>, vector<10x2x10x2x2xf32>,
      %76 = vector.extract_strided_slice %73 {offsets = [0, 0, 0], sizes = [8, 8, 2], strides = [1, 1, 1]} : vector<8x8x8xf32> to vector<8x8x2xf32>
      %c1_38 = arith.constant 1 : index
      %c0_39 = arith.constant 0 : index
      %c1_40 = arith.constant 1 : index
      %c0_41 = arith.constant 0 : index
      %c0_42 = arith.constant 0 : index
      %77 = vector.load %arg9[%c1_38, %c0_39, %c1_40, %c0_41, %c0_42] : memref<10x2x10x2x2xf32, #tpu.memory_space<vmem>>, vector<8x1x8x1x2xf32>
      %78 = vector.shape_cast %77 : vector<8x1x8x1x2xf32> to vector<8x8x2xf32>
      %79 = vector.shape_cast %76 : vector<8x8x2xf32> to vector<8x1x8x1x2xf32>
      tpu.vector_store %arg9[%c1_38, %c0_39, %c1_40, %c0_41, %c0_42], %79 {strides = array<i32>} : memref<10x2x10x2x2xf32, #tpu.memory_space<vmem>>, vector<8x1x8x1x2xf32>,
      %80 = vector.extract_strided_slice %73 {offsets = [0, 0, 2], sizes = [8, 8, 2], strides = [1, 1, 1]} : vector<8x8x8xf32> to vector<8x8x2xf32>
      %c1_43 = arith.constant 1 : index
      %c0_44 = arith.constant 0 : index
      %c1_45 = arith.constant 1 : index
      %c1_46 = arith.constant 1 : index
      %c0_47 = arith.constant 0 : index
      %81 = vector.load %arg9[%c1_43, %c0_44, %c1_45, %c1_46, %c0_47] : memref<10x2x10x2x2xf32, #tpu.memory_space<vmem>>, vector<8x1x8x1x2xf32>
      %82 = vector.shape_cast %81 : vector<8x1x8x1x2xf32> to vector<8x8x2xf32>
      %83 = vector.shape_cast %80 : vector<8x8x2xf32> to vector<8x1x8x1x2xf32>
      tpu.vector_store %arg9[%c1_43, %c0_44, %c1_45, %c1_46, %c0_47], %83 {strides = array<i32>} : memref<10x2x10x2x2xf32, #tpu.memory_space<vmem>>, vector<8x1x8x1x2xf32>,
      %84 = vector.extract_strided_slice %73 {offsets = [0, 0, 4], sizes = [8, 8, 2], strides = [1, 1, 1]} : vector<8x8x8xf32> to vector<8x8x2xf32>
      %c1_48 = arith.constant 1 : index
      %c1_49 = arith.constant 1 : index
      %c1_50 = arith.constant 1 : index
      %c0_51 = arith.constant 0 : index
      %c0_52 = arith.constant 0 : index
      %85 = vector.load %arg9[%c1_48, %c1_49, %c1_50, %c0_51, %c0_52] : memref<10x2x10x2x2xf32, #tpu.memory_space<vmem>>, vector<8x1x8x1x2xf32>
      %86 = vector.shape_cast %85 : vector<8x1x8x1x2xf32> to vector<8x8x2xf32>
      %87 = vector.shape_cast %84 : vector<8x8x2xf32> to vector<8x1x8x1x2xf32>
      tpu.vector_store %arg9[%c1_48, %c1_49, %c1_50, %c0_51, %c0_52], %87 {strides = array<i32>} : memref<10x2x10x2x2xf32, #tpu.memory_space<vmem>>, vector<8x1x8x1x2xf32>,
      %88 = vector.extract_strided_slice %73 {offsets = [0, 0, 6], sizes = [8, 8, 2], strides = [1, 1, 1]} : vector<8x8x8xf32> to vector<8x8x2xf32>
      %c1_53 = arith.constant 1 : index
      %c1_54 = arith.constant 1 : index
      %c1_55 = arith.constant 1 : index
      %c1_56 = arith.constant 1 : index
      %c0_57 = arith.constant 0 : index
      %89 = vector.load %arg9[%c1_53, %c1_54, %c1_55, %c1_56, %c0_57] : memref<10x2x10x2x2xf32, #tpu.memory_space<vmem>>, vector<8x1x8x1x2xf32>
      %90 = vector.shape_cast %89 : vector<8x1x8x1x2xf32> to vector<8x8x2xf32>
      %91 = vector.shape_cast %88 : vector<8x8x2xf32> to vector<8x1x8x1x2xf32>
      tpu.vector_store %arg9[%c1_53, %c1_54, %c1_55, %c1_56, %c0_57], %91 {strides = array<i32>} : memref<10x2x10x2x2xf32, #tpu.memory_space<vmem>>, vector<8x1x8x1x2xf32>,
    } else {
    }
    %c4_i32 = arith.constant 4 : i32
    %3 = arith.muli %arg1, %c4_i32 : i32
    %4 = tpu.assume_multiple %3, 4 : i32
    %5 = arith.index_cast %4 : i32 to index
    %c0 = arith.constant 0 : index
    %c0_1 = arith.constant 0 : index
    %c0_2 = arith.constant 0 : index
    %c0_3 = arith.constant 0 : index
    %6 = vector.load %arg9[%5, %c0, %c0_1, %c0_2, %c0_3] : memref<10x2x10x2x2xf32, #tpu.memory_space<vmem>>, vector<6x2x10x2x2xf32>
    %7 = vector.shape_cast %6 : vector<6x2x10x2x2xf32> to vector<12x20x2xf32>
    %8 = vector.extract_strided_slice %7 {offsets = [1, 1, 0], sizes = [8, 16, 2], strides = [1, 1, 1]} : vector<12x20x2xf32> to vector<8x16x2xf32>
    %9 = vector.shape_cast %8 : vector<8x16x2xf32> to vector<128x2xf32>
    %10 = vector.extract_strided_slice %7 {offsets = [1, 2, 0], sizes = [8, 16, 2], strides = [1, 1, 1]} : vector<12x20x2xf32> to vector<8x16x2xf32>
    %11 = vector.shape_cast %10 : vector<8x16x2xf32> to vector<128x2xf32>
    %12 = vector.extract_strided_slice %7 {offsets = [1, 3, 0], sizes = [8, 16, 2], strides = [1, 1, 1]} : vector<12x20x2xf32> to vector<8x16x2xf32>
    %13 = vector.shape_cast %12 : vector<8x16x2xf32> to vector<128x2xf32>
    %14 = vector.extract_strided_slice %7 {offsets = [2, 1, 0], sizes = [8, 16, 2], strides = [1, 1, 1]} : vector<12x20x2xf32> to vector<8x16x2xf32>
    %15 = vector.shape_cast %14 : vector<8x16x2xf32> to vector<128x2xf32>
    %16 = vector.extract_strided_slice %7 {offsets = [2, 2, 0], sizes = [8, 16, 2], strides = [1, 1, 1]} : vector<12x20x2xf32> to vector<8x16x2xf32>
    %17 = vector.shape_cast %16 : vector<8x16x2xf32> to vector<128x2xf32>
    %18 = vector.extract_strided_slice %7 {offsets = [2, 3, 0], sizes = [8, 16, 2], strides = [1, 1, 1]} : vector<12x20x2xf32> to vector<8x16x2xf32>
    %19 = vector.shape_cast %18 : vector<8x16x2xf32> to vector<128x2xf32>
    %20 = vector.extract_strided_slice %7 {offsets = [3, 1, 0], sizes = [8, 16, 2], strides = [1, 1, 1]} : vector<12x20x2xf32> to vector<8x16x2xf32>
    %21 = vector.shape_cast %20 : vector<8x16x2xf32> to vector<128x2xf32>
    %22 = vector.extract_strided_slice %7 {offsets = [3, 2, 0], sizes = [8, 16, 2], strides = [1, 1, 1]} : vector<12x20x2xf32> to vector<8x16x2xf32>
    %23 = vector.shape_cast %22 : vector<8x16x2xf32> to vector<128x2xf32>
    %24 = vector.extract_strided_slice %7 {offsets = [3, 3, 0], sizes = [8, 16, 2], strides = [1, 1, 1]} : vector<12x20x2xf32> to vector<8x16x2xf32>
    %25 = vector.shape_cast %24 : vector<8x16x2xf32> to vector<128x2xf32>
    %26 = tpu.concatenate %9, %11, %13, %15, %17, %19, %21, %23, %25 in 1 : vector<128x2xf32>, vector<128x2xf32>, vector<128x2xf32>, vector<128x2xf32>, vector<128x2xf32>, vector<128x2xf32>, vector<128x2xf32>, vector<128x2xf32>, vector<128x2xf32> -> vector<128x18xf32>
    %c0_4 = arith.constant 0 : index
    %c0_5 = arith.constant 0 : index
    %27 = vector.load %arg5[%c0_4, %c0_5] : memref<18x16xf32, #tpu.memory_space<vmem>>, vector<18x16xf32>
    %cst = arith.constant dense<0.000000e+00> : vector<128x16xf32>
    %28 = tpu.matmul %26, %27, %cst {dimension_numbers = #tpu.dot_dimension_numbers<[1], [0], [0], [1], [0, 0, 1, 1], [], []>} : vector<128x18xf32>, vector<18x16xf32>, vector<128x16xf32> -> vector<128x16xf32>
    %c0_6 = arith.constant 0 : index
    %c0_7 = arith.constant 0 : index
    %29 = vector.load %arg6[%c0_6, %c0_7] : memref<1x16xf32, #tpu.memory_space<vmem>>, vector<1x16xf32>
    %30 = vector.broadcast %29 : vector<1x16xf32> to vector<128x16xf32>
    %31 = arith.addf %28, %30 : vector<128x16xf32>
    %cst_8 = arith.constant 5.000000e-01 : f32
    %32 = vector.broadcast %cst_8 : f32 to vector<128x16xf32>
    %33 = arith.mulf %32, %31 : vector<128x16xf32>
    %cst_9 = arith.constant 0.707106769 : f32
    %34 = vector.broadcast %cst_9 : f32 to vector<128x16xf32>
    %35 = arith.mulf %31, %34 : vector<128x16xf32>
    %36 = math.erf %35 : vector<128x16xf32>
    %cst_10 = arith.constant 1.000000e+00 : f32
    %37 = vector.broadcast %cst_10 : f32 to vector<128x16xf32>
    %38 = arith.addf %37, %36 : vector<128x16xf32>
    %39 = arith.mulf %33, %38 : vector<128x16xf32>
    %40 = tpu.transpose %39, [1, 0] : vector<128x16xf32> -> vector<16x128xf32>
    %41 = vector.shape_cast %40 : vector<16x128xf32> to vector<1x16x128xf32>
    %c0_11 = arith.constant 0 : index
    %c0_12 = arith.constant 0 : index
    %c0_13 = arith.constant 0 : index
    %42 = vector.load %arg7[%c0_11, %c0_12, %c0_13] : memref<1x16x128xf32, #tpu.memory_space<vmem>>, vector<1x16x128xf32>
    tpu.vector_store %arg7[%c0_11, %c0_12, %c0_13], %41 {strides = array<i32>} : memref<1x16x128xf32, #tpu.memory_space<vmem>>, vector<1x16x128xf32>,
    return
  }
  func.func @transform_0(%arg0: i32, %arg1: i32) -> (i32, i32, i32, i32) {
    %c0_i32 = arith.constant 0 : i32
    %c0_i32_0 = arith.constant 0 : i32
    %c0_i32_1 = arith.constant 0 : i32
    %c0_i32_2 = arith.constant 0 : i32
    return %arg0, %c0_i32, %c0_i32_0, %c0_i32_1 : i32, i32, i32, i32
  }
  func.func @transform_1(%arg0: i32, %arg1: i32) -> (i32, i32) {
    %c0_i32 = arith.constant 0 : i32
    %c0_i32_0 = arith.constant 0 : i32
    %c0_i32_1 = arith.constant 0 : i32
    return %c0_i32, %c0_i32_0 : i32, i32
  }
  func.func @transform_2(%arg0: i32, %arg1: i32) -> (i32, i32) {
    %c0_i32 = arith.constant 0 : i32
    %c0_i32_0 = arith.constant 0 : i32
    %c0_i32_1 = arith.constant 0 : i32
    return %c0_i32, %c0_i32_0 : i32, i32
  }
  func.func @transform_3(%arg0: i32, %arg1: i32) -> (i32, i32) {
    %c0_i32 = arith.constant 0 : i32
    %c0_i32_0 = arith.constant 0 : i32
    %c0_i32_1 = arith.constant 0 : i32
    return %c0_i32, %c0_i32_0 : i32, i32
  }
  func.func @transform_4(%arg0: i32, %arg1: i32) -> (i32, i32) {
    %c0_i32 = arith.constant 0 : i32
    %c0_i32_0 = arith.constant 0 : i32
    %c0_i32_1 = arith.constant 0 : i32
    return %c0_i32, %c0_i32_0 : i32, i32
  }
  func.func @transform_5(%arg0: i32, %arg1: i32) -> (i32, i32, i32) {
    %c0_i32 = arith.constant 0 : i32
    %c0_i32_0 = arith.constant 0 : i32
    return %arg0, %c0_i32, %arg1 : i32, i32, i32
  }
}

</mosaic_0001>

<llo_original>
// kernel: tpu_custom_call.1
$region0: #{tpu_custom_call.1}
  #allocation0 [shape = 'u32[]', space=smem, size = 0x4, offset = 0x4, fixed_abs, tag = 'smem constant byte address 0x4 - core index']
  #allocation1 [shape = 'u32[72,128]{1,0:T(1,128)}', space=vmem, size = 0x9000, scoped, tag = 'internal scratch']
  #allocation2 [shape = 'f32[10,10,8]{2,1,0:T(8,128)}', space=vmem, size = 0x14000, scoped, tag = 'scratch operand']
  #allocation3 [shape = 'f32[10,2,10,2,2]{4,3,2,1,0:T(2,128)}', space=vmem, size = 0x32000, scoped, tag = 'scratch operand']
  %s0 = inlined_call_operand.hbm [shape: f32[2,8,8,8], index: 0, kind: input, shape index: {}]
  %s1 = inlined_call_operand.vmem [shape: f32[72,8], index: 1, kind: input, shape index: {}]
  %s2 = inlined_call_operand.vmem [shape: f32[1,8], index: 2, kind: input, shape index: {}]
  %s3 = inlined_call_operand.vmem [shape: f32[18,16], index: 3, kind: input, shape index: {}]
  %s4 = inlined_call_operand.vmem [shape: f32[1,16], index: 4, kind: input, shape index: {}]
  %s5 = inlined_call_operand.hbm [shape: f32[2,16,256], index: 5, kind: output, shape index: {}]
  %s6 = sld [smem:[#allocation0]]
  $region61: #{tpu_custom_call.1} parent=0
    _
  %s8 = ssub.s32 1, %s6
  %s9 = scalar_select 0, %s8, %s6
  $region1: #{tpu_custom_call.1} parent=0
    #allocation4 [shape = 'u8[65536]{0}', space=vmem, size = 0x10000, scoped, tag = 'input window, operand 0']
    #allocation5 [shape = 's32[2]{0}', space=sflag, size = 0x8, scoped, tag = 'scoped memory for tpu_custom_call.1']
    #allocation6 [shape = 's32[2]{0}', space=sflag, size = 0x8, scoped, tag = 'scoped memory for tpu_custom_call.1']
    #allocation7 [shape = 'u8[16384]{0}', space=vmem, size = 0x4000, scoped, tag = 'output window, operand 0']
    %10 = vsyncpa [#allocation5], 0
    %s11 = scalar_lea.sflag [#allocation5], 1
    %12 = vsyncpa %s11, 0
    %13 = vsyncpa [#allocation6], 0
    %s14 = scalar_lea.sflag [#allocation6], 1
    %15 = vsyncpa %s14, 0
    loop: start=0, step=1, limit=6
    $region2: #{tpu_custom_call.1} parent=1 // loop_pre_header
      _
    $region3: #{tpu_custom_call.1} parent=1 // loop_header
      %s17 = sphi 0, %s21
      %p18 = scmp.ge.s32.totalorder %s17, 6
      %s24 = sphi 0, %s36
      %s25 = sphi 0, %s32
      %s26 = sphi 0, %s24
      %s27 = sphi 0, %s25
      %s28 = sphi 0, %s26
      %s29 = sphi 0, %s27
      %s39 = sphi 0, %s41
      %s42 = sphi 0, %s39
      %s43 = sphi 0, %s42
      %s59 = sphi 0, %s43
      %s63 = sphi 0, %s63
      %s65 = sphi 0, %s63
      %s66 = sphi 0, %s65
      %s80 = sphi 0, %s66
      %s84 = sphi 0, %s84
      %s86 = sphi 0, %s84
      %s87 = sphi 0, %s86
      %s101 = sphi 0, %s87
      %s105 = sphi 0, %s105
      %s107 = sphi 0, %s105
      %s108 = sphi 0, %s107
      %s122 = sphi 0, %s108
      %s126 = sphi 0, %s126
      %s128 = sphi 0, %s126
      %s129 = sphi 0, %s128
      %s143 = sphi 0, %s129
      %s151 = sphi 0, %s153
      %s154 = sphi 0, %s151
      %s155 = sphi 0, %s154
      %s171 = sphi 0, %s155
    $region4: #{tpu_custom_call.1} parent=1 // loop_header_branch
      %20 = sbr.rel (%p18) target = $region8
    $region5: #{tpu_custom_call.1} parent=1 // loop_body
      %s22 = ssub.s32 %s17, 1
      %s23 = ssub.s32 %s17, 2
      %s30 = sadd.s32 1, %s25
      %p31 = scmp.ge.s32.totalorder %s30, 2
      %s32 = scalar_select %p31, 0, %s30
      %s33 = sadd.s32 1, %s24
      %s34 = scalar_select %p31, %s33, %s24
      %p35 = scmp.ge.s32.totalorder %s34, 2
      %s36 = scalar_select %p35, 0, %s34
      %s37 = ssub.s32 %s24, %s36
      %p38 = scmp.eq.s32.totalorder %s37, 0
      %s40 = sadd.s32 %s39, 1
      %s41 = scalar_select %p38, %s39, %s40
      %p44 = pneg %p38
      %p45 = scmp.eq.s32.totalorder %s17, 3
      %p46 = por %p44, %p45
      %p47 = scmp.ne.s32.totalorder %s39, %s42
      %p48 = scmp.eq.s32.totalorder %s17, 0
      %p49 = por %p47, %p48
      %p50 = scmp.ne.s32.totalorder %s39, %s42
      %p51 = scmp.eq.s32.totalorder %s22, 3
      %p52 = por %p50, %p51
      %p53 = scmp.ne.s32.totalorder %s42, %s43
      %p54 = scmp.eq.s32.totalorder %s22, 0
      %p55 = por %p53, %p54
      %p56 = scmp.ne.s32.totalorder %s42, %s43
      %p57 = scmp.eq.s32.totalorder %s23, 3
      %p58 = por %p56, %p57
      %p60 = scmp.ne.s32.totalorder %s43, %s59
      %p61 = scmp.eq.s32.totalorder %s23, 0
      %p62 = por %p60, %p61
      %s64 = sadd.s32 %s63, 1
      %p67 = scmp.eq.s32.totalorder %s17, 3
      %p68 = scmp.ne.s32.totalorder %s63, %s65
      %p69 = scmp.eq.s32.totalorder %s17, 0
      %p70 = por %p68, %p69
      %p71 = scmp.ne.s32.totalorder %s63, %s65
      %p72 = scmp.eq.s32.totalorder %s22, 3
      %p73 = por %p71, %p72
      %p74 = scmp.ne.s32.totalorder %s65, %s66
      %p75 = scmp.eq.s32.totalorder %s22, 0
      %p76 = por %p74, %p75
      %p77 = scmp.ne.s32.totalorder %s65, %s66
      %p78 = scmp.eq.s32.totalorder %s23, 3
      %p79 = por %p77, %p78
      %p81 = scmp.ne.s32.totalorder %s66, %s80
      %p82 = scmp.eq.s32.totalorder %s23, 0
      %p83 = por %p81, %p82
      %s85 = sadd.s32 %s84, 1
      %p88 = scmp.eq.s32.totalorder %s17, 3
      %p89 = scmp.ne.s32.totalorder %s84, %s86
      %p90 = scmp.eq.s32.totalorder %s17, 0
      %p91 = por %p89, %p90
      %p92 = scmp.ne.s32.totalorder %s84, %s86
      %p93 = scmp.eq.s32.totalorder %s22, 3
      %p94 = por %p92, %p93
      %p95 = scmp.ne.s32.totalorder %s86, %s87
      %p96 = scmp.eq.s32.totalorder %s22, 0
      %p97 = por %p95, %p96
      %p98 = scmp.ne.s32.totalorder %s86, %s87
      %p99 = scmp.eq.s32.totalorder %s23, 3
      %p100 = por %p98, %p99
      %p102 = scmp.ne.s32.totalorder %s87, %s101
      %p103 = scmp.eq.s32.totalorder %s23, 0
      %p104 = por %p102, %p103
      %s106 = sadd.s32 %s105, 1
      %p109 = scmp.eq.s32.totalorder %s17, 3
      %p110 = scmp.ne.s32.totalorder %s105, %s107
      %p111 = scmp.eq.s32.totalorder %s17, 0
      %p112 = por %p110, %p111
      %p113 = scmp.ne.s32.totalorder %s105, %s107
      %p114 = scmp.eq.s32.totalorder %s22, 3
      %p115 = por %p113, %p114
      %p116 = scmp.ne.s32.totalorder %s107, %s108
      %p117 = scmp.eq.s32.totalorder %s22, 0
      %p118 = por %p116, %p117
      %p119 = scmp.ne.s32.totalorder %s107, %s108
      %p120 = scmp.eq.s32.totalorder %s23, 3
      %p121 = por %p119, %p120
      %p123 = scmp.ne.s32.totalorder %s108, %s122
      %p124 = scmp.eq.s32.totalorder %s23, 0
      %p125 = por %p123, %p124
      %s127 = sadd.s32 %s126, 1
      %p130 = scmp.eq.s32.totalorder %s17, 3
      %p131 = scmp.ne.s32.totalorder %s126, %s128
      %p132 = scmp.eq.s32.totalorder %s17, 0
      %p133 = por %p131, %p132
      %p134 = scmp.ne.s32.totalorder %s126, %s128
      %p135 = scmp.eq.s32.totalorder %s22, 3
      %p136 = por %p134, %p135
      %p137 = scmp.ne.s32.totalorder %s128, %s129
      %p138 = scmp.eq.s32.totalorder %s22, 0
      %p139 = por %p137, %p138
      %p140 = scmp.ne.s32.totalorder %s128, %s129
      %p141 = scmp.eq.s32.totalorder %s23, 3
      %p142 = por %p140, %p141
      %p144 = scmp.ne.s32.totalorder %s129, %s143
      %p145 = scmp.eq.s32.totalorder %s23, 0
      %p146 = por %p144, %p145
      %s147 = ssub.s32 %s24, %s36
      %s148 = ssub.s32 %s25, %s32
      %s149 = sor.u32 %s147, %s148
      %p150 = scmp.eq.s32.totalorder %s149, 0
      %s152 = sadd.s32 %s151, 1
      %s153 = scalar_select %p150, %s151, %s152
      %p156 = pneg %p150
      %p157 = scmp.eq.s32.totalorder %s17, 3
      %p158 = por %p156, %p157
      %p159 = scmp.ne.s32.totalorder %s151, %s154
      %p160 = scmp.eq.s32.totalorder %s17, 0
      %p161 = por %p159, %p160
      %p162 = scmp.ne.s32.totalorder %s151, %s154
      %p163 = scmp.eq.s32.totalorder %s22, 3
      %p164 = por %p162, %p163
      %p165 = scmp.ne.s32.totalorder %s154, %s155
      %p166 = scmp.eq.s32.totalorder %s22, 0
      %p167 = por %p165, %p166
      %p168 = scmp.ne.s32.totalorder %s154, %s155
      %p169 = scmp.eq.s32.totalorder %s23, 3
      %p170 = por %p168, %p169
      %p172 = scmp.ne.s32.totalorder %s155, %s171
      %p173 = scmp.eq.s32.totalorder %s23, 0
      %p174 = por %p172, %p173
      %p175 = scmp.le.s32.totalorder 1, %s17
      %p176 = scmp.lt.s32.totalorder %s17, 5
      %p177 = pnand %p175, %p176
      %p178 = pneg %p177
      // Predicated region
      $region9: #{tpu_custom_call.1} parent=5 // pred_check
        _
      $region10: #{tpu_custom_call.1} parent=5 // pred_check_branch
        %180 = sbr.rel (%p177) target = $region12
      $region11: #{tpu_custom_call.1} parent=5 // pred_region
        %s181 = ssub.s32 %s17, 1
        // Predicated region
        $region13: #{tpu_custom_call.1} parent=11 // pred_check
          %p182 = pneg %p76
        $region14: #{tpu_custom_call.1} parent=11 // pred_check_branch
          %184 = sbr.rel (%p182) target = $region16
        $region15: #{tpu_custom_call.1} parent=11 // pred_region
          _
        $region16: #{tpu_custom_call.1} parent=11 // pred_fallthru
          _
        // Predicated region
        $region17: #{tpu_custom_call.1} parent=11 // pred_check
          %p185 = pneg %p97
        $region18: #{tpu_custom_call.1} parent=11 // pred_check_branch
          %187 = sbr.rel (%p185) target = $region20
        $region19: #{tpu_custom_call.1} parent=11 // pred_region
          _
        $region20: #{tpu_custom_call.1} parent=11 // pred_fallthru
          _
        // Predicated region
        $region21: #{tpu_custom_call.1} parent=11 // pred_check
          %p188 = pneg %p118
        $region22: #{tpu_custom_call.1} parent=11 // pred_check_branch
          %190 = sbr.rel (%p188) target = $region24
        $region23: #{tpu_custom_call.1} parent=11 // pred_region
          _
        $region24: #{tpu_custom_call.1} parent=11 // pred_fallthru
          _
        // Predicated region
        $region25: #{tpu_custom_call.1} parent=11 // pred_check
          %p191 = pneg %p139
        $region26: #{tpu_custom_call.1} parent=11 // pred_check_branch
          %193 = sbr.rel (%p191) target = $region28
        $region27: #{tpu_custom_call.1} parent=11 // pred_region
          _
        $region28: #{tpu_custom_call.1} parent=11 // pred_fallthru
          _
      $region12: #{tpu_custom_call.1} parent=5 // pred_fallthru
        _
      %p194 = scmp.lt.s32.totalorder %s17, 4
      // Predicated region
      $region29: #{tpu_custom_call.1} parent=5 // pred_check
        %p195 = pneg %p194
      $region30: #{tpu_custom_call.1} parent=5 // pred_check_branch
        %197 = sbr.rel (%p195) target = $region32
      $region31: #{tpu_custom_call.1} parent=5 // pred_region
        // Predicated region
        $region33: #{tpu_custom_call.1} parent=31 // pred_check
          %p198 = pneg %p49
        $region34: #{tpu_custom_call.1} parent=31 // pred_check_branch
          %200 = sbr.rel (%p198) target = $region36
        $region35: #{tpu_custom_call.1} parent=31 // pred_region
          %s201 = sand.u32 %s39, 1
          %s202 = scalar_lea.sflag [#allocation5], %s201
          %s203 = sand.u32 %s39, 1
          %s204 = smul.addr %s203, 64
          %s205 = scalar_lea.vmem [#allocation4], %s204
          %207 = vsyncadd %s202, 0
          %s208 = smul.addr %s24, 8
          %s209 = smul.addr %s208, 8
          %s210 = scalar_lea.hbm %s0, %s209
          %s211 = sshll.u32 %s210, 4
          %s212 = int_to_ptr.hbm [resolvable:$true] %s211
          %s213 = sshll.u32 %s205, 4
          %s214 = int_to_ptr.vmem [resolvable:$true] %s213
          %219 = dma.hbm_to_vmem [thread:$0]  %s212, 1024, %s214, %s202, 128, 128, 8
        $region36: #{tpu_custom_call.1} parent=31 // pred_fallthru
          _
      $region32: #{tpu_custom_call.1} parent=5 // pred_fallthru
        _
      %p220 = scmp.le.s32.totalorder 1, %s17
      %p221 = scmp.lt.s32.totalorder %s17, 5
      %p222 = pnand %p220, %p221
      %p223 = pneg %p222
      // Predicated region
      $region37: #{tpu_custom_call.1} parent=5 // pred_check
        _
      $region38: #{tpu_custom_call.1} parent=5 // pred_check_branch
        %225 = sbr.rel (%p222) target = $region40
      $region39: #{tpu_custom_call.1} parent=5 // pred_region
        %s226 = ssub.s32 %s17, 1
        %s227 = sand.u32 %s42, 1
        %s228 = scalar_lea.sflag [#allocation5], %s227
        %s229 = sand.u32 %s42, 1
        %s230 = smul.addr %s229, 64
        %s231 = scalar_lea.vmem [#allocation4], %s230
        // Predicated region
        $region41: #{tpu_custom_call.1} parent=39 // pred_check
          %p232 = pneg %p55
        $region42: #{tpu_custom_call.1} parent=39 // pred_check_branch
          %234 = sbr.rel (%p232) target = $region44
        $region43: #{tpu_custom_call.1} parent=39 // pred_region
          %236 = dma.done %s228, 1024
        $region44: #{tpu_custom_call.1} parent=39 // pred_fallthru
          _
        %s237 = sand.u32 %s42, 1
        %s238 = scalar_lea.sflag [#allocation5], %s237
        %s239 = sand.u32 %s42, 1
        %s240 = smul.addr %s239, 64
        %s241 = scalar_lea.vmem [#allocation4], %s240
        %p242 = pneg %p55
        %p243 = pneg %p52
        %p244 = pneg %p76
        %p245 = pneg %p73
        %p246 = pneg %p97
        %p247 = pneg %p94
        %p248 = pneg %p118
        %p249 = pneg %p115
        %p250 = pneg %p139
        %p251 = pneg %p136
        %p252 = pneg %p167
        %p253 = pneg %p164
        %s254 = sand.u32 %s154, 1
        %s255 = scalar_lea.sflag [#allocation6], %s254
        %s256 = sand.u32 %s154, 1
        %s257 = smul.addr %s256, 16
        %s258 = scalar_lea.vmem [#allocation7], %s257
        %p259 = scmp.eq.s32.totalorder %s27, 0
        // Predicated region
        $region45: #{tpu_custom_call.1} parent=39 // pred_check
          %p260 = pneg %p259
        $region46: #{tpu_custom_call.1} parent=39 // pred_check_branch
          %262 = sbr.rel (%p260) target = $region48
        $region47: #{tpu_custom_call.1} parent=39 // pred_region
          %vm263 = vcmask 64512
          %264 = vst.msk [vmem:[#allocation2] sm:$0xff] %vm263, 0.0
          %vm265 = vcmask 58368
          %266 = vst.msk [vmem:[#allocation2 + $0x8] sm:$0x3] %vm265, 0.0
          %267 = vst.msk [vmem:[#allocation2 + $0x10] sm:$0xff] %vm263, 0.0
          %268 = vst.msk [vmem:[#allocation2 + $0x18] sm:$0x3] %vm265, 0.0
          %269 = vst.msk [vmem:[#allocation2 + $0x20] sm:$0xff] %vm263, 0.0
          %270 = vst.msk [vmem:[#allocation2 + $0x28] sm:$0x3] %vm265, 0.0
          %271 = vst.msk [vmem:[#allocation2 + $0x30] sm:$0xff] %vm263, 0.0
          %272 = vst.msk [vmem:[#allocation2 + $0x38] sm:$0x3] %vm265, 0.0
          %273 = vst.msk [vmem:[#allocation2 + $0x40] sm:$0xff] %vm263, 0.0
          %274 = vst.msk [vmem:[#allocation2 + $0x48] sm:$0x3] %vm265, 0.0
          %275 = vst.msk [vmem:[#allocation2 + $0x50] sm:$0xff] %vm263, 0.0
          %276 = vst.msk [vmem:[#allocation2 + $0x58] sm:$0x3] %vm265, 0.0
          %277 = vst.msk [vmem:[#allocation2 + $0x60] sm:$0xff] %vm263, 0.0
          %278 = vst.msk [vmem:[#allocation2 + $0x68] sm:$0x3] %vm265, 0.0
          %279 = vst.msk [vmem:[#allocation2 + $0x70] sm:$0xff] %vm263, 0.0
          %280 = vst.msk [vmem:[#allocation2 + $0x78] sm:$0x3] %vm265, 0.0
          %281 = vst.msk [vmem:[#allocation2 + $0x80] sm:$0xff] %vm263, 0.0
          %282 = vst.msk [vmem:[#allocation2 + $0x88] sm:$0x3] %vm265, 0.0
          %283 = vst.msk [vmem:[#allocation2 + $0x90] sm:$0xff] %vm263, 0.0
          %284 = vst.msk [vmem:[#allocation2 + $0x98] sm:$0x3] %vm265, 0.0
          %v285 = vld [vmem:[%s231] sm:$0xff]
          %v286 = vld [vmem:[%s231 + $0x8] sm:$0xff]
          %v287 = vld [vmem:[%s231 + $0x10] sm:$0xff]
          %v288 = vld [vmem:[%s231 + $0x18] sm:$0xff]
          %v289 = vld [vmem:[%s231 + $0x20] sm:$0xff]
          %v290 = vld [vmem:[%s231 + $0x28] sm:$0xff]
          %v291 = vld [vmem:[%s231 + $0x30] sm:$0xff]
          %v292 = vld [vmem:[%s231 + $0x38] sm:$0xff]
          %s293 = scalar_lea.vmem [#allocation2], 16
          %294 = vst.msk [vmem:[%s293 + $0x1] sm:$0xff] %vm263, %v285
          %295 = vst.msk [vmem:[%s293 + $0x11] sm:$0xff] %vm263, %v286
          %296 = vst.msk [vmem:[%s293 + $0x21] sm:$0xff] %vm263, %v287
          %297 = vst.msk [vmem:[%s293 + $0x31] sm:$0xff] %vm263, %v288
          %298 = vst.msk [vmem:[%s293 + $0x41] sm:$0xff] %vm263, %v289
          %299 = vst.msk [vmem:[%s293 + $0x51] sm:$0xff] %vm263, %v290
          %300 = vst.msk [vmem:[%s293 + $0x61] sm:$0xff] %vm263, %v291
          %301 = vst.msk [vmem:[%s293 + $0x71] sm:$0xff] %vm263, %v292
          %v302 = vld [vmem:[#allocation2] sm:$0xff]
          %v303 = vld [vmem:[#allocation2 + $0x8] sm:$0x3]
          %v304 = vld [vmem:[#allocation2 + $0x10] sm:$0xff]
          %v305 = vld [vmem:[#allocation2 + $0x18] sm:$0x3]
          %v306 = vld [vmem:[#allocation2 + $0x20] sm:$0xff]
          %v307 = vld [vmem:[#allocation2 + $0x28] sm:$0x3]
          %v308 = vld [vmem:[#allocation2 + $0x30] sm:$0xff]
          %v309 = vld [vmem:[#allocation2 + $0x38] sm:$0x3]
          %v310 = vld [vmem:[#allocation2 + $0x40] sm:$0xff]
          %v311 = vld [vmem:[#allocation2 + $0x48] sm:$0x3]
          %v312 = vld [vmem:[#allocation2 + $0x50] sm:$0xff]
          %v313 = vld [vmem:[#allocation2 + $0x58] sm:$0x3]
          %v314 = vld [vmem:[#allocation2 + $0x60] sm:$0xff]
          %v315 = vld [vmem:[#allocation2 + $0x68] sm:$0x3]
          %v316 = vld [vmem:[#allocation2 + $0x70] sm:$0xff]
          %v317 = vld [vmem:[#allocation2 + $0x78] sm:$0x3]
          %v318 = vld [vmem:[#allocation2 + $0x80] sm:$0xff]
          %v319 = vld [vmem:[#allocation2 + $0x88] sm:$0x3]
          %v320 = vld [vmem:[#allocation2 + $0x90] sm:$0xff]
          %v321 = vld [vmem:[#allocation2 + $0x98] sm:$0x3]
          %vm338 = vcmask 1046528
          %v339 = vrot.slane %v302, 1
          %v340 = vrot.slane %v303, 1
          %v341 = vsel %vm338, %v339, %v340
          %v342 = vrot.slane %v304, 1
          %v343 = vrot.slane %v305, 1
          %v344 = vsel %vm338, %v342, %v343
          %v345 = vrot.slane %v306, 1
          %v346 = vrot.slane %v307, 1
          %v347 = vsel %vm338, %v345, %v346
          %v348 = vrot.slane %v308, 1
          %v349 = vrot.slane %v309, 1
          %v350 = vsel %vm338, %v348, %v349
          %v351 = vrot.slane %v310, 1
          %v352 = vrot.slane %v311, 1
          %v353 = vsel %vm338, %v351, %v352
          %v354 = vrot.slane %v312, 1
          %v355 = vrot.slane %v313, 1
          %v356 = vsel %vm338, %v354, %v355
          %v357 = vrot.slane %v314, 1
          %v358 = vrot.slane %v315, 1
          %v359 = vsel %vm338, %v357, %v358
          %v360 = vrot.slane %v316, 1
          %v361 = vrot.slane %v317, 1
          %v362 = vsel %vm338, %v360, %v361
          %vm363 = vcmask 1045504
          %v364 = vrot.slane %v302, 2
          %v365 = vrot.slane %v303, 2
          %v366 = vsel %vm363, %v364, %v365
          %v367 = vrot.slane %v304, 2
          %v368 = vrot.slane %v305, 2
          %v369 = vsel %vm363, %v367, %v368
          %v370 = vrot.slane %v306, 2
          %v371 = vrot.slane %v307, 2
          %v372 = vsel %vm363, %v370, %v371
          %v373 = vrot.slane %v308, 2
          %v374 = vrot.slane %v309, 2
          %v375 = vsel %vm363, %v373, %v374
          %v376 = vrot.slane %v310, 2
          %v377 = vrot.slane %v311, 2
          %v378 = vsel %vm363, %v376, %v377
          %v379 = vrot.slane %v312, 2
          %v380 = vrot.slane %v313, 2
          %v381 = vsel %vm363, %v379, %v380
          %v382 = vrot.slane %v314, 2
          %v383 = vrot.slane %v315, 2
          %v384 = vsel %vm363, %v382, %v383
          %v385 = vrot.slane %v316, 2
          %v386 = vrot.slane %v317, 2
          %v387 = vsel %vm363, %v385, %v386
          %v390 = vrot.slane %v318, 1
          %v391 = vrot.slane %v319, 1
          %v392 = vsel %vm338, %v390, %v391
          %v393 = vrot.slane %v318, 2
          %v394 = vrot.slane %v319, 2
          %v395 = vsel %vm363, %v393, %v394
          %v398 = vrot.slane %v320, 1
          %v399 = vrot.slane %v321, 1
          %v400 = vsel %vm338, %v398, %v399
          %v401 = vrot.slane %v320, 2
          %v402 = vrot.slane %v321, 2
          %v403 = vsel %vm363, %v401, %v402
          %404 = vrot.lane.b32.xlu0 %v341, 8
          %v405 = vpop.permute.xlu0 %404
          %406 = vrot.lane.b32.xlu0 %v344, 8
          %v407 = vpop.permute.xlu0 %406
          %408 = vrot.lane.b32.xlu0 %v347, 8
          %v409 = vpop.permute.xlu0 %408
          %410 = vrot.lane.b32.xlu0 %v350, 8
          %v411 = vpop.permute.xlu0 %410
          %412 = vrot.lane.b32.xlu0 %v353, 8
          %v413 = vpop.permute.xlu0 %412
          %414 = vrot.lane.b32.xlu0 %v356, 8
          %v415 = vpop.permute.xlu0 %414
          %416 = vrot.lane.b32.xlu0 %v359, 8
          %v417 = vpop.permute.xlu0 %416
          %418 = vrot.lane.b32.xlu0 %v362, 8
          %v419 = vpop.permute.xlu0 %418
          %428 = vrot.lane.b32.xlu0 %v366, 16
          %v429 = vpop.permute.xlu0 %428
          %430 = vrot.lane.b32.xlu0 %v369, 16
          %v431 = vpop.permute.xlu0 %430
          %432 = vrot.lane.b32.xlu0 %v372, 16
          %v433 = vpop.permute.xlu0 %432
          %434 = vrot.lane.b32.xlu0 %v375, 16
          %v435 = vpop.permute.xlu0 %434
          %436 = vrot.lane.b32.xlu0 %v378, 16
          %v437 = vpop.permute.xlu0 %436
          %438 = vrot.lane.b32.xlu0 %v381, 16
          %v439 = vpop.permute.xlu0 %438
          %440 = vrot.lane.b32.xlu0 %v384, 16
          %v441 = vpop.permute.xlu0 %440
          %442 = vrot.lane.b32.xlu0 %v387, 16
          %v443 = vpop.permute.xlu0 %442
          %452 = vrot.lane.b32.xlu0 %v304, 24
          %v453 = vpop.permute.xlu0 %452
          %454 = vrot.lane.b32.xlu0 %v306, 24
          %v455 = vpop.permute.xlu0 %454
          %456 = vrot.lane.b32.xlu0 %v308, 24
          %v457 = vpop.permute.xlu0 %456
          %458 = vrot.lane.b32.xlu0 %v310, 24
          %v459 = vpop.permute.xlu0 %458
          %460 = vrot.lane.b32.xlu0 %v312, 24
          %v461 = vpop.permute.xlu0 %460
          %462 = vrot.lane.b32.xlu0 %v314, 24
          %v463 = vpop.permute.xlu0 %462
          %464 = vrot.lane.b32.xlu0 %v316, 24
          %v465 = vpop.permute.xlu0 %464
          %466 = vrot.lane.b32.xlu0 %v318, 24
          %v467 = vpop.permute.xlu0 %466
          %476 = vrot.lane.b32.xlu0 %v344, 32
          %v477 = vpop.permute.xlu0 %476
          %478 = vrot.lane.b32.xlu0 %v347, 32
          %v479 = vpop.permute.xlu0 %478
          %480 = vrot.lane.b32.xlu0 %v350, 32
          %v481 = vpop.permute.xlu0 %480
          %482 = vrot.lane.b32.xlu0 %v353, 32
          %v483 = vpop.permute.xlu0 %482
          %484 = vrot.lane.b32.xlu0 %v356, 32
          %v485 = vpop.permute.xlu0 %484
          %486 = vrot.lane.b32.xlu0 %v359, 32
          %v487 = vpop.permute.xlu0 %486
          %488 = vrot.lane.b32.xlu0 %v362, 32
          %v489 = vpop.permute.xlu0 %488
          %490 = vrot.lane.b32.xlu0 %v392, 32
          %v491 = vpop.permute.xlu0 %490
          %500 = vrot.lane.b32.xlu0 %v369, 40
          %v501 = vpop.permute.xlu0 %500
          %502 = vrot.lane.b32.xlu0 %v372, 40
          %v503 = vpop.permute.xlu0 %502
          %504 = vrot.lane.b32.xlu0 %v375, 40
          %v505 = vpop.permute.xlu0 %504
          %506 = vrot.lane.b32.xlu0 %v378, 40
          %v507 = vpop.permute.xlu0 %506
          %508 = vrot.lane.b32.xlu0 %v381, 40
          %v509 = vpop.permute.xlu0 %508
          %510 = vrot.lane.b32.xlu0 %v384, 40
          %v511 = vpop.permute.xlu0 %510
          %512 = vrot.lane.b32.xlu0 %v387, 40
          %v513 = vpop.permute.xlu0 %512
          %514 = vrot.lane.b32.xlu0 %v395, 40
          %v515 = vpop.permute.xlu0 %514
          %524 = vrot.lane.b32.xlu0 %v306, 48
          %v525 = vpop.permute.xlu0 %524
          %526 = vrot.lane.b32.xlu0 %v308, 48
          %v527 = vpop.permute.xlu0 %526
          %528 = vrot.lane.b32.xlu0 %v310, 48
          %v529 = vpop.permute.xlu0 %528
          %530 = vrot.lane.b32.xlu0 %v312, 48
          %v531 = vpop.permute.xlu0 %530
          %532 = vrot.lane.b32.xlu0 %v314, 48
          %v533 = vpop.permute.xlu0 %532
          %534 = vrot.lane.b32.xlu0 %v316, 48
          %v535 = vpop.permute.xlu0 %534
          %536 = vrot.lane.b32.xlu0 %v318, 48
          %v537 = vpop.permute.xlu0 %536
          %538 = vrot.lane.b32.xlu0 %v320, 48
          %v539 = vpop.permute.xlu0 %538
          %548 = vrot.lane.b32.xlu0 %v347, 56
          %v549 = vpop.permute.xlu0 %548
          %550 = vrot.lane.b32.xlu0 %v350, 56
          %v551 = vpop.permute.xlu0 %550
          %552 = vrot.lane.b32.xlu0 %v353, 56
          %v553 = vpop.permute.xlu0 %552
          %554 = vrot.lane.b32.xlu0 %v356, 56
          %v555 = vpop.permute.xlu0 %554
          %556 = vrot.lane.b32.xlu0 %v359, 56
          %v557 = vpop.permute.xlu0 %556
          %558 = vrot.lane.b32.xlu0 %v362, 56
          %v559 = vpop.permute.xlu0 %558
          %560 = vrot.lane.b32.xlu0 %v392, 56
          %v561 = vpop.permute.xlu0 %560
          %562 = vrot.lane.b32.xlu0 %v400, 56
          %v563 = vpop.permute.xlu0 %562
          %572 = vrot.lane.b32.xlu0 %v372, 64
          %v573 = vpop.permute.xlu0 %572
          %574 = vrot.lane.b32.xlu0 %v375, 64
          %v575 = vpop.permute.xlu0 %574
          %576 = vrot.lane.b32.xlu0 %v378, 64
          %v577 = vpop.permute.xlu0 %576
          %578 = vrot.lane.b32.xlu0 %v381, 64
          %v579 = vpop.permute.xlu0 %578
          %580 = vrot.lane.b32.xlu0 %v384, 64
          %v581 = vpop.permute.xlu0 %580
          %582 = vrot.lane.b32.xlu0 %v387, 64
          %v583 = vpop.permute.xlu0 %582
          %584 = vrot.lane.b32.xlu0 %v395, 64
          %v585 = vpop.permute.xlu0 %584
          %586 = vrot.lane.b32.xlu0 %v403, 64
          %v587 = vpop.permute.xlu0 %586
          %v596 = vsel %vm263, %v302, %v405
          %v597 = vsel %vm263, %v304, %v407
          %v598 = vsel %vm263, %v306, %v409
          %v599 = vsel %vm263, %v308, %v411
          %v600 = vsel %vm263, %v310, %v413
          %v601 = vsel %vm263, %v312, %v415
          %v602 = vsel %vm263, %v314, %v417
          %v603 = vsel %vm263, %v316, %v419
          %vm604 = vcmask 130048
          %v605 = vsel %vm604, %v596, %v429
          %v606 = vsel %vm604, %v597, %v431
          %v607 = vsel %vm604, %v598, %v433
          %v608 = vsel %vm604, %v599, %v435
          %v609 = vsel %vm604, %v600, %v437
          %v610 = vsel %vm604, %v601, %v439
          %v611 = vsel %vm604, %v602, %v441
          %v612 = vsel %vm604, %v603, %v443
          %vm613 = vcmask 195584
          %v614 = vsel %vm613, %v605, %v453
          %v615 = vsel %vm613, %v606, %v455
          %v616 = vsel %vm613, %v607, %v457
          %v617 = vsel %vm613, %v608, %v459
          %v618 = vsel %vm613, %v609, %v461
          %v619 = vsel %vm613, %v610, %v463
          %v620 = vsel %vm613, %v611, %v465
          %v621 = vsel %vm613, %v612, %v467
          %vm622 = vcmask 261120
          %v623 = vsel %vm622, %v614, %v477
          %v624 = vsel %vm622, %v615, %v479
          %v625 = vsel %vm622, %v616, %v481
          %v626 = vsel %vm622, %v617, %v483
          %v627 = vsel %vm622, %v618, %v485
          %v628 = vsel %vm622, %v619, %v487
          %v629 = vsel %vm622, %v620, %v489
          %v630 = vsel %vm622, %v621, %v491
          %vm631 = vcmask 326656
          %v632 = vsel %vm631, %v623, %v501
          %v633 = vsel %vm631, %v624, %v503
          %v634 = vsel %vm631, %v625, %v505
          %v635 = vsel %vm631, %v626, %v507
          %v636 = vsel %vm631, %v627, %v509
          %v637 = vsel %vm631, %v628, %v511
          %v638 = vsel %vm631, %v629, %v513
          %v639 = vsel %vm631, %v630, %v515
          %vm640 = vcmask 392192
          %v641 = vsel %vm640, %v632, %v525
          %v642 = vsel %vm640, %v633, %v527
          %v643 = vsel %vm640, %v634, %v529
          %v644 = vsel %vm640, %v635, %v531
          %v645 = vsel %vm640, %v636, %v533
          %v646 = vsel %vm640, %v637, %v535
          %v647 = vsel %vm640, %v638, %v537
          %v648 = vsel %vm640, %v639, %v539
          %vm649 = vcmask 457728
          %v650 = vsel %vm649, %v641, %v549
          %v651 = vsel %vm649, %v642, %v551
          %v652 = vsel %vm649, %v643, %v553
          %v653 = vsel %vm649, %v644, %v555
          %v654 = vsel %vm649, %v645, %v557
          %v655 = vsel %vm649, %v646, %v559
          %v656 = vsel %vm649, %v647, %v561
          %v657 = vsel %vm649, %v648, %v563
          %vm658 = vcmask 523264
          %v659 = vsel %vm658, %v650, %v573
          %v660 = vsel %vm658, %v651, %v575
          %v661 = vsel %vm658, %v652, %v577
          %v662 = vsel %vm658, %v653, %v579
          %v663 = vsel %vm658, %v654, %v581
          %v664 = vsel %vm658, %v655, %v583
          %v665 = vsel %vm658, %v656, %v585
          %v666 = vsel %vm658, %v657, %v587
          %v667 = vld [vmem:[%s1] sm:$0xff]
          %v668 = vld [vmem:[%s1 + $0x8] sm:$0xff]
          %v669 = vld [vmem:[%s1 + $0x10] sm:$0xff]
          %v670 = vld [vmem:[%s1 + $0x18] sm:$0xff]
          %v671 = vld [vmem:[%s1 + $0x20] sm:$0xff]
          %v672 = vld [vmem:[%s1 + $0x28] sm:$0xff]
          %v673 = vld [vmem:[%s1 + $0x30] sm:$0xff]
          %v674 = vld [vmem:[%s1 + $0x38] sm:$0xff]
          %v675 = vld [vmem:[%s1 + $0x40] sm:$0xff]
          %v676 = vld [vmem:[%s2] sm:$0x1]
          %v678 = vperm.slane %v676, 0
          %vm680 = vcmask 588800
          %v682 = vsel %vm680, %v659, 0
          %v685 = vsel %vm680, %v660, 0
          %v688 = vsel %vm680, %v661, 0
          %v691 = vsel %vm680, %v662, 0
          %v694 = vsel %vm680, %v663, 0
          %v697 = vsel %vm680, %v664, 0
          %v700 = vsel %vm680, %v665, 0
          %v703 = vsel %vm680, %v666, 0
          %705 = vmatpush.msra.mxu0 0.0
          %706 = vmatpush.msra.mxu0 0.0
          %707 = vmatpush.msra.mxu0 0.0
          %708 = vmatpush.msra.mxu0 0.0
          %709 = vmatpush.msra.mxu0 0.0
          %710 = vmatpush.msra.mxu0 0.0
          %711 = vmatpush.msra.mxu0 0.0
          %712 = vmatpush.msra.mxu0 %v675
          %713 = vmatpush.msra.mxu0 %v674
          %714 = vmatpush.msra.mxu0 %v673
          %715 = vmatpush.msra.mxu0 %v672
          %716 = vmatpush.msra.mxu0 %v671
          %717 = vmatpush.msra.mxu0 %v670
          %718 = vmatpush.msra.mxu0 %v669
          %719 = vmatpush.msra.mxu0 %v668
          %720 = vmatpush.msra.mxu0 %v667
          %721 = vmatmul.f32.gmra.mxu0 %v682
          %v722 = vpop.f32.mrf.mxu0
          %v723 = vadd.f32 %v678, %v722
          %724 = vmatmul.f32.gmra.mxu0 %v685
          %v725 = vpop.f32.mrf.mxu0
          %v726 = vadd.f32 %v678, %v725
          %727 = vmatmul.f32.gmra.mxu0 %v688
          %v728 = vpop.f32.mrf.mxu0
          %v729 = vadd.f32 %v678, %v728
          %730 = vmatmul.f32.gmra.mxu0 %v691
          %v731 = vpop.f32.mrf.mxu0
          %v732 = vadd.f32 %v678, %v731
          %733 = vmatmul.f32.gmra.mxu0 %v694
          %v734 = vpop.f32.mrf.mxu0
          %v735 = vadd.f32 %v678, %v734
          %736 = vmatmul.f32.gmra.mxu0 %v697
          %v737 = vpop.f32.mrf.mxu0
          %v738 = vadd.f32 %v678, %v737
          %739 = vmatmul.f32.gmra.mxu0 %v700
          %v740 = vpop.f32.mrf.mxu0
          %v741 = vadd.f32 %v678, %v740
          %742 = vmatmul.f32.gmra.mxu0 %v703
          %v743 = vpop.f32.mrf.mxu0
          %v744 = vadd.f32 %v678, %v743
          %745 = vdwg.mxu0
          %vm746 = vcmask 9216
          %747 = vst.msk [vmem:[#allocation3] sm:$0x3] %vm746, 0.0
          %748 = vst.msk [vmem:[#allocation3 + $0x2] sm:$0x3] %vm746, 0.0
          %749 = vst.msk [vmem:[#allocation3 + $0x4] sm:$0x3] %vm746, 0.0
          %750 = vst.msk [vmem:[#allocation3 + $0x6] sm:$0x3] %vm746, 0.0
          %751 = vst.msk [vmem:[#allocation3 + $0x8] sm:$0x3] %vm746, 0.0
          %752 = vst.msk [vmem:[#allocation3 + $0xa] sm:$0x3] %vm746, 0.0
          %753 = vst.msk [vmem:[#allocation3 + $0xc] sm:$0x3] %vm746, 0.0
          %754 = vst.msk [vmem:[#allocation3 + $0xe] sm:$0x3] %vm746, 0.0
          %755 = vst.msk [vmem:[#allocation3 + $0x10] sm:$0x3] %vm746, 0.0
          %756 = vst.msk [vmem:[#allocation3 + $0x12] sm:$0x3] %vm746, 0.0
          %757 = vst.msk [vmem:[#allocation3 + $0x14] sm:$0x3] %vm746, 0.0
          %758 = vst.msk [vmem:[#allocation3 + $0x16] sm:$0x3] %vm746, 0.0
          %759 = vst.msk [vmem:[#allocation3 + $0x18] sm:$0x3] %vm746, 0.0
          %760 = vst.msk [vmem:[#allocation3 + $0x1a] sm:$0x3] %vm746, 0.0
          %761 = vst.msk [vmem:[#allocation3 + $0x1c] sm:$0x3] %vm746, 0.0
          %762 = vst.msk [vmem:[#allocation3 + $0x1e] sm:$0x3] %vm746, 0.0
          %763 = vst.msk [vmem:[#allocation3 + $0x20] sm:$0x3] %vm746, 0.0
          %764 = vst.msk [vmem:[#allocation3 + $0x22] sm:$0x3] %vm746, 0.0
          %765 = vst.msk [vmem:[#allocation3 + $0x24] sm:$0x3] %vm746, 0.0
          %766 = vst.msk [vmem:[#allocation3 + $0x26] sm:$0x3] %vm746, 0.0
          %767 = vst.msk [vmem:[#allocation3 + $0x28] sm:$0x3] %vm746, 0.0
          %768 = vst.msk [vmem:[#allocation3 + $0x2a] sm:$0x3] %vm746, 0.0
          %769 = vst.msk [vmem:[#allocation3 + $0x2c] sm:$0x3] %vm746, 0.0
          %770 = vst.msk [vmem:[#allocation3 + $0x2e] sm:$0x3] %vm746, 0.0
          %771 = vst.msk [vmem:[#allocation3 + $0x30] sm:$0x3] %vm746, 0.0
          %772 = vst.msk [vmem:[#allocation3 + $0x32] sm:$0x3] %vm746, 0.0
          %773 = vst.msk [vmem:[#allocation3 + $0x34] sm:$0x3] %vm746, 0.0
          %774 = vst.msk [vmem:[#allocation3 + $0x36] sm:$0x3] %vm746, 0.0
          %775 = vst.msk [vmem:[#allocation3 + $0x38] sm:$0x3] %vm746, 0.0
          %776 = vst.msk [vmem:[#allocation3 + $0x3a] sm:$0x3] %vm746, 0.0
          %777 = vst.msk [vmem:[#allocation3 + $0x3c] sm:$0x3] %vm746, 0.0
          %778 = vst.msk [vmem:[#allocation3 + $0x3e] sm:$0x3] %vm746, 0.0
          %779 = vst.msk [vmem:[#allocation3 + $0x40] sm:$0x3] %vm746, 0.0
          %780 = vst.msk [vmem:[#allocation3 + $0x42] sm:$0x3] %vm746, 0.0
          %781 = vst.msk [vmem:[#allocation3 + $0x44] sm:$0x3] %vm746, 0.0
          %782 = vst.msk [vmem:[#allocation3 + $0x46] sm:$0x3] %vm746, 0.0
          %783 = vst.msk [vmem:[#allocation3 + $0x48] sm:$0x3] %vm746, 0.0
          %784 = vst.msk [vmem:[#allocation3 + $0x4a] sm:$0x3] %vm746, 0.0
          %785 = vst.msk [vmem:[#allocation3 + $0x4c] sm:$0x3] %vm746, 0.0
          %786 = vst.msk [vmem:[#allocation3 + $0x4e] sm:$0x3] %vm746, 0.0
          %787 = vst.msk [vmem:[#allocation3 + $0x50] sm:$0x3] %vm746, 0.0
          %788 = vst.msk [vmem:[#allocation3 + $0x52] sm:$0x3] %vm746, 0.0
          %789 = vst.msk [vmem:[#allocation3 + $0x54] sm:$0x3] %vm746, 0.0
          %790 = vst.msk [vmem:[#allocation3 + $0x56] sm:$0x3] %vm746, 0.0
          %791 = vst.msk [vmem:[#allocation3 + $0x58] sm:$0x3] %vm746, 0.0
          %792 = vst.msk [vmem:[#allocation3 + $0x5a] sm:$0x3] %vm746, 0.0
          %793 = vst.msk [vmem:[#allocation3 + $0x5c] sm:$0x3] %vm746, 0.0
          %794 = vst.msk [vmem:[#allocation3 + $0x5e] sm:$0x3] %vm746, 0.0
          %795 = vst.msk [vmem:[#allocation3 + $0x60] sm:$0x3] %vm746, 0.0
          %796 = vst.msk [vmem:[#allocation3 + $0x62] sm:$0x3] %vm746, 0.0
          %797 = vst.msk [vmem:[#allocation3 + $0x64] sm:$0x3] %vm746, 0.0
          %798 = vst.msk [vmem:[#allocation3 + $0x66] sm:$0x3] %vm746, 0.0
          %799 = vst.msk [vmem:[#allocation3 + $0x68] sm:$0x3] %vm746, 0.0
          %800 = vst.msk [vmem:[#allocation3 + $0x6a] sm:$0x3] %vm746, 0.0
          %801 = vst.msk [vmem:[#allocation3 + $0x6c] sm:$0x3] %vm746, 0.0
          %802 = vst.msk [vmem:[#allocation3 + $0x6e] sm:$0x3] %vm746, 0.0
          %803 = vst.msk [vmem:[#allocation3 + $0x70] sm:$0x3] %vm746, 0.0
          %804 = vst.msk [vmem:[#allocation3 + $0x72] sm:$0x3] %vm746, 0.0
          %805 = vst.msk [vmem:[#allocation3 + $0x74] sm:$0x3] %vm746, 0.0
          %806 = vst.msk [vmem:[#allocation3 + $0x76] sm:$0x3] %vm746, 0.0
          %807 = vst.msk [vmem:[#allocation3 + $0x78] sm:$0x3] %vm746, 0.0
          %808 = vst.msk [vmem:[#allocation3 + $0x7a] sm:$0x3] %vm746, 0.0
          %809 = vst.msk [vmem:[#allocation3 + $0x7c] sm:$0x3] %vm746, 0.0
          %810 = vst.msk [vmem:[#allocation3 + $0x7e] sm:$0x3] %vm746, 0.0
          %811 = vst.msk [vmem:[#allocation3 + $0x80] sm:$0x3] %vm746, 0.0
          %812 = vst.msk [vmem:[#allocation3 + $0x82] sm:$0x3] %vm746, 0.0
          %813 = vst.msk [vmem:[#allocation3 + $0x84] sm:$0x3] %vm746, 0.0
          %814 = vst.msk [vmem:[#allocation3 + $0x86] sm:$0x3] %vm746, 0.0
          %815 = vst.msk [vmem:[#allocation3 + $0x88] sm:$0x3] %vm746, 0.0
          %816 = vst.msk [vmem:[#allocation3 + $0x8a] sm:$0x3] %vm746, 0.0
          %817 = vst.msk [vmem:[#allocation3 + $0x8c] sm:$0x3] %vm746, 0.0
          %818 = vst.msk [vmem:[#allocation3 + $0x8e] sm:$0x3] %vm746, 0.0
          %819 = vst.msk [vmem:[#allocation3 + $0x90] sm:$0x3] %vm746, 0.0
          %820 = vst.msk [vmem:[#allocation3 + $0x92] sm:$0x3] %vm746, 0.0
          %821 = vst.msk [vmem:[#allocation3 + $0x94] sm:$0x3] %vm746, 0.0
          %822 = vst.msk [vmem:[#allocation3 + $0x96] sm:$0x3] %vm746, 0.0
          %823 = vst.msk [vmem:[#allocation3 + $0x98] sm:$0x3] %vm746, 0.0
          %824 = vst.msk [vmem:[#allocation3 + $0x9a] sm:$0x3] %vm746, 0.0
          %825 = vst.msk [vmem:[#allocation3 + $0x9c] sm:$0x3] %vm746, 0.0
          %826 = vst.msk [vmem:[#allocation3 + $0x9e] sm:$0x3] %vm746, 0.0
          %827 = vst.msk [vmem:[#allocation3 + $0xa0] sm:$0x3] %vm746, 0.0
          %828 = vst.msk [vmem:[#allocation3 + $0xa2] sm:$0x3] %vm746, 0.0
          %829 = vst.msk [vmem:[#allocation3 + $0xa4] sm:$0x3] %vm746, 0.0
          %830 = vst.msk [vmem:[#allocation3 + $0xa6] sm:$0x3] %vm746, 0.0
          %831 = vst.msk [vmem:[#allocation3 + $0xa8] sm:$0x3] %vm746, 0.0
          %832 = vst.msk [vmem:[#allocation3 + $0xaa] sm:$0x3] %vm746, 0.0
          %833 = vst.msk [vmem:[#allocation3 + $0xac] sm:$0x3] %vm746, 0.0
          %834 = vst.msk [vmem:[#allocation3 + $0xae] sm:$0x3] %vm746, 0.0
          %835 = vst.msk [vmem:[#allocation3 + $0xb0] sm:$0x3] %vm746, 0.0
          %836 = vst.msk [vmem:[#allocation3 + $0xb2] sm:$0x3] %vm746, 0.0
          %837 = vst.msk [vmem:[#allocation3 + $0xb4] sm:$0x3] %vm746, 0.0
          %838 = vst.msk [vmem:[#allocation3 + $0xb6] sm:$0x3] %vm746, 0.0
          %839 = vst.msk [vmem:[#allocation3 + $0xb8] sm:$0x3] %vm746, 0.0
          %840 = vst.msk [vmem:[#allocation3 + $0xba] sm:$0x3] %vm746, 0.0
          %841 = vst.msk [vmem:[#allocation3 + $0xbc] sm:$0x3] %vm746, 0.0
          %842 = vst.msk [vmem:[#allocation3 + $0xbe] sm:$0x3] %vm746, 0.0
          %843 = vst.msk [vmem:[#allocation3 + $0xc0] sm:$0x3] %vm746, 0.0
          %844 = vst.msk [vmem:[#allocation3 + $0xc2] sm:$0x3] %vm746, 0.0
          %845 = vst.msk [vmem:[#allocation3 + $0xc4] sm:$0x3] %vm746, 0.0
          %846 = vst.msk [vmem:[#allocation3 + $0xc6] sm:$0x3] %vm746, 0.0
          %847 = vst.msk [vmem:[#allocation3 + $0xc8] sm:$0x3] %vm746, 0.0
          %848 = vst.msk [vmem:[#allocation3 + $0xca] sm:$0x3] %vm746, 0.0
          %849 = vst.msk [vmem:[#allocation3 + $0xcc] sm:$0x3] %vm746, 0.0
          %850 = vst.msk [vmem:[#allocation3 + $0xce] sm:$0x3] %vm746, 0.0
          %851 = vst.msk [vmem:[#allocation3 + $0xd0] sm:$0x3] %vm746, 0.0
          %852 = vst.msk [vmem:[#allocation3 + $0xd2] sm:$0x3] %vm746, 0.0
          %853 = vst.msk [vmem:[#allocation3 + $0xd4] sm:$0x3] %vm746, 0.0
          %854 = vst.msk [vmem:[#allocation3 + $0xd6] sm:$0x3] %vm746, 0.0
          %855 = vst.msk [vmem:[#allocation3 + $0xd8] sm:$0x3] %vm746, 0.0
          %856 = vst.msk [vmem:[#allocation3 + $0xda] sm:$0x3] %vm746, 0.0
          %857 = vst.msk [vmem:[#allocation3 + $0xdc] sm:$0x3] %vm746, 0.0
          %858 = vst.msk [vmem:[#allocation3 + $0xde] sm:$0x3] %vm746, 0.0
          %859 = vst.msk [vmem:[#allocation3 + $0xe0] sm:$0x3] %vm746, 0.0
          %860 = vst.msk [vmem:[#allocation3 + $0xe2] sm:$0x3] %vm746, 0.0
          %861 = vst.msk [vmem:[#allocation3 + $0xe4] sm:$0x3] %vm746, 0.0
          %862 = vst.msk [vmem:[#allocation3 + $0xe6] sm:$0x3] %vm746, 0.0
          %863 = vst.msk [vmem:[#allocation3 + $0xe8] sm:$0x3] %vm746, 0.0
          %864 = vst.msk [vmem:[#allocation3 + $0xea] sm:$0x3] %vm746, 0.0
          %865 = vst.msk [vmem:[#allocation3 + $0xec] sm:$0x3] %vm746, 0.0
          %866 = vst.msk [vmem:[#allocation3 + $0xee] sm:$0x3] %vm746, 0.0
          %867 = vst.msk [vmem:[#allocation3 + $0xf0] sm:$0x3] %vm746, 0.0
          %868 = vst.msk [vmem:[#allocation3 + $0xf2] sm:$0x3] %vm746, 0.0
          %869 = vst.msk [vmem:[#allocation3 + $0xf4] sm:$0x3] %vm746, 0.0
          %870 = vst.msk [vmem:[#allocation3 + $0xf6] sm:$0x3] %vm746, 0.0
          %871 = vst.msk [vmem:[#allocation3 + $0xf8] sm:$0x3] %vm746, 0.0
          %872 = vst.msk [vmem:[#allocation3 + $0xfa] sm:$0x3] %vm746, 0.0
          %873 = vst.msk [vmem:[#allocation3 + $0xfc] sm:$0x3] %vm746, 0.0
          %874 = vst.msk [vmem:[#allocation3 + $0xfe] sm:$0x3] %vm746, 0.0
          %875 = vst.msk [vmem:[#allocation3 + $0x100] sm:$0x3] %vm746, 0.0
          %876 = vst.msk [vmem:[#allocation3 + $0x102] sm:$0x3] %vm746, 0.0
          %877 = vst.msk [vmem:[#allocation3 + $0x104] sm:$0x3] %vm746, 0.0
          %878 = vst.msk [vmem:[#allocation3 + $0x106] sm:$0x3] %vm746, 0.0
          %879 = vst.msk [vmem:[#allocation3 + $0x108] sm:$0x3] %vm746, 0.0
          %880 = vst.msk [vmem:[#allocation3 + $0x10a] sm:$0x3] %vm746, 0.0
          %881 = vst.msk [vmem:[#allocation3 + $0x10c] sm:$0x3] %vm746, 0.0
          %882 = vst.msk [vmem:[#allocation3 + $0x10e] sm:$0x3] %vm746, 0.0
          %883 = vst.msk [vmem:[#allocation3 + $0x110] sm:$0x3] %vm746, 0.0
          %884 = vst.msk [vmem:[#allocation3 + $0x112] sm:$0x3] %vm746, 0.0
          %885 = vst.msk [vmem:[#allocation3 + $0x114] sm:$0x3] %vm746, 0.0
          %886 = vst.msk [vmem:[#allocation3 + $0x116] sm:$0x3] %vm746, 0.0
          %887 = vst.msk [vmem:[#allocation3 + $0x118] sm:$0x3] %vm746, 0.0
          %888 = vst.msk [vmem:[#allocation3 + $0x11a] sm:$0x3] %vm746, 0.0
          %889 = vst.msk [vmem:[#allocation3 + $0x11c] sm:$0x3] %vm746, 0.0
          %890 = vst.msk [vmem:[#allocation3 + $0x11e] sm:$0x3] %vm746, 0.0
          %891 = vst.msk [vmem:[#allocation3 + $0x120] sm:$0x3] %vm746, 0.0
          %892 = vst.msk [vmem:[#allocation3 + $0x122] sm:$0x3] %vm746, 0.0
          %893 = vst.msk [vmem:[#allocation3 + $0x124] sm:$0x3] %vm746, 0.0
          %894 = vst.msk [vmem:[#allocation3 + $0x126] sm:$0x3] %vm746, 0.0
          %895 = vst.msk [vmem:[#allocation3 + $0x128] sm:$0x3] %vm746, 0.0
          %896 = vst.msk [vmem:[#allocation3 + $0x12a] sm:$0x3] %vm746, 0.0
          %897 = vst.msk [vmem:[#allocation3 + $0x12c] sm:$0x3] %vm746, 0.0
          %898 = vst.msk [vmem:[#allocation3 + $0x12e] sm:$0x3] %vm746, 0.0
          %899 = vst.msk [vmem:[#allocation3 + $0x130] sm:$0x3] %vm746, 0.0
          %900 = vst.msk [vmem:[#allocation3 + $0x132] sm:$0x3] %vm746, 0.0
          %901 = vst.msk [vmem:[#allocation3 + $0x134] sm:$0x3] %vm746, 0.0
          %902 = vst.msk [vmem:[#allocation3 + $0x136] sm:$0x3] %vm746, 0.0
          %903 = vst.msk [vmem:[#allocation3 + $0x138] sm:$0x3] %vm746, 0.0
          %904 = vst.msk [vmem:[#allocation3 + $0x13a] sm:$0x3] %vm746, 0.0
          %905 = vst.msk [vmem:[#allocation3 + $0x13c] sm:$0x3] %vm746, 0.0
          %906 = vst.msk [vmem:[#allocation3 + $0x13e] sm:$0x3] %vm746, 0.0
          %907 = vst.msk [vmem:[#allocation3 + $0x140] sm:$0x3] %vm746, 0.0
          %908 = vst.msk [vmem:[#allocation3 + $0x142] sm:$0x3] %vm746, 0.0
          %909 = vst.msk [vmem:[#allocation3 + $0x144] sm:$0x3] %vm746, 0.0
          %910 = vst.msk [vmem:[#allocation3 + $0x146] sm:$0x3] %vm746, 0.0
          %911 = vst.msk [vmem:[#allocation3 + $0x148] sm:$0x3] %vm746, 0.0
          %912 = vst.msk [vmem:[#allocation3 + $0x14a] sm:$0x3] %vm746, 0.0
          %913 = vst.msk [vmem:[#allocation3 + $0x14c] sm:$0x3] %vm746, 0.0
          %914 = vst.msk [vmem:[#allocation3 + $0x14e] sm:$0x3] %vm746, 0.0
          %915 = vst.msk [vmem:[#allocation3 + $0x150] sm:$0x3] %vm746, 0.0
          %916 = vst.msk [vmem:[#allocation3 + $0x152] sm:$0x3] %vm746, 0.0
          %917 = vst.msk [vmem:[#allocation3 + $0x154] sm:$0x3] %vm746, 0.0
          %918 = vst.msk [vmem:[#allocation3 + $0x156] sm:$0x3] %vm746, 0.0
          %919 = vst.msk [vmem:[#allocation3 + $0x158] sm:$0x3] %vm746, 0.0
          %920 = vst.msk [vmem:[#allocation3 + $0x15a] sm:$0x3] %vm746, 0.0
          %921 = vst.msk [vmem:[#allocation3 + $0x15c] sm:$0x3] %vm746, 0.0
          %922 = vst.msk [vmem:[#allocation3 + $0x15e] sm:$0x3] %vm746, 0.0
          %923 = vst.msk [vmem:[#allocation3 + $0x160] sm:$0x3] %vm746, 0.0
          %924 = vst.msk [vmem:[#allocation3 + $0x162] sm:$0x3] %vm746, 0.0
          %925 = vst.msk [vmem:[#allocation3 + $0x164] sm:$0x3] %vm746, 0.0
          %926 = vst.msk [vmem:[#allocation3 + $0x166] sm:$0x3] %vm746, 0.0
          %927 = vst.msk [vmem:[#allocation3 + $0x168] sm:$0x3] %vm746, 0.0
          %928 = vst.msk [vmem:[#allocation3 + $0x16a] sm:$0x3] %vm746, 0.0
          %929 = vst.msk [vmem:[#allocation3 + $0x16c] sm:$0x3] %vm746, 0.0
          %930 = vst.msk [vmem:[#allocation3 + $0x16e] sm:$0x3] %vm746, 0.0
          %931 = vst.msk [vmem:[#allocation3 + $0x170] sm:$0x3] %vm746, 0.0
          %932 = vst.msk [vmem:[#allocation3 + $0x172] sm:$0x3] %vm746, 0.0
          %933 = vst.msk [vmem:[#allocation3 + $0x174] sm:$0x3] %vm746, 0.0
          %934 = vst.msk [vmem:[#allocation3 + $0x176] sm:$0x3] %vm746, 0.0
          %935 = vst.msk [vmem:[#allocation3 + $0x178] sm:$0x3] %vm746, 0.0
          %936 = vst.msk [vmem:[#allocation3 + $0x17a] sm:$0x3] %vm746, 0.0
          %937 = vst.msk [vmem:[#allocation3 + $0x17c] sm:$0x3] %vm746, 0.0
          %938 = vst.msk [vmem:[#allocation3 + $0x17e] sm:$0x3] %vm746, 0.0
          %939 = vst.msk [vmem:[#allocation3 + $0x180] sm:$0x3] %vm746, 0.0
          %940 = vst.msk [vmem:[#allocation3 + $0x182] sm:$0x3] %vm746, 0.0
          %941 = vst.msk [vmem:[#allocation3 + $0x184] sm:$0x3] %vm746, 0.0
          %942 = vst.msk [vmem:[#allocation3 + $0x186] sm:$0x3] %vm746, 0.0
          %943 = vst.msk [vmem:[#allocation3 + $0x188] sm:$0x3] %vm746, 0.0
          %944 = vst.msk [vmem:[#allocation3 + $0x18a] sm:$0x3] %vm746, 0.0
          %945 = vst.msk [vmem:[#allocation3 + $0x18c] sm:$0x3] %vm746, 0.0
          %946 = vst.msk [vmem:[#allocation3 + $0x18e] sm:$0x3] %vm746, 0.0
          %v955 = vrot.slane %v723, 1
          %v956 = vrot.slane %v723, 2
          %v957 = vrot.slane %v723, 3
          %v958 = vrot.slane %v723, 4
          %v959 = vrot.slane %v723, 5
          %v960 = vrot.slane %v723, 6
          %v961 = vrot.slane %v723, 7
          %v962 = vrot.slane %v726, 1
          %v963 = vrot.slane %v726, 2
          %v964 = vrot.slane %v726, 3
          %v965 = vrot.slane %v726, 4
          %v966 = vrot.slane %v726, 5
          %v967 = vrot.slane %v726, 6
          %v968 = vrot.slane %v726, 7
          %v969 = vrot.slane %v729, 1
          %v970 = vrot.slane %v729, 2
          %v971 = vrot.slane %v729, 3
          %v972 = vrot.slane %v729, 4
          %v973 = vrot.slane %v729, 5
          %v974 = vrot.slane %v729, 6
          %v975 = vrot.slane %v729, 7
          %v976 = vrot.slane %v732, 1
          %v977 = vrot.slane %v732, 2
          %v978 = vrot.slane %v732, 3
          %v979 = vrot.slane %v732, 4
          %v980 = vrot.slane %v732, 5
          %v981 = vrot.slane %v732, 6
          %v982 = vrot.slane %v732, 7
          %v983 = vrot.slane %v735, 1
          %v984 = vrot.slane %v735, 2
          %v985 = vrot.slane %v735, 3
          %v986 = vrot.slane %v735, 4
          %v987 = vrot.slane %v735, 5
          %v988 = vrot.slane %v735, 6
          %v989 = vrot.slane %v735, 7
          %v990 = vrot.slane %v738, 1
          %v991 = vrot.slane %v738, 2
          %v992 = vrot.slane %v738, 3
          %v993 = vrot.slane %v738, 4
          %v994 = vrot.slane %v738, 5
          %v995 = vrot.slane %v738, 6
          %v996 = vrot.slane %v738, 7
          %v997 = vrot.slane %v741, 1
          %v998 = vrot.slane %v741, 2
          %v999 = vrot.slane %v741, 3
          %v1000 = vrot.slane %v741, 4
          %v1001 = vrot.slane %v741, 5
          %v1002 = vrot.slane %v741, 6
          %v1003 = vrot.slane %v741, 7
          %v1004 = vrot.slane %v744, 1
          %v1005 = vrot.slane %v744, 2
          %v1006 = vrot.slane %v744, 3
          %v1007 = vrot.slane %v744, 4
          %v1008 = vrot.slane %v744, 5
          %v1009 = vrot.slane %v744, 6
          %v1010 = vrot.slane %v744, 7
          %s1067 = scalar_lea.vmem [#allocation3], 42
          %vm1068 = vcmask 8192
          %1069 = vst.msk [vmem:[%s1067] sm:$0x1] %vm1068, %v723
          %1070 = vst.msk [vmem:[%s1067 + $0x2] sm:$0x1] %vm1068, %v955
          %1071 = vst.msk [vmem:[%s1067 + $0x4] sm:$0x1] %vm1068, %v956
          %1072 = vst.msk [vmem:[%s1067 + $0x6] sm:$0x1] %vm1068, %v957
          %1073 = vst.msk [vmem:[%s1067 + $0x8] sm:$0x1] %vm1068, %v958
          %1074 = vst.msk [vmem:[%s1067 + $0xa] sm:$0x1] %vm1068, %v959
          %1075 = vst.msk [vmem:[%s1067 + $0xc] sm:$0x1] %vm1068, %v960
          %1076 = vst.msk [vmem:[%s1067 + $0xe] sm:$0x1] %vm1068, %v961
          %1077 = vst.msk [vmem:[%s1067 + $0x28] sm:$0x1] %vm1068, %v726
          %1078 = vst.msk [vmem:[%s1067 + $0x2a] sm:$0x1] %vm1068, %v962
          %1079 = vst.msk [vmem:[%s1067 + $0x2c] sm:$0x1] %vm1068, %v963
          %1080 = vst.msk [vmem:[%s1067 + $0x2e] sm:$0x1] %vm1068, %v964
          %1081 = vst.msk [vmem:[%s1067 + $0x30] sm:$0x1] %vm1068, %v965
          %1082 = vst.msk [vmem:[%s1067 + $0x32] sm:$0x1] %vm1068, %v966
          %1083 = vst.msk [vmem:[%s1067 + $0x34] sm:$0x1] %vm1068, %v967
          %1084 = vst.msk [vmem:[%s1067 + $0x36] sm:$0x1] %vm1068, %v968
          %1085 = vst.msk [vmem:[%s1067 + $0x50] sm:$0x1] %vm1068, %v729
          %1086 = vst.msk [vmem:[%s1067 + $0x52] sm:$0x1] %vm1068, %v969
          %1087 = vst.msk [vmem:[%s1067 + $0x54] sm:$0x1] %vm1068, %v970
          %1088 = vst.msk [vmem:[%s1067 + $0x56] sm:$0x1] %vm1068, %v971
          %1089 = vst.msk [vmem:[%s1067 + $0x58] sm:$0x1] %vm1068, %v972
          %1090 = vst.msk [vmem:[%s1067 + $0x5a] sm:$0x1] %vm1068, %v973
          %1091 = vst.msk [vmem:[%s1067 + $0x5c] sm:$0x1] %vm1068, %v974
          %1092 = vst.msk [vmem:[%s1067 + $0x5e] sm:$0x1] %vm1068, %v975
          %1093 = vst.msk [vmem:[%s1067 + $0x78] sm:$0x1] %vm1068, %v732
          %1094 = vst.msk [vmem:[%s1067 + $0x7a] sm:$0x1] %vm1068, %v976
          %1095 = vst.msk [vmem:[%s1067 + $0x7c] sm:$0x1] %vm1068, %v977
          %1096 = vst.msk [vmem:[%s1067 + $0x7e] sm:$0x1] %vm1068, %v978
          %1097 = vst.msk [vmem:[%s1067 + $0x80] sm:$0x1] %vm1068, %v979
          %1098 = vst.msk [vmem:[%s1067 + $0x82] sm:$0x1] %vm1068, %v980
          %1099 = vst.msk [vmem:[%s1067 + $0x84] sm:$0x1] %vm1068, %v981
          %1100 = vst.msk [vmem:[%s1067 + $0x86] sm:$0x1] %vm1068, %v982
          %1101 = vst.msk [vmem:[%s1067 + $0xa0] sm:$0x1] %vm1068, %v735
          %1102 = vst.msk [vmem:[%s1067 + $0xa2] sm:$0x1] %vm1068, %v983
          %1103 = vst.msk [vmem:[%s1067 + $0xa4] sm:$0x1] %vm1068, %v984
          %1104 = vst.msk [vmem:[%s1067 + $0xa6] sm:$0x1] %vm1068, %v985
          %1105 = vst.msk [vmem:[%s1067 + $0xa8] sm:$0x1] %vm1068, %v986
          %1106 = vst.msk [vmem:[%s1067 + $0xaa] sm:$0x1] %vm1068, %v987
          %1107 = vst.msk [vmem:[%s1067 + $0xac] sm:$0x1] %vm1068, %v988
          %1108 = vst.msk [vmem:[%s1067 + $0xae] sm:$0x1] %vm1068, %v989
          %1109 = vst.msk [vmem:[%s1067 + $0xc8] sm:$0x1] %vm1068, %v738
          %1110 = vst.msk [vmem:[%s1067 + $0xca] sm:$0x1] %vm1068, %v990
          %1111 = vst.msk [vmem:[%s1067 + $0xcc] sm:$0x1] %vm1068, %v991
          %1112 = vst.msk [vmem:[%s1067 + $0xce] sm:$0x1] %vm1068, %v992
          %1113 = vst.msk [vmem:[%s1067 + $0xd0] sm:$0x1] %vm1068, %v993
          %1114 = vst.msk [vmem:[%s1067 + $0xd2] sm:$0x1] %vm1068, %v994
          %1115 = vst.msk [vmem:[%s1067 + $0xd4] sm:$0x1] %vm1068, %v995
          %1116 = vst.msk [vmem:[%s1067 + $0xd6] sm:$0x1] %vm1068, %v996
          %1117 = vst.msk [vmem:[%s1067 + $0xf0] sm:$0x1] %vm1068, %v741
          %1118 = vst.msk [vmem:[%s1067 + $0xf2] sm:$0x1] %vm1068, %v997
          %1119 = vst.msk [vmem:[%s1067 + $0xf4] sm:$0x1] %vm1068, %v998
          %1120 = vst.msk [vmem:[%s1067 + $0xf6] sm:$0x1] %vm1068, %v999
          %1121 = vst.msk [vmem:[%s1067 + $0xf8] sm:$0x1] %vm1068, %v1000
          %1122 = vst.msk [vmem:[%s1067 + $0xfa] sm:$0x1] %vm1068, %v1001
          %1123 = vst.msk [vmem:[%s1067 + $0xfc] sm:$0x1] %vm1068, %v1002
          %1124 = vst.msk [vmem:[%s1067 + $0xfe] sm:$0x1] %vm1068, %v1003
          %1125 = vst.msk [vmem:[%s1067 + $0x118] sm:$0x1] %vm1068, %v744
          %1126 = vst.msk [vmem:[%s1067 + $0x11a] sm:$0x1] %vm1068, %v1004
          %1127 = vst.msk [vmem:[%s1067 + $0x11c] sm:$0x1] %vm1068, %v1005
          %1128 = vst.msk [vmem:[%s1067 + $0x11e] sm:$0x1] %vm1068, %v1006
          %1129 = vst.msk [vmem:[%s1067 + $0x120] sm:$0x1] %vm1068, %v1007
          %1130 = vst.msk [vmem:[%s1067 + $0x122] sm:$0x1] %vm1068, %v1008
          %1131 = vst.msk [vmem:[%s1067 + $0x124] sm:$0x1] %vm1068, %v1009
          %1132 = vst.msk [vmem:[%s1067 + $0x126] sm:$0x1] %vm1068, %v1010
          %v1133 = vperm.slane %v723, 0
          %v1134 = vperm.slane %v955, 0
          %v1135 = vperm.slane %v956, 0
          %v1136 = vperm.slane %v957, 0
          %v1137 = vperm.slane %v958, 0
          %v1138 = vperm.slane %v959, 0
          %v1139 = vperm.slane %v960, 0
          %v1140 = vperm.slane %v961, 0
          %v1141 = vperm.slane %v726, 0
          %v1142 = vperm.slane %v962, 0
          %v1143 = vperm.slane %v963, 0
          %v1144 = vperm.slane %v964, 0
          %v1145 = vperm.slane %v965, 0
          %v1146 = vperm.slane %v966, 0
          %v1147 = vperm.slane %v967, 0
          %v1148 = vperm.slane %v968, 0
          %v1149 = vperm.slane %v729, 0
          %v1150 = vperm.slane %v969, 0
          %v1151 = vperm.slane %v970, 0
          %v1152 = vperm.slane %v971, 0
          %v1153 = vperm.slane %v972, 0
          %v1154 = vperm.slane %v973, 0
          %v1155 = vperm.slane %v974, 0
          %v1156 = vperm.slane %v975, 0
          %v1157 = vperm.slane %v732, 0
          %v1158 = vperm.slane %v976, 0
          %v1159 = vperm.slane %v977, 0
          %v1160 = vperm.slane %v978, 0
          %v1161 = vperm.slane %v979, 0
          %v1162 = vperm.slane %v980, 0
          %v1163 = vperm.slane %v981, 0
          %v1164 = vperm.slane %v982, 0
          %v1165 = vperm.slane %v735, 0
          %v1166 = vperm.slane %v983, 0
          %v1167 = vperm.slane %v984, 0
          %v1168 = vperm.slane %v985, 0
          %v1169 = vperm.slane %v986, 0
          %v1170 = vperm.slane %v987, 0
          %v1171 = vperm.slane %v988, 0
          %v1172 = vperm.slane %v989, 0
          %v1173 = vperm.slane %v738, 0
          %v1174 = vperm.slane %v990, 0
          %v1175 = vperm.slane %v991, 0
          %v1176 = vperm.slane %v992, 0
          %v1177 = vperm.slane %v993, 0
          %v1178 = vperm.slane %v994, 0
          %v1179 = vperm.slane %v995, 0
          %v1180 = vperm.slane %v996, 0
          %v1181 = vperm.slane %v741, 0
          %v1182 = vperm.slane %v997, 0
          %v1183 = vperm.slane %v998, 0
          %v1184 = vperm.slane %v999, 0
          %v1185 = vperm.slane %v1000, 0
          %v1186 = vperm.slane %v1001, 0
          %v1187 = vperm.slane %v1002, 0
          %v1188 = vperm.slane %v1003, 0
          %v1189 = vperm.slane %v744, 0
          %v1190 = vperm.slane %v1004, 0
          %v1191 = vperm.slane %v1005, 0
          %v1192 = vperm.slane %v1006, 0
          %v1193 = vperm.slane %v1007, 0
          %v1194 = vperm.slane %v1008, 0
          %v1195 = vperm.slane %v1009, 0
          %v1196 = vperm.slane %v1010, 0
          %1197 = vrot.lane.b32.xlu0 %v1133, 126
          %v1198 = vpop.permute.xlu0 %1197
          %1199 = vrot.lane.b32.xlu0 %v1134, 126
          %v1200 = vpop.permute.xlu0 %1199
          %1201 = vrot.lane.b32.xlu0 %v1135, 126
          %v1202 = vpop.permute.xlu0 %1201
          %1203 = vrot.lane.b32.xlu0 %v1136, 126
          %v1204 = vpop.permute.xlu0 %1203
          %1205 = vrot.lane.b32.xlu0 %v1137, 126
          %v1206 = vpop.permute.xlu0 %1205
          %1207 = vrot.lane.b32.xlu0 %v1138, 126
          %v1208 = vpop.permute.xlu0 %1207
          %1209 = vrot.lane.b32.xlu0 %v1139, 126
          %v1210 = vpop.permute.xlu0 %1209
          %1211 = vrot.lane.b32.xlu0 %v1140, 126
          %v1212 = vpop.permute.xlu0 %1211
          %1213 = vrot.lane.b32.xlu0 %v1141, 126
          %v1214 = vpop.permute.xlu0 %1213
          %1215 = vrot.lane.b32.xlu0 %v1142, 126
          %v1216 = vpop.permute.xlu0 %1215
          %1217 = vrot.lane.b32.xlu0 %v1143, 126
          %v1218 = vpop.permute.xlu0 %1217
          %1219 = vrot.lane.b32.xlu0 %v1144, 126
          %v1220 = vpop.permute.xlu0 %1219
          %1221 = vrot.lane.b32.xlu0 %v1145, 126
          %v1222 = vpop.permute.xlu0 %1221
          %1223 = vrot.lane.b32.xlu0 %v1146, 126
          %v1224 = vpop.permute.xlu0 %1223
          %1225 = vrot.lane.b32.xlu0 %v1147, 126
          %v1226 = vpop.permute.xlu0 %1225
          %1227 = vrot.lane.b32.xlu0 %v1148, 126
          %v1228 = vpop.permute.xlu0 %1227
          %1229 = vrot.lane.b32.xlu0 %v1149, 126
          %v1230 = vpop.permute.xlu0 %1229
          %1231 = vrot.lane.b32.xlu0 %v1150, 126
          %v1232 = vpop.permute.xlu0 %1231
          %1233 = vrot.lane.b32.xlu0 %v1151, 126
          %v1234 = vpop.permute.xlu0 %1233
          %1235 = vrot.lane.b32.xlu0 %v1152, 126
          %v1236 = vpop.permute.xlu0 %1235
          %1237 = vrot.lane.b32.xlu0 %v1153, 126
          %v1238 = vpop.permute.xlu0 %1237
          %1239 = vrot.lane.b32.xlu0 %v1154, 126
          %v1240 = vpop.permute.xlu0 %1239
          %1241 = vrot.lane.b32.xlu0 %v1155, 126
          %v1242 = vpop.permute.xlu0 %1241
          %1243 = vrot.lane.b32.xlu0 %v1156, 126
          %v1244 = vpop.permute.xlu0 %1243
          %1245 = vrot.lane.b32.xlu0 %v1157, 126
          %v1246 = vpop.permute.xlu0 %1245
          %1247 = vrot.lane.b32.xlu0 %v1158, 126
          %v1248 = vpop.permute.xlu0 %1247
          %1249 = vrot.lane.b32.xlu0 %v1159, 126
          %v1250 = vpop.permute.xlu0 %1249
          %1251 = vrot.lane.b32.xlu0 %v1160, 126
          %v1252 = vpop.permute.xlu0 %1251
          %1253 = vrot.lane.b32.xlu0 %v1161, 126
          %v1254 = vpop.permute.xlu0 %1253
          %1255 = vrot.lane.b32.xlu0 %v1162, 126
          %v1256 = vpop.permute.xlu0 %1255
          %1257 = vrot.lane.b32.xlu0 %v1163, 126
          %v1258 = vpop.permute.xlu0 %1257
          %1259 = vrot.lane.b32.xlu0 %v1164, 126
          %v1260 = vpop.permute.xlu0 %1259
          %1261 = vrot.lane.b32.xlu0 %v1165, 126
          %v1262 = vpop.permute.xlu0 %1261
          %1263 = vrot.lane.b32.xlu0 %v1166, 126
          %v1264 = vpop.permute.xlu0 %1263
          %1265 = vrot.lane.b32.xlu0 %v1167, 126
          %v1266 = vpop.permute.xlu0 %1265
          %1267 = vrot.lane.b32.xlu0 %v1168, 126
          %v1268 = vpop.permute.xlu0 %1267
          %1269 = vrot.lane.b32.xlu0 %v1169, 126
          %v1270 = vpop.permute.xlu0 %1269
          %1271 = vrot.lane.b32.xlu0 %v1170, 126
          %v1272 = vpop.permute.xlu0 %1271
          %1273 = vrot.lane.b32.xlu0 %v1171, 126
          %v1274 = vpop.permute.xlu0 %1273
          %1275 = vrot.lane.b32.xlu0 %v1172, 126
          %v1276 = vpop.permute.xlu0 %1275
          %1277 = vrot.lane.b32.xlu0 %v1173, 126
          %v1278 = vpop.permute.xlu0 %1277
          %1279 = vrot.lane.b32.xlu0 %v1174, 126
          %v1280 = vpop.permute.xlu0 %1279
          %1281 = vrot.lane.b32.xlu0 %v1175, 126
          %v1282 = vpop.permute.xlu0 %1281
          %1283 = vrot.lane.b32.xlu0 %v1176, 126
          %v1284 = vpop.permute.xlu0 %1283
          %1285 = vrot.lane.b32.xlu0 %v1177, 126
          %v1286 = vpop.permute.xlu0 %1285
          %1287 = vrot.lane.b32.xlu0 %v1178, 126
          %v1288 = vpop.permute.xlu0 %1287
          %1289 = vrot.lane.b32.xlu0 %v1179, 126
          %v1290 = vpop.permute.xlu0 %1289
          %1291 = vrot.lane.b32.xlu0 %v1180, 126
          %v1292 = vpop.permute.xlu0 %1291
          %1293 = vrot.lane.b32.xlu0 %v1181, 126
          %v1294 = vpop.permute.xlu0 %1293
          %1295 = vrot.lane.b32.xlu0 %v1182, 126
          %v1296 = vpop.permute.xlu0 %1295
          %1297 = vrot.lane.b32.xlu0 %v1183, 126
          %v1298 = vpop.permute.xlu0 %1297
          %1299 = vrot.lane.b32.xlu0 %v1184, 126
          %v1300 = vpop.permute.xlu0 %1299
          %1301 = vrot.lane.b32.xlu0 %v1185, 126
          %v1302 = vpop.permute.xlu0 %1301
          %1303 = vrot.lane.b32.xlu0 %v1186, 126
          %v1304 = vpop.permute.xlu0 %1303
          %1305 = vrot.lane.b32.xlu0 %v1187, 126
          %v1306 = vpop.permute.xlu0 %1305
          %1307 = vrot.lane.b32.xlu0 %v1188, 126
          %v1308 = vpop.permute.xlu0 %1307
          %1309 = vrot.lane.b32.xlu0 %v1189, 126
          %v1310 = vpop.permute.xlu0 %1309
          %1311 = vrot.lane.b32.xlu0 %v1190, 126
          %v1312 = vpop.permute.xlu0 %1311
          %1313 = vrot.lane.b32.xlu0 %v1191, 126
          %v1314 = vpop.permute.xlu0 %1313
          %1315 = vrot.lane.b32.xlu0 %v1192, 126
          %v1316 = vpop.permute.xlu0 %1315
          %1317 = vrot.lane.b32.xlu0 %v1193, 126
          %v1318 = vpop.permute.xlu0 %1317
          %1319 = vrot.lane.b32.xlu0 %v1194, 126
          %v1320 = vpop.permute.xlu0 %1319
          %1321 = vrot.lane.b32.xlu0 %v1195, 126
          %v1322 = vpop.permute.xlu0 %1321
          %1323 = vrot.lane.b32.xlu0 %v1196, 126
          %v1324 = vpop.permute.xlu0 %1323
          %1389 = vst.msk [vmem:[%s1067 + $0x1] sm:$0x1] %vm1068, %v1198
          %1390 = vst.msk [vmem:[%s1067 + $0x3] sm:$0x1] %vm1068, %v1200
          %1391 = vst.msk [vmem:[%s1067 + $0x5] sm:$0x1] %vm1068, %v1202
          %1392 = vst.msk [vmem:[%s1067 + $0x7] sm:$0x1] %vm1068, %v1204
          %1393 = vst.msk [vmem:[%s1067 + $0x9] sm:$0x1] %vm1068, %v1206
          %1394 = vst.msk [vmem:[%s1067 + $0xb] sm:$0x1] %vm1068, %v1208
          %1395 = vst.msk [vmem:[%s1067 + $0xd] sm:$0x1] %vm1068, %v1210
          %1396 = vst.msk [vmem:[%s1067 + $0xf] sm:$0x1] %vm1068, %v1212
          %1397 = vst.msk [vmem:[%s1067 + $0x29] sm:$0x1] %vm1068, %v1214
          %1398 = vst.msk [vmem:[%s1067 + $0x2b] sm:$0x1] %vm1068, %v1216
          %1399 = vst.msk [vmem:[%s1067 + $0x2d] sm:$0x1] %vm1068, %v1218
          %1400 = vst.msk [vmem:[%s1067 + $0x2f] sm:$0x1] %vm1068, %v1220
          %1401 = vst.msk [vmem:[%s1067 + $0x31] sm:$0x1] %vm1068, %v1222
          %1402 = vst.msk [vmem:[%s1067 + $0x33] sm:$0x1] %vm1068, %v1224
          %1403 = vst.msk [vmem:[%s1067 + $0x35] sm:$0x1] %vm1068, %v1226
          %1404 = vst.msk [vmem:[%s1067 + $0x37] sm:$0x1] %vm1068, %v1228
          %1405 = vst.msk [vmem:[%s1067 + $0x51] sm:$0x1] %vm1068, %v1230
          %1406 = vst.msk [vmem:[%s1067 + $0x53] sm:$0x1] %vm1068, %v1232
          %1407 = vst.msk [vmem:[%s1067 + $0x55] sm:$0x1] %vm1068, %v1234
          %1408 = vst.msk [vmem:[%s1067 + $0x57] sm:$0x1] %vm1068, %v1236
          %1409 = vst.msk [vmem:[%s1067 + $0x59] sm:$0x1] %vm1068, %v1238
          %1410 = vst.msk [vmem:[%s1067 + $0x5b] sm:$0x1] %vm1068, %v1240
          %1411 = vst.msk [vmem:[%s1067 + $0x5d] sm:$0x1] %vm1068, %v1242
          %1412 = vst.msk [vmem:[%s1067 + $0x5f] sm:$0x1] %vm1068, %v1244
          %1413 = vst.msk [vmem:[%s1067 + $0x79] sm:$0x1] %vm1068, %v1246
          %1414 = vst.msk [vmem:[%s1067 + $0x7b] sm:$0x1] %vm1068, %v1248
          %1415 = vst.msk [vmem:[%s1067 + $0x7d] sm:$0x1] %vm1068, %v1250
          %1416 = vst.msk [vmem:[%s1067 + $0x7f] sm:$0x1] %vm1068, %v1252
          %1417 = vst.msk [vmem:[%s1067 + $0x81] sm:$0x1] %vm1068, %v1254
          %1418 = vst.msk [vmem:[%s1067 + $0x83] sm:$0x1] %vm1068, %v1256
          %1419 = vst.msk [vmem:[%s1067 + $0x85] sm:$0x1] %vm1068, %v1258
          %1420 = vst.msk [vmem:[%s1067 + $0x87] sm:$0x1] %vm1068, %v1260
          %1421 = vst.msk [vmem:[%s1067 + $0xa1] sm:$0x1] %vm1068, %v1262
          %1422 = vst.msk [vmem:[%s1067 + $0xa3] sm:$0x1] %vm1068, %v1264
          %1423 = vst.msk [vmem:[%s1067 + $0xa5] sm:$0x1] %vm1068, %v1266
          %1424 = vst.msk [vmem:[%s1067 + $0xa7] sm:$0x1] %vm1068, %v1268
          %1425 = vst.msk [vmem:[%s1067 + $0xa9] sm:$0x1] %vm1068, %v1270
          %1426 = vst.msk [vmem:[%s1067 + $0xab] sm:$0x1] %vm1068, %v1272
          %1427 = vst.msk [vmem:[%s1067 + $0xad] sm:$0x1] %vm1068, %v1274
          %1428 = vst.msk [vmem:[%s1067 + $0xaf] sm:$0x1] %vm1068, %v1276
          %1429 = vst.msk [vmem:[%s1067 + $0xc9] sm:$0x1] %vm1068, %v1278
          %1430 = vst.msk [vmem:[%s1067 + $0xcb] sm:$0x1] %vm1068, %v1280
          %1431 = vst.msk [vmem:[%s1067 + $0xcd] sm:$0x1] %vm1068, %v1282
          %1432 = vst.msk [vmem:[%s1067 + $0xcf] sm:$0x1] %vm1068, %v1284
          %1433 = vst.msk [vmem:[%s1067 + $0xd1] sm:$0x1] %vm1068, %v1286
          %1434 = vst.msk [vmem:[%s1067 + $0xd3] sm:$0x1] %vm1068, %v1288
          %1435 = vst.msk [vmem:[%s1067 + $0xd5] sm:$0x1] %vm1068, %v1290
          %1436 = vst.msk [vmem:[%s1067 + $0xd7] sm:$0x1] %vm1068, %v1292
          %1437 = vst.msk [vmem:[%s1067 + $0xf1] sm:$0x1] %vm1068, %v1294
          %1438 = vst.msk [vmem:[%s1067 + $0xf3] sm:$0x1] %vm1068, %v1296
          %1439 = vst.msk [vmem:[%s1067 + $0xf5] sm:$0x1] %vm1068, %v1298
          %1440 = vst.msk [vmem:[%s1067 + $0xf7] sm:$0x1] %vm1068, %v1300
          %1441 = vst.msk [vmem:[%s1067 + $0xf9] sm:$0x1] %vm1068, %v1302
          %1442 = vst.msk [vmem:[%s1067 + $0xfb] sm:$0x1] %vm1068, %v1304
          %1443 = vst.msk [vmem:[%s1067 + $0xfd] sm:$0x1] %vm1068, %v1306
          %1444 = vst.msk [vmem:[%s1067 + $0xff] sm:$0x1] %vm1068, %v1308
          %1445 = vst.msk [vmem:[%s1067 + $0x119] sm:$0x1] %vm1068, %v1310
          %1446 = vst.msk [vmem:[%s1067 + $0x11b] sm:$0x1] %vm1068, %v1312
          %1447 = vst.msk [vmem:[%s1067 + $0x11d] sm:$0x1] %vm1068, %v1314
          %1448 = vst.msk [vmem:[%s1067 + $0x11f] sm:$0x1] %vm1068, %v1316
          %1449 = vst.msk [vmem:[%s1067 + $0x121] sm:$0x1] %vm1068, %v1318
          %1450 = vst.msk [vmem:[%s1067 + $0x123] sm:$0x1] %vm1068, %v1320
          %1451 = vst.msk [vmem:[%s1067 + $0x125] sm:$0x1] %vm1068, %v1322
          %1452 = vst.msk [vmem:[%s1067 + $0x127] sm:$0x1] %vm1068, %v1324
          %1453 = vrot.lane.b32.xlu0 %v1133, 124
          %v1454 = vpop.permute.xlu0 %1453
          %1455 = vrot.lane.b32.xlu0 %v1134, 124
          %v1456 = vpop.permute.xlu0 %1455
          %1457 = vrot.lane.b32.xlu0 %v1135, 124
          %v1458 = vpop.permute.xlu0 %1457
          %1459 = vrot.lane.b32.xlu0 %v1136, 124
          %v1460 = vpop.permute.xlu0 %1459
          %1461 = vrot.lane.b32.xlu0 %v1137, 124
          %v1462 = vpop.permute.xlu0 %1461
          %1463 = vrot.lane.b32.xlu0 %v1138, 124
          %v1464 = vpop.permute.xlu0 %1463
          %1465 = vrot.lane.b32.xlu0 %v1139, 124
          %v1466 = vpop.permute.xlu0 %1465
          %1467 = vrot.lane.b32.xlu0 %v1140, 124
          %v1468 = vpop.permute.xlu0 %1467
          %1469 = vrot.lane.b32.xlu0 %v1141, 124
          %v1470 = vpop.permute.xlu0 %1469
          %1471 = vrot.lane.b32.xlu0 %v1142, 124
          %v1472 = vpop.permute.xlu0 %1471
          %1473 = vrot.lane.b32.xlu0 %v1143, 124
          %v1474 = vpop.permute.xlu0 %1473
          %1475 = vrot.lane.b32.xlu0 %v1144, 124
          %v1476 = vpop.permute.xlu0 %1475
          %1477 = vrot.lane.b32.xlu0 %v1145, 124
          %v1478 = vpop.permute.xlu0 %1477
          %1479 = vrot.lane.b32.xlu0 %v1146, 124
          %v1480 = vpop.permute.xlu0 %1479
          %1481 = vrot.lane.b32.xlu0 %v1147, 124
          %v1482 = vpop.permute.xlu0 %1481
          %1483 = vrot.lane.b32.xlu0 %v1148, 124
          %v1484 = vpop.permute.xlu0 %1483
          %1485 = vrot.lane.b32.xlu0 %v1149, 124
          %v1486 = vpop.permute.xlu0 %1485
          %1487 = vrot.lane.b32.xlu0 %v1150, 124
          %v1488 = vpop.permute.xlu0 %1487
          %1489 = vrot.lane.b32.xlu0 %v1151, 124
          %v1490 = vpop.permute.xlu0 %1489
          %1491 = vrot.lane.b32.xlu0 %v1152, 124
          %v1492 = vpop.permute.xlu0 %1491
          %1493 = vrot.lane.b32.xlu0 %v1153, 124
          %v1494 = vpop.permute.xlu0 %1493
          %1495 = vrot.lane.b32.xlu0 %v1154, 124
          %v1496 = vpop.permute.xlu0 %1495
          %1497 = vrot.lane.b32.xlu0 %v1155, 124
          %v1498 = vpop.permute.xlu0 %1497
          %1499 = vrot.lane.b32.xlu0 %v1156, 124
          %v1500 = vpop.permute.xlu0 %1499
          %1501 = vrot.lane.b32.xlu0 %v1157, 124
          %v1502 = vpop.permute.xlu0 %1501
          %1503 = vrot.lane.b32.xlu0 %v1158, 124
          %v1504 = vpop.permute.xlu0 %1503
          %1505 = vrot.lane.b32.xlu0 %v1159, 124
          %v1506 = vpop.permute.xlu0 %1505
          %1507 = vrot.lane.b32.xlu0 %v1160, 124
          %v1508 = vpop.permute.xlu0 %1507
          %1509 = vrot.lane.b32.xlu0 %v1161, 124
          %v1510 = vpop.permute.xlu0 %1509
          %1511 = vrot.lane.b32.xlu0 %v1162, 124
          %v1512 = vpop.permute.xlu0 %1511
          %1513 = vrot.lane.b32.xlu0 %v1163, 124
          %v1514 = vpop.permute.xlu0 %1513
          %1515 = vrot.lane.b32.xlu0 %v1164, 124
          %v1516 = vpop.permute.xlu0 %1515
          %1517 = vrot.lane.b32.xlu0 %v1165, 124
          %v1518 = vpop.permute.xlu0 %1517
          %1519 = vrot.lane.b32.xlu0 %v1166, 124
          %v1520 = vpop.permute.xlu0 %1519
          %1521 = vrot.lane.b32.xlu0 %v1167, 124
          %v1522 = vpop.permute.xlu0 %1521
          %1523 = vrot.lane.b32.xlu0 %v1168, 124
          %v1524 = vpop.permute.xlu0 %1523
          %1525 = vrot.lane.b32.xlu0 %v1169, 124
          %v1526 = vpop.permute.xlu0 %1525
          %1527 = vrot.lane.b32.xlu0 %v1170, 124
          %v1528 = vpop.permute.xlu0 %1527
          %1529 = vrot.lane.b32.xlu0 %v1171, 124
          %v1530 = vpop.permute.xlu0 %1529
          %1531 = vrot.lane.b32.xlu0 %v1172, 124
          %v1532 = vpop.permute.xlu0 %1531
          %1533 = vrot.lane.b32.xlu0 %v1173, 124
          %v1534 = vpop.permute.xlu0 %1533
          %1535 = vrot.lane.b32.xlu0 %v1174, 124
          %v1536 = vpop.permute.xlu0 %1535
          %1537 = vrot.lane.b32.xlu0 %v1175, 124
          %v1538 = vpop.permute.xlu0 %1537
          %1539 = vrot.lane.b32.xlu0 %v1176, 124
          %v1540 = vpop.permute.xlu0 %1539
          %1541 = vrot.lane.b32.xlu0 %v1177, 124
          %v1542 = vpop.permute.xlu0 %1541
          %1543 = vrot.lane.b32.xlu0 %v1178, 124
          %v1544 = vpop.permute.xlu0 %1543
          %1545 = vrot.lane.b32.xlu0 %v1179, 124
          %v1546 = vpop.permute.xlu0 %1545
          %1547 = vrot.lane.b32.xlu0 %v1180, 124
          %v1548 = vpop.permute.xlu0 %1547
          %1549 = vrot.lane.b32.xlu0 %v1181, 124
          %v1550 = vpop.permute.xlu0 %1549
          %1551 = vrot.lane.b32.xlu0 %v1182, 124
          %v1552 = vpop.permute.xlu0 %1551
          %1553 = vrot.lane.b32.xlu0 %v1183, 124
          %v1554 = vpop.permute.xlu0 %1553
          %1555 = vrot.lane.b32.xlu0 %v1184, 124
          %v1556 = vpop.permute.xlu0 %1555
          %1557 = vrot.lane.b32.xlu0 %v1185, 124
          %v1558 = vpop.permute.xlu0 %1557
          %1559 = vrot.lane.b32.xlu0 %v1186, 124
          %v1560 = vpop.permute.xlu0 %1559
          %1561 = vrot.lane.b32.xlu0 %v1187, 124
          %v1562 = vpop.permute.xlu0 %1561
          %1563 = vrot.lane.b32.xlu0 %v1188, 124
          %v1564 = vpop.permute.xlu0 %1563
          %1565 = vrot.lane.b32.xlu0 %v1189, 124
          %v1566 = vpop.permute.xlu0 %1565
          %1567 = vrot.lane.b32.xlu0 %v1190, 124
          %v1568 = vpop.permute.xlu0 %1567
          %1569 = vrot.lane.b32.xlu0 %v1191, 124
          %v1570 = vpop.permute.xlu0 %1569
          %1571 = vrot.lane.b32.xlu0 %v1192, 124
          %v1572 = vpop.permute.xlu0 %1571
          %1573 = vrot.lane.b32.xlu0 %v1193, 124
          %v1574 = vpop.permute.xlu0 %1573
          %1575 = vrot.lane.b32.xlu0 %v1194, 124
          %v1576 = vpop.permute.xlu0 %1575
          %1577 = vrot.lane.b32.xlu0 %v1195, 124
          %v1578 = vpop.permute.xlu0 %1577
          %1579 = vrot.lane.b32.xlu0 %v1196, 124
          %v1580 = vpop.permute.xlu0 %1579
          %s1645 = scalar_lea.vmem [#allocation3], 62
          %1646 = vst.msk [vmem:[%s1645] sm:$0x1] %vm1068, %v1454
          %1647 = vst.msk [vmem:[%s1645 + $0x2] sm:$0x1] %vm1068, %v1456
          %1648 = vst.msk [vmem:[%s1645 + $0x4] sm:$0x1] %vm1068, %v1458
          %1649 = vst.msk [vmem:[%s1645 + $0x6] sm:$0x1] %vm1068, %v1460
          %1650 = vst.msk [vmem:[%s1645 + $0x8] sm:$0x1] %vm1068, %v1462
          %1651 = vst.msk [vmem:[%s1645 + $0xa] sm:$0x1] %vm1068, %v1464
          %1652 = vst.msk [vmem:[%s1645 + $0xc] sm:$0x1] %vm1068, %v1466
          %1653 = vst.msk [vmem:[%s1645 + $0xe] sm:$0x1] %vm1068, %v1468
          %1654 = vst.msk [vmem:[%s1645 + $0x28] sm:$0x1] %vm1068, %v1470
          %1655 = vst.msk [vmem:[%s1645 + $0x2a] sm:$0x1] %vm1068, %v1472
          %1656 = vst.msk [vmem:[%s1645 + $0x2c] sm:$0x1] %vm1068, %v1474
          %1657 = vst.msk [vmem:[%s1645 + $0x2e] sm:$0x1] %vm1068, %v1476
          %1658 = vst.msk [vmem:[%s1645 + $0x30] sm:$0x1] %vm1068, %v1478
          %1659 = vst.msk [vmem:[%s1645 + $0x32] sm:$0x1] %vm1068, %v1480
          %1660 = vst.msk [vmem:[%s1645 + $0x34] sm:$0x1] %vm1068, %v1482
          %1661 = vst.msk [vmem:[%s1645 + $0x36] sm:$0x1] %vm1068, %v1484
          %1662 = vst.msk [vmem:[%s1645 + $0x50] sm:$0x1] %vm1068, %v1486
          %1663 = vst.msk [vmem:[%s1645 + $0x52] sm:$0x1] %vm1068, %v1488
          %1664 = vst.msk [vmem:[%s1645 + $0x54] sm:$0x1] %vm1068, %v1490
          %1665 = vst.msk [vmem:[%s1645 + $0x56] sm:$0x1] %vm1068, %v1492
          %1666 = vst.msk [vmem:[%s1645 + $0x58] sm:$0x1] %vm1068, %v1494
          %1667 = vst.msk [vmem:[%s1645 + $0x5a] sm:$0x1] %vm1068, %v1496
          %1668 = vst.msk [vmem:[%s1645 + $0x5c] sm:$0x1] %vm1068, %v1498
          %1669 = vst.msk [vmem:[%s1645 + $0x5e] sm:$0x1] %vm1068, %v1500
          %1670 = vst.msk [vmem:[%s1645 + $0x78] sm:$0x1] %vm1068, %v1502
          %1671 = vst.msk [vmem:[%s1645 + $0x7a] sm:$0x1] %vm1068, %v1504
          %1672 = vst.msk [vmem:[%s1645 + $0x7c] sm:$0x1] %vm1068, %v1506
          %1673 = vst.msk [vmem:[%s1645 + $0x7e] sm:$0x1] %vm1068, %v1508
          %1674 = vst.msk [vmem:[%s1645 + $0x80] sm:$0x1] %vm1068, %v1510
          %1675 = vst.msk [vmem:[%s1645 + $0x82] sm:$0x1] %vm1068, %v1512
          %1676 = vst.msk [vmem:[%s1645 + $0x84] sm:$0x1] %vm1068, %v1514
          %1677 = vst.msk [vmem:[%s1645 + $0x86] sm:$0x1] %vm1068, %v1516
          %1678 = vst.msk [vmem:[%s1645 + $0xa0] sm:$0x1] %vm1068, %v1518
          %1679 = vst.msk [vmem:[%s1645 + $0xa2] sm:$0x1] %vm1068, %v1520
          %1680 = vst.msk [vmem:[%s1645 + $0xa4] sm:$0x1] %vm1068, %v1522
          %1681 = vst.msk [vmem:[%s1645 + $0xa6] sm:$0x1] %vm1068, %v1524
          %1682 = vst.msk [vmem:[%s1645 + $0xa8] sm:$0x1] %vm1068, %v1526
          %1683 = vst.msk [vmem:[%s1645 + $0xaa] sm:$0x1] %vm1068, %v1528
          %1684 = vst.msk [vmem:[%s1645 + $0xac] sm:$0x1] %vm1068, %v1530
          %1685 = vst.msk [vmem:[%s1645 + $0xae] sm:$0x1] %vm1068, %v1532
          %1686 = vst.msk [vmem:[%s1645 + $0xc8] sm:$0x1] %vm1068, %v1534
          %1687 = vst.msk [vmem:[%s1645 + $0xca] sm:$0x1] %vm1068, %v1536
          %1688 = vst.msk [vmem:[%s1645 + $0xcc] sm:$0x1] %vm1068, %v1538
          %1689 = vst.msk [vmem:[%s1645 + $0xce] sm:$0x1] %vm1068, %v1540
          %1690 = vst.msk [vmem:[%s1645 + $0xd0] sm:$0x1] %vm1068, %v1542
          %1691 = vst.msk [vmem:[%s1645 + $0xd2] sm:$0x1] %vm1068, %v1544
          %1692 = vst.msk [vmem:[%s1645 + $0xd4] sm:$0x1] %vm1068, %v1546
          %1693 = vst.msk [vmem:[%s1645 + $0xd6] sm:$0x1] %vm1068, %v1548
          %1694 = vst.msk [vmem:[%s1645 + $0xf0] sm:$0x1] %vm1068, %v1550
          %1695 = vst.msk [vmem:[%s1645 + $0xf2] sm:$0x1] %vm1068, %v1552
          %1696 = vst.msk [vmem:[%s1645 + $0xf4] sm:$0x1] %vm1068, %v1554
          %1697 = vst.msk [vmem:[%s1645 + $0xf6] sm:$0x1] %vm1068, %v1556
          %1698 = vst.msk [vmem:[%s1645 + $0xf8] sm:$0x1] %vm1068, %v1558
          %1699 = vst.msk [vmem:[%s1645 + $0xfa] sm:$0x1] %vm1068, %v1560
          %1700 = vst.msk [vmem:[%s1645 + $0xfc] sm:$0x1] %vm1068, %v1562
          %1701 = vst.msk [vmem:[%s1645 + $0xfe] sm:$0x1] %vm1068, %v1564
          %1702 = vst.msk [vmem:[%s1645 + $0x118] sm:$0x1] %vm1068, %v1566
          %1703 = vst.msk [vmem:[%s1645 + $0x11a] sm:$0x1] %vm1068, %v1568
          %1704 = vst.msk [vmem:[%s1645 + $0x11c] sm:$0x1] %vm1068, %v1570
          %1705 = vst.msk [vmem:[%s1645 + $0x11e] sm:$0x1] %vm1068, %v1572
          %1706 = vst.msk [vmem:[%s1645 + $0x120] sm:$0x1] %vm1068, %v1574
          %1707 = vst.msk [vmem:[%s1645 + $0x122] sm:$0x1] %vm1068, %v1576
          %1708 = vst.msk [vmem:[%s1645 + $0x124] sm:$0x1] %vm1068, %v1578
          %1709 = vst.msk [vmem:[%s1645 + $0x126] sm:$0x1] %vm1068, %v1580
          %1710 = vrot.lane.b32.xlu0 %v1133, 122
          %v1711 = vpop.permute.xlu0 %1710
          %1712 = vrot.lane.b32.xlu0 %v1134, 122
          %v1713 = vpop.permute.xlu0 %1712
          %1714 = vrot.lane.b32.xlu0 %v1135, 122
          %v1715 = vpop.permute.xlu0 %1714
          %1716 = vrot.lane.b32.xlu0 %v1136, 122
          %v1717 = vpop.permute.xlu0 %1716
          %1718 = vrot.lane.b32.xlu0 %v1137, 122
          %v1719 = vpop.permute.xlu0 %1718
          %1720 = vrot.lane.b32.xlu0 %v1138, 122
          %v1721 = vpop.permute.xlu0 %1720
          %1722 = vrot.lane.b32.xlu0 %v1139, 122
          %v1723 = vpop.permute.xlu0 %1722
          %1724 = vrot.lane.b32.xlu0 %v1140, 122
          %v1725 = vpop.permute.xlu0 %1724
          %1726 = vrot.lane.b32.xlu0 %v1141, 122
          %v1727 = vpop.permute.xlu0 %1726
          %1728 = vrot.lane.b32.xlu0 %v1142, 122
          %v1729 = vpop.permute.xlu0 %1728
          %1730 = vrot.lane.b32.xlu0 %v1143, 122
          %v1731 = vpop.permute.xlu0 %1730
          %1732 = vrot.lane.b32.xlu0 %v1144, 122
          %v1733 = vpop.permute.xlu0 %1732
          %1734 = vrot.lane.b32.xlu0 %v1145, 122
          %v1735 = vpop.permute.xlu0 %1734
          %1736 = vrot.lane.b32.xlu0 %v1146, 122
          %v1737 = vpop.permute.xlu0 %1736
          %1738 = vrot.lane.b32.xlu0 %v1147, 122
          %v1739 = vpop.permute.xlu0 %1738
          %1740 = vrot.lane.b32.xlu0 %v1148, 122
          %v1741 = vpop.permute.xlu0 %1740
          %1742 = vrot.lane.b32.xlu0 %v1149, 122
          %v1743 = vpop.permute.xlu0 %1742
          %1744 = vrot.lane.b32.xlu0 %v1150, 122
          %v1745 = vpop.permute.xlu0 %1744
          %1746 = vrot.lane.b32.xlu0 %v1151, 122
          %v1747 = vpop.permute.xlu0 %1746
          %1748 = vrot.lane.b32.xlu0 %v1152, 122
          %v1749 = vpop.permute.xlu0 %1748
          %1750 = vrot.lane.b32.xlu0 %v1153, 122
          %v1751 = vpop.permute.xlu0 %1750
          %1752 = vrot.lane.b32.xlu0 %v1154, 122
          %v1753 = vpop.permute.xlu0 %1752
          %1754 = vrot.lane.b32.xlu0 %v1155, 122
          %v1755 = vpop.permute.xlu0 %1754
          %1756 = vrot.lane.b32.xlu0 %v1156, 122
          %v1757 = vpop.permute.xlu0 %1756
          %1758 = vrot.lane.b32.xlu0 %v1157, 122
          %v1759 = vpop.permute.xlu0 %1758
          %1760 = vrot.lane.b32.xlu0 %v1158, 122
          %v1761 = vpop.permute.xlu0 %1760
          %1762 = vrot.lane.b32.xlu0 %v1159, 122
          %v1763 = vpop.permute.xlu0 %1762
          %1764 = vrot.lane.b32.xlu0 %v1160, 122
          %v1765 = vpop.permute.xlu0 %1764
          %1766 = vrot.lane.b32.xlu0 %v1161, 122
          %v1767 = vpop.permute.xlu0 %1766
          %1768 = vrot.lane.b32.xlu0 %v1162, 122
          %v1769 = vpop.permute.xlu0 %1768
          %1770 = vrot.lane.b32.xlu0 %v1163, 122
          %v1771 = vpop.permute.xlu0 %1770
          %1772 = vrot.lane.b32.xlu0 %v1164, 122
          %v1773 = vpop.permute.xlu0 %1772
          %1774 = vrot.lane.b32.xlu0 %v1165, 122
          %v1775 = vpop.permute.xlu0 %1774
          %1776 = vrot.lane.b32.xlu0 %v1166, 122
          %v1777 = vpop.permute.xlu0 %1776
          %1778 = vrot.lane.b32.xlu0 %v1167, 122
          %v1779 = vpop.permute.xlu0 %1778
          %1780 = vrot.lane.b32.xlu0 %v1168, 122
          %v1781 = vpop.permute.xlu0 %1780
          %1782 = vrot.lane.b32.xlu0 %v1169, 122
          %v1783 = vpop.permute.xlu0 %1782
          %1784 = vrot.lane.b32.xlu0 %v1170, 122
          %v1785 = vpop.permute.xlu0 %1784
          %1786 = vrot.lane.b32.xlu0 %v1171, 122
          %v1787 = vpop.permute.xlu0 %1786
          %1788 = vrot.lane.b32.xlu0 %v1172, 122
          %v1789 = vpop.permute.xlu0 %1788
          %1790 = vrot.lane.b32.xlu0 %v1173, 122
          %v1791 = vpop.permute.xlu0 %1790
          %1792 = vrot.lane.b32.xlu0 %v1174, 122
          %v1793 = vpop.permute.xlu0 %1792
          %1794 = vrot.lane.b32.xlu0 %v1175, 122
          %v1795 = vpop.permute.xlu0 %1794
          %1796 = vrot.lane.b32.xlu0 %v1176, 122
          %v1797 = vpop.permute.xlu0 %1796
          %1798 = vrot.lane.b32.xlu0 %v1177, 122
          %v1799 = vpop.permute.xlu0 %1798
          %1800 = vrot.lane.b32.xlu0 %v1178, 122
          %v1801 = vpop.permute.xlu0 %1800
          %1802 = vrot.lane.b32.xlu0 %v1179, 122
          %v1803 = vpop.permute.xlu0 %1802
          %1804 = vrot.lane.b32.xlu0 %v1180, 122
          %v1805 = vpop.permute.xlu0 %1804
          %1806 = vrot.lane.b32.xlu0 %v1181, 122
          %v1807 = vpop.permute.xlu0 %1806
          %1808 = vrot.lane.b32.xlu0 %v1182, 122
          %v1809 = vpop.permute.xlu0 %1808
          %1810 = vrot.lane.b32.xlu0 %v1183, 122
          %v1811 = vpop.permute.xlu0 %1810
          %1812 = vrot.lane.b32.xlu0 %v1184, 122
          %v1813 = vpop.permute.xlu0 %1812
          %1814 = vrot.lane.b32.xlu0 %v1185, 122
          %v1815 = vpop.permute.xlu0 %1814
          %1816 = vrot.lane.b32.xlu0 %v1186, 122
          %v1817 = vpop.permute.xlu0 %1816
          %1818 = vrot.lane.b32.xlu0 %v1187, 122
          %v1819 = vpop.permute.xlu0 %1818
          %1820 = vrot.lane.b32.xlu0 %v1188, 122
          %v1821 = vpop.permute.xlu0 %1820
          %1822 = vrot.lane.b32.xlu0 %v1189, 122
          %v1823 = vpop.permute.xlu0 %1822
          %1824 = vrot.lane.b32.xlu0 %v1190, 122
          %v1825 = vpop.permute.xlu0 %1824
          %1826 = vrot.lane.b32.xlu0 %v1191, 122
          %v1827 = vpop.permute.xlu0 %1826
          %1828 = vrot.lane.b32.xlu0 %v1192, 122
          %v1829 = vpop.permute.xlu0 %1828
          %1830 = vrot.lane.b32.xlu0 %v1193, 122
          %v1831 = vpop.permute.xlu0 %1830
          %1832 = vrot.lane.b32.xlu0 %v1194, 122
          %v1833 = vpop.permute.xlu0 %1832
          %1834 = vrot.lane.b32.xlu0 %v1195, 122
          %v1835 = vpop.permute.xlu0 %1834
          %1836 = vrot.lane.b32.xlu0 %v1196, 122
          %v1837 = vpop.permute.xlu0 %1836
          %1902 = vst.msk [vmem:[%s1645 + $0x1] sm:$0x1] %vm1068, %v1711
          %1903 = vst.msk [vmem:[%s1645 + $0x3] sm:$0x1] %vm1068, %v1713
          %1904 = vst.msk [vmem:[%s1645 + $0x5] sm:$0x1] %vm1068, %v1715
          %1905 = vst.msk [vmem:[%s1645 + $0x7] sm:$0x1] %vm1068, %v1717
          %1906 = vst.msk [vmem:[%s1645 + $0x9] sm:$0x1] %vm1068, %v1719
          %1907 = vst.msk [vmem:[%s1645 + $0xb] sm:$0x1] %vm1068, %v1721
          %1908 = vst.msk [vmem:[%s1645 + $0xd] sm:$0x1] %vm1068, %v1723
          %1909 = vst.msk [vmem:[%s1645 + $0xf] sm:$0x1] %vm1068, %v1725
          %1910 = vst.msk [vmem:[%s1645 + $0x29] sm:$0x1] %vm1068, %v1727
          %1911 = vst.msk [vmem:[%s1645 + $0x2b] sm:$0x1] %vm1068, %v1729
          %1912 = vst.msk [vmem:[%s1645 + $0x2d] sm:$0x1] %vm1068, %v1731
          %1913 = vst.msk [vmem:[%s1645 + $0x2f] sm:$0x1] %vm1068, %v1733
          %1914 = vst.msk [vmem:[%s1645 + $0x31] sm:$0x1] %vm1068, %v1735
          %1915 = vst.msk [vmem:[%s1645 + $0x33] sm:$0x1] %vm1068, %v1737
          %1916 = vst.msk [vmem:[%s1645 + $0x35] sm:$0x1] %vm1068, %v1739
          %1917 = vst.msk [vmem:[%s1645 + $0x37] sm:$0x1] %vm1068, %v1741
          %1918 = vst.msk [vmem:[%s1645 + $0x51] sm:$0x1] %vm1068, %v1743
          %1919 = vst.msk [vmem:[%s1645 + $0x53] sm:$0x1] %vm1068, %v1745
          %1920 = vst.msk [vmem:[%s1645 + $0x55] sm:$0x1] %vm1068, %v1747
          %1921 = vst.msk [vmem:[%s1645 + $0x57] sm:$0x1] %vm1068, %v1749
          %1922 = vst.msk [vmem:[%s1645 + $0x59] sm:$0x1] %vm1068, %v1751
          %1923 = vst.msk [vmem:[%s1645 + $0x5b] sm:$0x1] %vm1068, %v1753
          %1924 = vst.msk [vmem:[%s1645 + $0x5d] sm:$0x1] %vm1068, %v1755
          %1925 = vst.msk [vmem:[%s1645 + $0x5f] sm:$0x1] %vm1068, %v1757
          %1926 = vst.msk [vmem:[%s1645 + $0x79] sm:$0x1] %vm1068, %v1759
          %1927 = vst.msk [vmem:[%s1645 + $0x7b] sm:$0x1] %vm1068, %v1761
          %1928 = vst.msk [vmem:[%s1645 + $0x7d] sm:$0x1] %vm1068, %v1763
          %1929 = vst.msk [vmem:[%s1645 + $0x7f] sm:$0x1] %vm1068, %v1765
          %1930 = vst.msk [vmem:[%s1645 + $0x81] sm:$0x1] %vm1068, %v1767
          %1931 = vst.msk [vmem:[%s1645 + $0x83] sm:$0x1] %vm1068, %v1769
          %1932 = vst.msk [vmem:[%s1645 + $0x85] sm:$0x1] %vm1068, %v1771
          %1933 = vst.msk [vmem:[%s1645 + $0x87] sm:$0x1] %vm1068, %v1773
          %1934 = vst.msk [vmem:[%s1645 + $0xa1] sm:$0x1] %vm1068, %v1775
          %1935 = vst.msk [vmem:[%s1645 + $0xa3] sm:$0x1] %vm1068, %v1777
          %1936 = vst.msk [vmem:[%s1645 + $0xa5] sm:$0x1] %vm1068, %v1779
          %1937 = vst.msk [vmem:[%s1645 + $0xa7] sm:$0x1] %vm1068, %v1781
          %1938 = vst.msk [vmem:[%s1645 + $0xa9] sm:$0x1] %vm1068, %v1783
          %1939 = vst.msk [vmem:[%s1645 + $0xab] sm:$0x1] %vm1068, %v1785
          %1940 = vst.msk [vmem:[%s1645 + $0xad] sm:$0x1] %vm1068, %v1787
          %1941 = vst.msk [vmem:[%s1645 + $0xaf] sm:$0x1] %vm1068, %v1789
          %1942 = vst.msk [vmem:[%s1645 + $0xc9] sm:$0x1] %vm1068, %v1791
          %1943 = vst.msk [vmem:[%s1645 + $0xcb] sm:$0x1] %vm1068, %v1793
          %1944 = vst.msk [vmem:[%s1645 + $0xcd] sm:$0x1] %vm1068, %v1795
          %1945 = vst.msk [vmem:[%s1645 + $0xcf] sm:$0x1] %vm1068, %v1797
          %1946 = vst.msk [vmem:[%s1645 + $0xd1] sm:$0x1] %vm1068, %v1799
          %1947 = vst.msk [vmem:[%s1645 + $0xd3] sm:$0x1] %vm1068, %v1801
          %1948 = vst.msk [vmem:[%s1645 + $0xd5] sm:$0x1] %vm1068, %v1803
          %1949 = vst.msk [vmem:[%s1645 + $0xd7] sm:$0x1] %vm1068, %v1805
          %1950 = vst.msk [vmem:[%s1645 + $0xf1] sm:$0x1] %vm1068, %v1807
          %1951 = vst.msk [vmem:[%s1645 + $0xf3] sm:$0x1] %vm1068, %v1809
          %1952 = vst.msk [vmem:[%s1645 + $0xf5] sm:$0x1] %vm1068, %v1811
          %1953 = vst.msk [vmem:[%s1645 + $0xf7] sm:$0x1] %vm1068, %v1813
          %1954 = vst.msk [vmem:[%s1645 + $0xf9] sm:$0x1] %vm1068, %v1815
          %1955 = vst.msk [vmem:[%s1645 + $0xfb] sm:$0x1] %vm1068, %v1817
          %1956 = vst.msk [vmem:[%s1645 + $0xfd] sm:$0x1] %vm1068, %v1819
          %1957 = vst.msk [vmem:[%s1645 + $0xff] sm:$0x1] %vm1068, %v1821
          %1958 = vst.msk [vmem:[%s1645 + $0x119] sm:$0x1] %vm1068, %v1823
          %1959 = vst.msk [vmem:[%s1645 + $0x11b] sm:$0x1] %vm1068, %v1825
          %1960 = vst.msk [vmem:[%s1645 + $0x11d] sm:$0x1] %vm1068, %v1827
          %1961 = vst.msk [vmem:[%s1645 + $0x11f] sm:$0x1] %vm1068, %v1829
          %1962 = vst.msk [vmem:[%s1645 + $0x121] sm:$0x1] %vm1068, %v1831
          %1963 = vst.msk [vmem:[%s1645 + $0x123] sm:$0x1] %vm1068, %v1833
          %1964 = vst.msk [vmem:[%s1645 + $0x125] sm:$0x1] %vm1068, %v1835
          %1965 = vst.msk [vmem:[%s1645 + $0x127] sm:$0x1] %vm1068, %v1837
        $region48: #{tpu_custom_call.1} parent=39 // pred_fallthru
          _
        %s1966 = smul.u32 %s27, 4
        %s1967 = smul.u32 %s1966, 40
        %s1968 = scalar_lea.vmem [#allocation3], %s1967
        %v1969 = vld [vmem:[%s1968 + $0x14] sm:$0x3]
        %v1970 = vld [vmem:[%s1968 + $0x16] sm:$0x3]
        %v1971 = vld [vmem:[%s1968 + $0x18] sm:$0x3]
        %v1972 = vld [vmem:[%s1968 + $0x1a] sm:$0x3]
        %v1973 = vld [vmem:[%s1968 + $0x1c] sm:$0x3]
        %v1974 = vld [vmem:[%s1968 + $0x1e] sm:$0x3]
        %v1975 = vld [vmem:[%s1968 + $0x20] sm:$0x3]
        %v1976 = vld [vmem:[%s1968 + $0x22] sm:$0x3]
        %v1977 = vld [vmem:[%s1968 + $0x24] sm:$0x3]
        %v1978 = vld [vmem:[%s1968 + $0x26] sm:$0x3]
        %v1979 = vld [vmem:[%s1968 + $0x28] sm:$0x3]
        %v1980 = vld [vmem:[%s1968 + $0x2a] sm:$0x3]
        %v1981 = vld [vmem:[%s1968 + $0x2c] sm:$0x3]
        %v1982 = vld [vmem:[%s1968 + $0x2e] sm:$0x3]
        %v1983 = vld [vmem:[%s1968 + $0x30] sm:$0x3]
        %v1984 = vld [vmem:[%s1968 + $0x32] sm:$0x3]
        %v1985 = vld [vmem:[%s1968 + $0x34] sm:$0x3]
        %v1986 = vld [vmem:[%s1968 + $0x36] sm:$0x3]
        %v1987 = vld [vmem:[%s1968 + $0x38] sm:$0x3]
        %v1988 = vld [vmem:[%s1968 + $0x3a] sm:$0x3]
        %v1989 = vld [vmem:[%s1968 + $0x3c] sm:$0x3]
        %v1990 = vld [vmem:[%s1968 + $0x3e] sm:$0x3]
        %v1991 = vld [vmem:[%s1968 + $0x40] sm:$0x3]
        %v1992 = vld [vmem:[%s1968 + $0x42] sm:$0x3]
        %v1993 = vld [vmem:[%s1968 + $0x44] sm:$0x3]
        %v1994 = vld [vmem:[%s1968 + $0x46] sm:$0x3]
        %v1995 = vld [vmem:[%s1968 + $0x48] sm:$0x3]
        %v1996 = vld [vmem:[%s1968 + $0x4a] sm:$0x3]
        %v1997 = vld [vmem:[%s1968 + $0x4c] sm:$0x3]
        %v1998 = vld [vmem:[%s1968 + $0x4e] sm:$0x3]
        %v1999 = vld [vmem:[%s1968 + $0x50] sm:$0x3]
        %v2000 = vld [vmem:[%s1968 + $0x52] sm:$0x3]
        %v2001 = vld [vmem:[%s1968 + $0x54] sm:$0x3]
        %v2002 = vld [vmem:[%s1968 + $0x56] sm:$0x3]
        %v2003 = vld [vmem:[%s1968 + $0x58] sm:$0x3]
        %v2004 = vld [vmem:[%s1968 + $0x5a] sm:$0x3]
        %v2005 = vld [vmem:[%s1968 + $0x5c] sm:$0x3]
        %v2006 = vld [vmem:[%s1968 + $0x5e] sm:$0x3]
        %v2007 = vld [vmem:[%s1968 + $0x60] sm:$0x3]
        %v2008 = vld [vmem:[%s1968 + $0x62] sm:$0x3]
        %v2009 = vld [vmem:[%s1968 + $0x64] sm:$0x3]
        %v2010 = vld [vmem:[%s1968 + $0x66] sm:$0x3]
        %v2011 = vld [vmem:[%s1968 + $0x68] sm:$0x3]
        %v2012 = vld [vmem:[%s1968 + $0x6a] sm:$0x3]
        %v2013 = vld [vmem:[%s1968 + $0x6c] sm:$0x3]
        %v2014 = vld [vmem:[%s1968 + $0x6e] sm:$0x3]
        %v2015 = vld [vmem:[%s1968 + $0x70] sm:$0x3]
        %v2016 = vld [vmem:[%s1968 + $0x72] sm:$0x3]
        %v2017 = vld [vmem:[%s1968 + $0x74] sm:$0x3]
        %v2018 = vld [vmem:[%s1968 + $0x76] sm:$0x3]
        %v2019 = vld [vmem:[%s1968 + $0x78] sm:$0x3]
        %v2020 = vld [vmem:[%s1968 + $0x7a] sm:$0x3]
        %v2021 = vld [vmem:[%s1968 + $0x7c] sm:$0x3]
        %v2022 = vld [vmem:[%s1968 + $0x7e] sm:$0x3]
        %v2023 = vld [vmem:[%s1968 + $0x80] sm:$0x3]
        %v2024 = vld [vmem:[%s1968 + $0x82] sm:$0x3]
        %v2025 = vld [vmem:[%s1968 + $0x84] sm:$0x3]
        %v2026 = vld [vmem:[%s1968 + $0x86] sm:$0x3]
        %v2027 = vld [vmem:[%s1968 + $0x88] sm:$0x3]
        %v2028 = vld [vmem:[%s1968 + $0x8a] sm:$0x3]
        %v2029 = vld [vmem:[%s1968 + $0x8c] sm:$0x3]
        %v2030 = vld [vmem:[%s1968 + $0x8e] sm:$0x3]
        %v2031 = vld [vmem:[%s1968 + $0x90] sm:$0x3]
        %v2032 = vld [vmem:[%s1968 + $0x92] sm:$0x3]
        %v2033 = vld [vmem:[%s1968 + $0x94] sm:$0x3]
        %v2034 = vld [vmem:[%s1968 + $0x96] sm:$0x3]
        %v2035 = vld [vmem:[%s1968 + $0x98] sm:$0x3]
        %v2036 = vld [vmem:[%s1968 + $0x9a] sm:$0x3]
        %v2037 = vld [vmem:[%s1968 + $0x9c] sm:$0x3]
        %v2038 = vld [vmem:[%s1968 + $0x9e] sm:$0x3]
        %v2039 = vld [vmem:[%s1968 + $0xa0] sm:$0x3]
        %v2040 = vld [vmem:[%s1968 + $0xa2] sm:$0x3]
        %v2041 = vld [vmem:[%s1968 + $0xa4] sm:$0x3]
        %v2042 = vld [vmem:[%s1968 + $0xa6] sm:$0x3]
        %v2043 = vld [vmem:[%s1968 + $0xa8] sm:$0x3]
        %v2044 = vld [vmem:[%s1968 + $0xaa] sm:$0x3]
        %v2045 = vld [vmem:[%s1968 + $0xac] sm:$0x3]
        %v2046 = vld [vmem:[%s1968 + $0xae] sm:$0x3]
        %v2047 = vld [vmem:[%s1968 + $0xb0] sm:$0x3]
        %v2048 = vld [vmem:[%s1968 + $0xb2] sm:$0x3]
        %v2049 = vld [vmem:[%s1968 + $0xb4] sm:$0x3]
        %v2050 = vld [vmem:[%s1968 + $0xb6] sm:$0x3]
        %v2051 = vld [vmem:[%s1968 + $0xb8] sm:$0x3]
        %v2052 = vld [vmem:[%s1968 + $0xba] sm:$0x3]
        %v2053 = vld [vmem:[%s1968 + $0xbc] sm:$0x3]
        %v2054 = vld [vmem:[%s1968 + $0xbe] sm:$0x3]
        %v2055 = vld [vmem:[%s1968 + $0xc0] sm:$0x3]
        %v2056 = vld [vmem:[%s1968 + $0xc2] sm:$0x3]
        %v2057 = vld [vmem:[%s1968 + $0xc4] sm:$0x3]
        %v2058 = vld [vmem:[%s1968 + $0xc6] sm:$0x3]
        %v2059 = vld [vmem:[%s1968 + $0xc8] sm:$0x3]
        %v2060 = vld [vmem:[%s1968 + $0xca] sm:$0x3]
        %v2061 = vld [vmem:[%s1968 + $0xcc] sm:$0x3]
        %v2062 = vld [vmem:[%s1968 + $0xce] sm:$0x3]
        %v2063 = vld [vmem:[%s1968 + $0xd0] sm:$0x3]
        %v2064 = vld [vmem:[%s1968 + $0xd2] sm:$0x3]
        %v2065 = vld [vmem:[%s1968 + $0xd4] sm:$0x3]
        %v2066 = vld [vmem:[%s1968 + $0xd6] sm:$0x3]
        %v2067 = vld [vmem:[%s1968 + $0xd8] sm:$0x3]
        %v2068 = vld [vmem:[%s1968 + $0xda] sm:$0x3]
        %vm2141 = vcmask 1040384
        %vm2142 = vcmask 1042434
        %vm2143 = vmor %vm2141, %vm2142
        %vm2144 = vcmask 1044484
        %vm2145 = vmor %vm2143, %vm2144
        %vm2146 = vcmask 1046534
        %vm2147 = vmor %vm2145, %vm2146
        %v2148 = vrot.slane %v1969, 7
        %v2149 = vrot.slane %v2148, 2
        %v2150 = vrot.slane %v1970, 7
        %v2151 = vsel %vm2147, %v2149, %v2150
        %v2152 = vrot.slane %v2150, 2
        %v2153 = vrot.slane %v1971, 7
        %v2154 = vsel %vm2147, %v2152, %v2153
        %v2155 = vrot.slane %v2153, 2
        %v2156 = vrot.slane %v1972, 7
        %v2157 = vsel %vm2147, %v2155, %v2156
        %v2158 = vrot.slane %v2156, 2
        %v2159 = vrot.slane %v1973, 7
        %v2160 = vsel %vm2147, %v2158, %v2159
        %v2161 = vrot.slane %v2159, 2
        %v2162 = vrot.slane %v1974, 7
        %v2163 = vsel %vm2147, %v2161, %v2162
        %v2164 = vrot.slane %v2162, 2
        %v2165 = vrot.slane %v1975, 7
        %v2166 = vsel %vm2147, %v2164, %v2165
        %v2167 = vrot.slane %v2165, 2
        %v2168 = vrot.slane %v1976, 7
        %v2169 = vsel %vm2147, %v2167, %v2168
        %v2170 = vrot.slane %v2168, 2
        %v2171 = vrot.slane %v1977, 7
        %v2172 = vsel %vm2147, %v2170, %v2171
        %v2173 = vrot.slane %v1979, 7
        %v2174 = vrot.slane %v2173, 2
        %v2175 = vrot.slane %v1980, 7
        %v2176 = vsel %vm2147, %v2174, %v2175
        %v2177 = vrot.slane %v2175, 2
        %v2178 = vrot.slane %v1981, 7
        %v2179 = vsel %vm2147, %v2177, %v2178
        %v2180 = vrot.slane %v2178, 2
        %v2181 = vrot.slane %v1982, 7
        %v2182 = vsel %vm2147, %v2180, %v2181
        %v2183 = vrot.slane %v2181, 2
        %v2184 = vrot.slane %v1983, 7
        %v2185 = vsel %vm2147, %v2183, %v2184
        %v2186 = vrot.slane %v2184, 2
        %v2187 = vrot.slane %v1984, 7
        %v2188 = vsel %vm2147, %v2186, %v2187
        %v2189 = vrot.slane %v2187, 2
        %v2190 = vrot.slane %v1985, 7
        %v2191 = vsel %vm2147, %v2189, %v2190
        %v2192 = vrot.slane %v2190, 2
        %v2193 = vrot.slane %v1986, 7
        %v2194 = vsel %vm2147, %v2192, %v2193
        %v2195 = vrot.slane %v2193, 2
        %v2196 = vrot.slane %v1987, 7
        %v2197 = vsel %vm2147, %v2195, %v2196
        %v2198 = vrot.slane %v1989, 7
        %v2199 = vrot.slane %v2198, 2
        %v2200 = vrot.slane %v1990, 7
        %v2201 = vsel %vm2147, %v2199, %v2200
        %v2202 = vrot.slane %v2200, 2
        %v2203 = vrot.slane %v1991, 7
        %v2204 = vsel %vm2147, %v2202, %v2203
        %v2205 = vrot.slane %v2203, 2
        %v2206 = vrot.slane %v1992, 7
        %v2207 = vsel %vm2147, %v2205, %v2206
        %v2208 = vrot.slane %v2206, 2
        %v2209 = vrot.slane %v1993, 7
        %v2210 = vsel %vm2147, %v2208, %v2209
        %v2211 = vrot.slane %v2209, 2
        %v2212 = vrot.slane %v1994, 7
        %v2213 = vsel %vm2147, %v2211, %v2212
        %v2214 = vrot.slane %v2212, 2
        %v2215 = vrot.slane %v1995, 7
        %v2216 = vsel %vm2147, %v2214, %v2215
        %v2217 = vrot.slane %v2215, 2
        %v2218 = vrot.slane %v1996, 7
        %v2219 = vsel %vm2147, %v2217, %v2218
        %v2220 = vrot.slane %v2218, 2
        %v2221 = vrot.slane %v1997, 7
        %v2222 = vsel %vm2147, %v2220, %v2221
        %v2223 = vrot.slane %v1999, 7
        %v2224 = vrot.slane %v2223, 2
        %v2225 = vrot.slane %v2000, 7
        %v2226 = vsel %vm2147, %v2224, %v2225
        %v2227 = vrot.slane %v2225, 2
        %v2228 = vrot.slane %v2001, 7
        %v2229 = vsel %vm2147, %v2227, %v2228
        %v2230 = vrot.slane %v2228, 2
        %v2231 = vrot.slane %v2002, 7
        %v2232 = vsel %vm2147, %v2230, %v2231
        %v2233 = vrot.slane %v2231, 2
        %v2234 = vrot.slane %v2003, 7
        %v2235 = vsel %vm2147, %v2233, %v2234
        %v2236 = vrot.slane %v2234, 2
        %v2237 = vrot.slane %v2004, 7
        %v2238 = vsel %vm2147, %v2236, %v2237
        %v2239 = vrot.slane %v2237, 2
        %v2240 = vrot.slane %v2005, 7
        %v2241 = vsel %vm2147, %v2239, %v2240
        %v2242 = vrot.slane %v2240, 2
        %v2243 = vrot.slane %v2006, 7
        %v2244 = vsel %vm2147, %v2242, %v2243
        %v2245 = vrot.slane %v2243, 2
        %v2246 = vrot.slane %v2007, 7
        %v2247 = vsel %vm2147, %v2245, %v2246
        %v2248 = vrot.slane %v2009, 7
        %v2249 = vrot.slane %v2248, 2
        %v2250 = vrot.slane %v2010, 7
        %v2251 = vsel %vm2147, %v2249, %v2250
        %v2252 = vrot.slane %v2250, 2
        %v2253 = vrot.slane %v2011, 7
        %v2254 = vsel %vm2147, %v2252, %v2253
        %v2255 = vrot.slane %v2253, 2
        %v2256 = vrot.slane %v2012, 7
        %v2257 = vsel %vm2147, %v2255, %v2256
        %v2258 = vrot.slane %v2256, 2
        %v2259 = vrot.slane %v2013, 7
        %v2260 = vsel %vm2147, %v2258, %v2259
        %v2261 = vrot.slane %v2259, 2
        %v2262 = vrot.slane %v2014, 7
        %v2263 = vsel %vm2147, %v2261, %v2262
        %v2264 = vrot.slane %v2262, 2
        %v2265 = vrot.slane %v2015, 7
        %v2266 = vsel %vm2147, %v2264, %v2265
        %v2267 = vrot.slane %v2265, 2
        %v2268 = vrot.slane %v2016, 7
        %v2269 = vsel %vm2147, %v2267, %v2268
        %v2270 = vrot.slane %v2268, 2
        %v2271 = vrot.slane %v2017, 7
        %v2272 = vsel %vm2147, %v2270, %v2271
        %v2273 = vrot.slane %v2019, 7
        %v2274 = vrot.slane %v2273, 2
        %v2275 = vrot.slane %v2020, 7
        %v2276 = vsel %vm2147, %v2274, %v2275
        %v2277 = vrot.slane %v2275, 2
        %v2278 = vrot.slane %v2021, 7
        %v2279 = vsel %vm2147, %v2277, %v2278
        %v2280 = vrot.slane %v2278, 2
        %v2281 = vrot.slane %v2022, 7
        %v2282 = vsel %vm2147, %v2280, %v2281
        %v2283 = vrot.slane %v2281, 2
        %v2284 = vrot.slane %v2023, 7
        %v2285 = vsel %vm2147, %v2283, %v2284
        %v2286 = vrot.slane %v2284, 2
        %v2287 = vrot.slane %v2024, 7
        %v2288 = vsel %vm2147, %v2286, %v2287
        %v2289 = vrot.slane %v2287, 2
        %v2290 = vrot.slane %v2025, 7
        %v2291 = vsel %vm2147, %v2289, %v2290
        %v2292 = vrot.slane %v2290, 2
        %v2293 = vrot.slane %v2026, 7
        %v2294 = vsel %vm2147, %v2292, %v2293
        %v2295 = vrot.slane %v2293, 2
        %v2296 = vrot.slane %v2027, 7
        %v2297 = vsel %vm2147, %v2295, %v2296
        %v2298 = vrot.slane %v2029, 7
        %v2299 = vrot.slane %v2298, 2
        %v2300 = vrot.slane %v2030, 7
        %v2301 = vsel %vm2147, %v2299, %v2300
        %v2302 = vrot.slane %v2300, 2
        %v2303 = vrot.slane %v2031, 7
        %v2304 = vsel %vm2147, %v2302, %v2303
        %v2305 = vrot.slane %v2303, 2
        %v2306 = vrot.slane %v2032, 7
        %v2307 = vsel %vm2147, %v2305, %v2306
        %v2308 = vrot.slane %v2306, 2
        %v2309 = vrot.slane %v2033, 7
        %v2310 = vsel %vm2147, %v2308, %v2309
        %v2311 = vrot.slane %v2309, 2
        %v2312 = vrot.slane %v2034, 7
        %v2313 = vsel %vm2147, %v2311, %v2312
        %v2314 = vrot.slane %v2312, 2
        %v2315 = vrot.slane %v2035, 7
        %v2316 = vsel %vm2147, %v2314, %v2315
        %v2317 = vrot.slane %v2315, 2
        %v2318 = vrot.slane %v2036, 7
        %v2319 = vsel %vm2147, %v2317, %v2318
        %v2320 = vrot.slane %v2318, 2
        %v2321 = vrot.slane %v2037, 7
        %v2322 = vsel %vm2147, %v2320, %v2321
        %v2323 = vrot.slane %v2039, 7
        %v2324 = vrot.slane %v2323, 2
        %v2325 = vrot.slane %v2040, 7
        %v2326 = vsel %vm2147, %v2324, %v2325
        %v2327 = vrot.slane %v2325, 2
        %v2328 = vrot.slane %v2041, 7
        %v2329 = vsel %vm2147, %v2327, %v2328
        %v2330 = vrot.slane %v2328, 2
        %v2331 = vrot.slane %v2042, 7
        %v2332 = vsel %vm2147, %v2330, %v2331
        %v2333 = vrot.slane %v2331, 2
        %v2334 = vrot.slane %v2043, 7
        %v2335 = vsel %vm2147, %v2333, %v2334
        %v2336 = vrot.slane %v2334, 2
        %v2337 = vrot.slane %v2044, 7
        %v2338 = vsel %vm2147, %v2336, %v2337
        %v2339 = vrot.slane %v2337, 2
        %v2340 = vrot.slane %v2045, 7
        %v2341 = vsel %vm2147, %v2339, %v2340
        %v2342 = vrot.slane %v2340, 2
        %v2343 = vrot.slane %v2046, 7
        %v2344 = vsel %vm2147, %v2342, %v2343
        %v2345 = vrot.slane %v2343, 2
        %v2346 = vrot.slane %v2047, 7
        %v2347 = vsel %vm2147, %v2345, %v2346
        %v2356 = vrot.slane %v2171, 2
        %v2357 = vrot.slane %v1978, 7
        %v2358 = vsel %vm2147, %v2356, %v2357
        %v2359 = vrot.slane %v2196, 2
        %v2360 = vrot.slane %v1988, 7
        %v2361 = vsel %vm2147, %v2359, %v2360
        %v2362 = vrot.slane %v2221, 2
        %v2363 = vrot.slane %v1998, 7
        %v2364 = vsel %vm2147, %v2362, %v2363
        %v2365 = vrot.slane %v2246, 2
        %v2366 = vrot.slane %v2008, 7
        %v2367 = vsel %vm2147, %v2365, %v2366
        %v2368 = vrot.slane %v2271, 2
        %v2369 = vrot.slane %v2018, 7
        %v2370 = vsel %vm2147, %v2368, %v2369
        %v2371 = vrot.slane %v2296, 2
        %v2372 = vrot.slane %v2028, 7
        %v2373 = vsel %vm2147, %v2371, %v2372
        %v2374 = vrot.slane %v2321, 2
        %v2375 = vrot.slane %v2038, 7
        %v2376 = vsel %vm2147, %v2374, %v2375
        %v2377 = vrot.slane %v2346, 2
        %v2378 = vrot.slane %v2048, 7
        %v2379 = vsel %vm2147, %v2377, %v2378
        %v2389 = vrot.slane %v2049, 7
        %v2390 = vrot.slane %v2389, 2
        %v2391 = vrot.slane %v2050, 7
        %v2392 = vsel %vm2147, %v2390, %v2391
        %v2393 = vrot.slane %v2391, 2
        %v2394 = vrot.slane %v2051, 7
        %v2395 = vsel %vm2147, %v2393, %v2394
        %v2396 = vrot.slane %v2394, 2
        %v2397 = vrot.slane %v2052, 7
        %v2398 = vsel %vm2147, %v2396, %v2397
        %v2399 = vrot.slane %v2397, 2
        %v2400 = vrot.slane %v2053, 7
        %v2401 = vsel %vm2147, %v2399, %v2400
        %v2402 = vrot.slane %v2400, 2
        %v2403 = vrot.slane %v2054, 7
        %v2404 = vsel %vm2147, %v2402, %v2403
        %v2405 = vrot.slane %v2403, 2
        %v2406 = vrot.slane %v2055, 7
        %v2407 = vsel %vm2147, %v2405, %v2406
        %v2408 = vrot.slane %v2406, 2
        %v2409 = vrot.slane %v2056, 7
        %v2410 = vsel %vm2147, %v2408, %v2409
        %v2411 = vrot.slane %v2409, 2
        %v2412 = vrot.slane %v2057, 7
        %v2413 = vsel %vm2147, %v2411, %v2412
        %v2415 = vrot.slane %v2412, 2
        %v2416 = vrot.slane %v2058, 7
        %v2417 = vsel %vm2147, %v2415, %v2416
        %v2427 = vrot.slane %v2059, 7
        %v2428 = vrot.slane %v2427, 2
        %v2429 = vrot.slane %v2060, 7
        %v2430 = vsel %vm2147, %v2428, %v2429
        %v2431 = vrot.slane %v2429, 2
        %v2432 = vrot.slane %v2061, 7
        %v2433 = vsel %vm2147, %v2431, %v2432
        %v2434 = vrot.slane %v2432, 2
        %v2435 = vrot.slane %v2062, 7
        %v2436 = vsel %vm2147, %v2434, %v2435
        %v2437 = vrot.slane %v2435, 2
        %v2438 = vrot.slane %v2063, 7
        %v2439 = vsel %vm2147, %v2437, %v2438
        %v2440 = vrot.slane %v2438, 2
        %v2441 = vrot.slane %v2064, 7
        %v2442 = vsel %vm2147, %v2440, %v2441
        %v2443 = vrot.slane %v2441, 2
        %v2444 = vrot.slane %v2065, 7
        %v2445 = vsel %vm2147, %v2443, %v2444
        %v2446 = vrot.slane %v2444, 2
        %v2447 = vrot.slane %v2066, 7
        %v2448 = vsel %vm2147, %v2446, %v2447
        %v2449 = vrot.slane %v2447, 2
        %v2450 = vrot.slane %v2067, 7
        %v2451 = vsel %vm2147, %v2449, %v2450
        %v2453 = vrot.slane %v2450, 2
        %v2454 = vrot.slane %v2068, 7
        %v2455 = vsel %vm2147, %v2453, %v2454
        %2456 = vst [vmem:[#allocation1] ss:$4 sm:$0xff] %v2151
        %s2457 = scalar_lea.vmem [#allocation1], 1
        %2458 = vst [vmem:[%s2457] ss:$4 sm:$0xff] %v2154
        %s2459 = scalar_lea.vmem [#allocation1], 2
        %2460 = vst [vmem:[%s2459] ss:$4 sm:$0xff] %v2157
        %s2461 = scalar_lea.vmem [#allocation1], 3
        %2462 = vst [vmem:[%s2461] ss:$4 sm:$0xff] %v2160
        %s2463 = scalar_lea.vmem [#allocation1], 32
        %2464 = vst [vmem:[%s2463] ss:$4 sm:$0xff] %v2163
        %s2465 = scalar_lea.vmem [#allocation1], 33
        %2466 = vst [vmem:[%s2465] ss:$4 sm:$0xff] %v2166
        %s2467 = scalar_lea.vmem [#allocation1], 34
        %2468 = vst [vmem:[%s2467] ss:$4 sm:$0xff] %v2169
        %s2469 = scalar_lea.vmem [#allocation1], 35
        %2470 = vst [vmem:[%s2469] ss:$4 sm:$0xff] %v2172
        %v2471 = vld.sshfl [vmem:[#allocation1] sm:$0xff pattern:$0x73625140]
        %v2472 = vld.sshfl [vmem:[#allocation1 + $0x20] sm:$0xff pattern:$0x73625140]
        %2473 = vst [vmem:[#allocation1] ss:$4 sm:$0xff] %v2176
        %2474 = vst [vmem:[%s2457] ss:$4 sm:$0xff] %v2179
        %2475 = vst [vmem:[%s2459] ss:$4 sm:$0xff] %v2182
        %2476 = vst [vmem:[%s2461] ss:$4 sm:$0xff] %v2185
        %2477 = vst [vmem:[%s2463] ss:$4 sm:$0xff] %v2188
        %2478 = vst [vmem:[%s2465] ss:$4 sm:$0xff] %v2191
        %2479 = vst [vmem:[%s2467] ss:$4 sm:$0xff] %v2194
        %2480 = vst [vmem:[%s2469] ss:$4 sm:$0xff] %v2197
        %v2481 = vld.sshfl [vmem:[#allocation1] sm:$0xff pattern:$0x73625140]
        %v2482 = vld.sshfl [vmem:[#allocation1 + $0x20] sm:$0xff pattern:$0x73625140]
        %2483 = vst [vmem:[#allocation1] ss:$4 sm:$0xff] %v2201
        %2484 = vst [vmem:[%s2457] ss:$4 sm:$0xff] %v2204
        %2485 = vst [vmem:[%s2459] ss:$4 sm:$0xff] %v2207
        %2486 = vst [vmem:[%s2461] ss:$4 sm:$0xff] %v2210
        %2487 = vst [vmem:[%s2463] ss:$4 sm:$0xff] %v2213
        %2488 = vst [vmem:[%s2465] ss:$4 sm:$0xff] %v2216
        %2489 = vst [vmem:[%s2467] ss:$4 sm:$0xff] %v2219
        %2490 = vst [vmem:[%s2469] ss:$4 sm:$0xff] %v2222
        %v2491 = vld.sshfl [vmem:[#allocation1] sm:$0xff pattern:$0x73625140]
        %v2492 = vld.sshfl [vmem:[#allocation1 + $0x20] sm:$0xff pattern:$0x73625140]
        %2493 = vst [vmem:[#allocation1] ss:$4 sm:$0xff] %v2226
        %2494 = vst [vmem:[%s2457] ss:$4 sm:$0xff] %v2229
        %2495 = vst [vmem:[%s2459] ss:$4 sm:$0xff] %v2232
        %2496 = vst [vmem:[%s2461] ss:$4 sm:$0xff] %v2235
        %2497 = vst [vmem:[%s2463] ss:$4 sm:$0xff] %v2238
        %2498 = vst [vmem:[%s2465] ss:$4 sm:$0xff] %v2241
        %2499 = vst [vmem:[%s2467] ss:$4 sm:$0xff] %v2244
        %2500 = vst [vmem:[%s2469] ss:$4 sm:$0xff] %v2247
        %v2501 = vld.sshfl [vmem:[#allocation1] sm:$0xff pattern:$0x73625140]
        %v2502 = vld.sshfl [vmem:[#allocation1 + $0x20] sm:$0xff pattern:$0x73625140]
        %2503 = vst [vmem:[#allocation1] ss:$4 sm:$0xff] %v2251
        %2504 = vst [vmem:[%s2457] ss:$4 sm:$0xff] %v2254
        %2505 = vst [vmem:[%s2459] ss:$4 sm:$0xff] %v2257
        %2506 = vst [vmem:[%s2461] ss:$4 sm:$0xff] %v2260
        %2507 = vst [vmem:[%s2463] ss:$4 sm:$0xff] %v2263
        %2508 = vst [vmem:[%s2465] ss:$4 sm:$0xff] %v2266
        %2509 = vst [vmem:[%s2467] ss:$4 sm:$0xff] %v2269
        %2510 = vst [vmem:[%s2469] ss:$4 sm:$0xff] %v2272
        %v2511 = vld.sshfl [vmem:[#allocation1] sm:$0xff pattern:$0x73625140]
        %v2512 = vld.sshfl [vmem:[#allocation1 + $0x20] sm:$0xff pattern:$0x73625140]
        %2513 = vst [vmem:[#allocation1] ss:$4 sm:$0xff] %v2276
        %2514 = vst [vmem:[%s2457] ss:$4 sm:$0xff] %v2279
        %2515 = vst [vmem:[%s2459] ss:$4 sm:$0xff] %v2282
        %2516 = vst [vmem:[%s2461] ss:$4 sm:$0xff] %v2285
        %2517 = vst [vmem:[%s2463] ss:$4 sm:$0xff] %v2288
        %2518 = vst [vmem:[%s2465] ss:$4 sm:$0xff] %v2291
        %2519 = vst [vmem:[%s2467] ss:$4 sm:$0xff] %v2294
        %2520 = vst [vmem:[%s2469] ss:$4 sm:$0xff] %v2297
        %v2521 = vld.sshfl [vmem:[#allocation1] sm:$0xff pattern:$0x73625140]
        %v2522 = vld.sshfl [vmem:[#allocation1 + $0x20] sm:$0xff pattern:$0x73625140]
        %2523 = vst [vmem:[#allocation1] ss:$4 sm:$0xff] %v2301
        %2524 = vst [vmem:[%s2457] ss:$4 sm:$0xff] %v2304
        %2525 = vst [vmem:[%s2459] ss:$4 sm:$0xff] %v2307
        %2526 = vst [vmem:[%s2461] ss:$4 sm:$0xff] %v2310
        %2527 = vst [vmem:[%s2463] ss:$4 sm:$0xff] %v2313
        %2528 = vst [vmem:[%s2465] ss:$4 sm:$0xff] %v2316
        %2529 = vst [vmem:[%s2467] ss:$4 sm:$0xff] %v2319
        %2530 = vst [vmem:[%s2469] ss:$4 sm:$0xff] %v2322
        %v2531 = vld.sshfl [vmem:[#allocation1] sm:$0xff pattern:$0x73625140]
        %v2532 = vld.sshfl [vmem:[#allocation1 + $0x20] sm:$0xff pattern:$0x73625140]
        %2533 = vst [vmem:[#allocation1] ss:$4 sm:$0xff] %v2326
        %2534 = vst [vmem:[%s2457] ss:$4 sm:$0xff] %v2329
        %2535 = vst [vmem:[%s2459] ss:$4 sm:$0xff] %v2332
        %2536 = vst [vmem:[%s2461] ss:$4 sm:$0xff] %v2335
        %2537 = vst [vmem:[%s2463] ss:$4 sm:$0xff] %v2338
        %2538 = vst [vmem:[%s2465] ss:$4 sm:$0xff] %v2341
        %2539 = vst [vmem:[%s2467] ss:$4 sm:$0xff] %v2344
        %2540 = vst [vmem:[%s2469] ss:$4 sm:$0xff] %v2347
        %v2541 = vld.sshfl [vmem:[#allocation1] sm:$0xff pattern:$0x73625140]
        %v2542 = vld.sshfl [vmem:[#allocation1 + $0x20] sm:$0xff pattern:$0x73625140]
        %2559 = vst [vmem:[#allocation1] ss:$4 sm:$0xff] %v1970
        %s2560 = scalar_lea.vmem [#allocation1], 1
        %2561 = vst [vmem:[%s2560] ss:$4 sm:$0xff] %v1971
        %s2562 = scalar_lea.vmem [#allocation1], 2
        %2563 = vst [vmem:[%s2562] ss:$4 sm:$0xff] %v1972
        %s2564 = scalar_lea.vmem [#allocation1], 3
        %2565 = vst [vmem:[%s2564] ss:$4 sm:$0xff] %v1973
        %s2566 = scalar_lea.vmem [#allocation1], 32
        %2567 = vst [vmem:[%s2566] ss:$4 sm:$0xff] %v1974
        %s2568 = scalar_lea.vmem [#allocation1], 33
        %2569 = vst [vmem:[%s2568] ss:$4 sm:$0xff] %v1975
        %s2570 = scalar_lea.vmem [#allocation1], 34
        %2571 = vst [vmem:[%s2570] ss:$4 sm:$0xff] %v1976
        %s2572 = scalar_lea.vmem [#allocation1], 35
        %2573 = vst [vmem:[%s2572] ss:$4 sm:$0xff] %v1977
        %v2574 = vld.sshfl [vmem:[#allocation1] sm:$0xff pattern:$0x73625140]
        %v2575 = vld.sshfl [vmem:[#allocation1 + $0x20] sm:$0xff pattern:$0x73625140]
        %2576 = vst [vmem:[#allocation1] ss:$4 sm:$0xff] %v1980
        %2577 = vst [vmem:[%s2560] ss:$4 sm:$0xff] %v1981
        %2578 = vst [vmem:[%s2562] ss:$4 sm:$0xff] %v1982
        %2579 = vst [vmem:[%s2564] ss:$4 sm:$0xff] %v1983
        %2580 = vst [vmem:[%s2566] ss:$4 sm:$0xff] %v1984
        %2581 = vst [vmem:[%s2568] ss:$4 sm:$0xff] %v1985
        %2582 = vst [vmem:[%s2570] ss:$4 sm:$0xff] %v1986
        %2583 = vst [vmem:[%s2572] ss:$4 sm:$0xff] %v1987
        %v2584 = vld.sshfl [vmem:[#allocation1] sm:$0xff pattern:$0x73625140]
        %v2585 = vld.sshfl [vmem:[#allocation1 + $0x20] sm:$0xff pattern:$0x73625140]
        %2586 = vst [vmem:[#allocation1] ss:$4 sm:$0xff] %v1990
        %2587 = vst [vmem:[%s2560] ss:$4 sm:$0xff] %v1991
        %2588 = vst [vmem:[%s2562] ss:$4 sm:$0xff] %v1992
        %2589 = vst [vmem:[%s2564] ss:$4 sm:$0xff] %v1993
        %2590 = vst [vmem:[%s2566] ss:$4 sm:$0xff] %v1994
        %2591 = vst [vmem:[%s2568] ss:$4 sm:$0xff] %v1995
        %2592 = vst [vmem:[%s2570] ss:$4 sm:$0xff] %v1996
        %2593 = vst [vmem:[%s2572] ss:$4 sm:$0xff] %v1997
        %v2594 = vld.sshfl [vmem:[#allocation1] sm:$0xff pattern:$0x73625140]
        %v2595 = vld.sshfl [vmem:[#allocation1 + $0x20] sm:$0xff pattern:$0x73625140]
        %2596 = vst [vmem:[#allocation1] ss:$4 sm:$0xff] %v2000
        %2597 = vst [vmem:[%s2560] ss:$4 sm:$0xff] %v2001
        %2598 = vst [vmem:[%s2562] ss:$4 sm:$0xff] %v2002
        %2599 = vst [vmem:[%s2564] ss:$4 sm:$0xff] %v2003
        %2600 = vst [vmem:[%s2566] ss:$4 sm:$0xff] %v2004
        %2601 = vst [vmem:[%s2568] ss:$4 sm:$0xff] %v2005
        %2602 = vst [vmem:[%s2570] ss:$4 sm:$0xff] %v2006
        %2603 = vst [vmem:[%s2572] ss:$4 sm:$0xff] %v2007
        %v2604 = vld.sshfl [vmem:[#allocation1] sm:$0xff pattern:$0x73625140]
        %v2605 = vld.sshfl [vmem:[#allocation1 + $0x20] sm:$0xff pattern:$0x73625140]
        %2606 = vst [vmem:[#allocation1] ss:$4 sm:$0xff] %v2010
        %2607 = vst [vmem:[%s2560] ss:$4 sm:$0xff] %v2011
        %2608 = vst [vmem:[%s2562] ss:$4 sm:$0xff] %v2012
        %2609 = vst [vmem:[%s2564] ss:$4 sm:$0xff] %v2013
        %2610 = vst [vmem:[%s2566] ss:$4 sm:$0xff] %v2014
        %2611 = vst [vmem:[%s2568] ss:$4 sm:$0xff] %v2015
        %2612 = vst [vmem:[%s2570] ss:$4 sm:$0xff] %v2016
        %2613 = vst [vmem:[%s2572] ss:$4 sm:$0xff] %v2017
        %v2614 = vld.sshfl [vmem:[#allocation1] sm:$0xff pattern:$0x73625140]
        %v2615 = vld.sshfl [vmem:[#allocation1 + $0x20] sm:$0xff pattern:$0x73625140]
        %2616 = vst [vmem:[#allocation1] ss:$4 sm:$0xff] %v2020
        %2617 = vst [vmem:[%s2560] ss:$4 sm:$0xff] %v2021
        %2618 = vst [vmem:[%s2562] ss:$4 sm:$0xff] %v2022
        %2619 = vst [vmem:[%s2564] ss:$4 sm:$0xff] %v2023
        %2620 = vst [vmem:[%s2566] ss:$4 sm:$0xff] %v2024
        %2621 = vst [vmem:[%s2568] ss:$4 sm:$0xff] %v2025
        %2622 = vst [vmem:[%s2570] ss:$4 sm:$0xff] %v2026
        %2623 = vst [vmem:[%s2572] ss:$4 sm:$0xff] %v2027
        %v2624 = vld.sshfl [vmem:[#allocation1] sm:$0xff pattern:$0x73625140]
        %v2625 = vld.sshfl [vmem:[#allocation1 + $0x20] sm:$0xff pattern:$0x73625140]
        %2626 = vst [vmem:[#allocation1] ss:$4 sm:$0xff] %v2030
        %2627 = vst [vmem:[%s2560] ss:$4 sm:$0xff] %v2031
        %2628 = vst [vmem:[%s2562] ss:$4 sm:$0xff] %v2032
        %2629 = vst [vmem:[%s2564] ss:$4 sm:$0xff] %v2033
        %2630 = vst [vmem:[%s2566] ss:$4 sm:$0xff] %v2034
        %2631 = vst [vmem:[%s2568] ss:$4 sm:$0xff] %v2035
        %2632 = vst [vmem:[%s2570] ss:$4 sm:$0xff] %v2036
        %2633 = vst [vmem:[%s2572] ss:$4 sm:$0xff] %v2037
        %v2634 = vld.sshfl [vmem:[#allocation1] sm:$0xff pattern:$0x73625140]
        %v2635 = vld.sshfl [vmem:[#allocation1 + $0x20] sm:$0xff pattern:$0x73625140]
        %2636 = vst [vmem:[#allocation1] ss:$4 sm:$0xff] %v2040
        %2637 = vst [vmem:[%s2560] ss:$4 sm:$0xff] %v2041
        %2638 = vst [vmem:[%s2562] ss:$4 sm:$0xff] %v2042
        %2639 = vst [vmem:[%s2564] ss:$4 sm:$0xff] %v2043
        %2640 = vst [vmem:[%s2566] ss:$4 sm:$0xff] %v2044
        %2641 = vst [vmem:[%s2568] ss:$4 sm:$0xff] %v2045
        %2642 = vst [vmem:[%s2570] ss:$4 sm:$0xff] %v2046
        %2643 = vst [vmem:[%s2572] ss:$4 sm:$0xff] %v2047
        %v2644 = vld.sshfl [vmem:[#allocation1] sm:$0xff pattern:$0x73625140]
        %v2645 = vld.sshfl [vmem:[#allocation1 + $0x20] sm:$0xff pattern:$0x73625140]
        %2646 = vrot.lane.b32.xlu0 %v2574, 2
        %v2647 = vpop.permute.xlu0 %2646
        %2648 = vrot.lane.b32.xlu0 %v2575, 2
        %v2649 = vpop.permute.xlu0 %2648
        %2650 = vrot.lane.b32.xlu0 %v2584, 2
        %v2651 = vpop.permute.xlu0 %2650
        %2652 = vrot.lane.b32.xlu0 %v2585, 2
        %v2653 = vpop.permute.xlu0 %2652
        %2654 = vrot.lane.b32.xlu0 %v2594, 2
        %v2655 = vpop.permute.xlu0 %2654
        %2656 = vrot.lane.b32.xlu0 %v2595, 2
        %v2657 = vpop.permute.xlu0 %2656
        %2658 = vrot.lane.b32.xlu0 %v2604, 2
        %v2659 = vpop.permute.xlu0 %2658
        %2660 = vrot.lane.b32.xlu0 %v2605, 2
        %v2661 = vpop.permute.xlu0 %2660
        %2662 = vrot.lane.b32.xlu0 %v2614, 2
        %v2663 = vpop.permute.xlu0 %2662
        %2664 = vrot.lane.b32.xlu0 %v2615, 2
        %v2665 = vpop.permute.xlu0 %2664
        %2666 = vrot.lane.b32.xlu0 %v2624, 2
        %v2667 = vpop.permute.xlu0 %2666
        %2668 = vrot.lane.b32.xlu0 %v2625, 2
        %v2669 = vpop.permute.xlu0 %2668
        %2670 = vrot.lane.b32.xlu0 %v2634, 2
        %v2671 = vpop.permute.xlu0 %2670
        %2672 = vrot.lane.b32.xlu0 %v2635, 2
        %v2673 = vpop.permute.xlu0 %2672
        %2674 = vrot.lane.b32.xlu0 %v2644, 2
        %v2675 = vpop.permute.xlu0 %2674
        %2676 = vrot.lane.b32.xlu0 %v2645, 2
        %v2677 = vpop.permute.xlu0 %2676
        %2694 = vst [vmem:[#allocation1] ss:$4 sm:$0xff] %v2154
        %s2695 = scalar_lea.vmem [#allocation1], 1
        %2696 = vst [vmem:[%s2695] ss:$4 sm:$0xff] %v2157
        %s2697 = scalar_lea.vmem [#allocation1], 2
        %2698 = vst [vmem:[%s2697] ss:$4 sm:$0xff] %v2160
        %s2699 = scalar_lea.vmem [#allocation1], 3
        %2700 = vst [vmem:[%s2699] ss:$4 sm:$0xff] %v2163
        %s2701 = scalar_lea.vmem [#allocation1], 32
        %2702 = vst [vmem:[%s2701] ss:$4 sm:$0xff] %v2166
        %s2703 = scalar_lea.vmem [#allocation1], 33
        %2704 = vst [vmem:[%s2703] ss:$4 sm:$0xff] %v2169
        %s2705 = scalar_lea.vmem [#allocation1], 34
        %2706 = vst [vmem:[%s2705] ss:$4 sm:$0xff] %v2172
        %s2707 = scalar_lea.vmem [#allocation1], 35
        %2708 = vst [vmem:[%s2707] ss:$4 sm:$0xff] %v2358
        %v2709 = vld.sshfl [vmem:[#allocation1] sm:$0xff pattern:$0x73625140]
        %v2710 = vld.sshfl [vmem:[#allocation1 + $0x20] sm:$0xff pattern:$0x73625140]
        %2711 = vst [vmem:[#allocation1] ss:$4 sm:$0xff] %v2179
        %2712 = vst [vmem:[%s2695] ss:$4 sm:$0xff] %v2182
        %2713 = vst [vmem:[%s2697] ss:$4 sm:$0xff] %v2185
        %2714 = vst [vmem:[%s2699] ss:$4 sm:$0xff] %v2188
        %2715 = vst [vmem:[%s2701] ss:$4 sm:$0xff] %v2191
        %2716 = vst [vmem:[%s2703] ss:$4 sm:$0xff] %v2194
        %2717 = vst [vmem:[%s2705] ss:$4 sm:$0xff] %v2197
        %2718 = vst [vmem:[%s2707] ss:$4 sm:$0xff] %v2361
        %v2719 = vld.sshfl [vmem:[#allocation1] sm:$0xff pattern:$0x73625140]
        %v2720 = vld.sshfl [vmem:[#allocation1 + $0x20] sm:$0xff pattern:$0x73625140]
        %2721 = vst [vmem:[#allocation1] ss:$4 sm:$0xff] %v2204
        %2722 = vst [vmem:[%s2695] ss:$4 sm:$0xff] %v2207
        %2723 = vst [vmem:[%s2697] ss:$4 sm:$0xff] %v2210
        %2724 = vst [vmem:[%s2699] ss:$4 sm:$0xff] %v2213
        %2725 = vst [vmem:[%s2701] ss:$4 sm:$0xff] %v2216
        %2726 = vst [vmem:[%s2703] ss:$4 sm:$0xff] %v2219
        %2727 = vst [vmem:[%s2705] ss:$4 sm:$0xff] %v2222
        %2728 = vst [vmem:[%s2707] ss:$4 sm:$0xff] %v2364
        %v2729 = vld.sshfl [vmem:[#allocation1] sm:$0xff pattern:$0x73625140]
        %v2730 = vld.sshfl [vmem:[#allocation1 + $0x20] sm:$0xff pattern:$0x73625140]
        %2731 = vst [vmem:[#allocation1] ss:$4 sm:$0xff] %v2229
        %2732 = vst [vmem:[%s2695] ss:$4 sm:$0xff] %v2232
        %2733 = vst [vmem:[%s2697] ss:$4 sm:$0xff] %v2235
        %2734 = vst [vmem:[%s2699] ss:$4 sm:$0xff] %v2238
        %2735 = vst [vmem:[%s2701] ss:$4 sm:$0xff] %v2241
        %2736 = vst [vmem:[%s2703] ss:$4 sm:$0xff] %v2244
        %2737 = vst [vmem:[%s2705] ss:$4 sm:$0xff] %v2247
        %2738 = vst [vmem:[%s2707] ss:$4 sm:$0xff] %v2367
        %v2739 = vld.sshfl [vmem:[#allocation1] sm:$0xff pattern:$0x73625140]
        %v2740 = vld.sshfl [vmem:[#allocation1 + $0x20] sm:$0xff pattern:$0x73625140]
        %2741 = vst [vmem:[#allocation1] ss:$4 sm:$0xff] %v2254
        %2742 = vst [vmem:[%s2695] ss:$4 sm:$0xff] %v2257
        %2743 = vst [vmem:[%s2697] ss:$4 sm:$0xff] %v2260
        %2744 = vst [vmem:[%s2699] ss:$4 sm:$0xff] %v2263
        %2745 = vst [vmem:[%s2701] ss:$4 sm:$0xff] %v2266
        %2746 = vst [vmem:[%s2703] ss:$4 sm:$0xff] %v2269
        %2747 = vst [vmem:[%s2705] ss:$4 sm:$0xff] %v2272
        %2748 = vst [vmem:[%s2707] ss:$4 sm:$0xff] %v2370
        %v2749 = vld.sshfl [vmem:[#allocation1] sm:$0xff pattern:$0x73625140]
        %v2750 = vld.sshfl [vmem:[#allocation1 + $0x20] sm:$0xff pattern:$0x73625140]
        %2751 = vst [vmem:[#allocation1] ss:$4 sm:$0xff] %v2279
        %2752 = vst [vmem:[%s2695] ss:$4 sm:$0xff] %v2282
        %2753 = vst [vmem:[%s2697] ss:$4 sm:$0xff] %v2285
        %2754 = vst [vmem:[%s2699] ss:$4 sm:$0xff] %v2288
        %2755 = vst [vmem:[%s2701] ss:$4 sm:$0xff] %v2291
        %2756 = vst [vmem:[%s2703] ss:$4 sm:$0xff] %v2294
        %2757 = vst [vmem:[%s2705] ss:$4 sm:$0xff] %v2297
        %2758 = vst [vmem:[%s2707] ss:$4 sm:$0xff] %v2373
        %v2759 = vld.sshfl [vmem:[#allocation1] sm:$0xff pattern:$0x73625140]
        %v2760 = vld.sshfl [vmem:[#allocation1 + $0x20] sm:$0xff pattern:$0x73625140]
        %2761 = vst [vmem:[#allocation1] ss:$4 sm:$0xff] %v2304
        %2762 = vst [vmem:[%s2695] ss:$4 sm:$0xff] %v2307
        %2763 = vst [vmem:[%s2697] ss:$4 sm:$0xff] %v2310
        %2764 = vst [vmem:[%s2699] ss:$4 sm:$0xff] %v2313
        %2765 = vst [vmem:[%s2701] ss:$4 sm:$0xff] %v2316
        %2766 = vst [vmem:[%s2703] ss:$4 sm:$0xff] %v2319
        %2767 = vst [vmem:[%s2705] ss:$4 sm:$0xff] %v2322
        %2768 = vst [vmem:[%s2707] ss:$4 sm:$0xff] %v2376
        %v2769 = vld.sshfl [vmem:[#allocation1] sm:$0xff pattern:$0x73625140]
        %v2770 = vld.sshfl [vmem:[#allocation1 + $0x20] sm:$0xff pattern:$0x73625140]
        %2771 = vst [vmem:[#allocation1] ss:$4 sm:$0xff] %v2329
        %2772 = vst [vmem:[%s2695] ss:$4 sm:$0xff] %v2332
        %2773 = vst [vmem:[%s2697] ss:$4 sm:$0xff] %v2335
        %2774 = vst [vmem:[%s2699] ss:$4 sm:$0xff] %v2338
        %2775 = vst [vmem:[%s2701] ss:$4 sm:$0xff] %v2341
        %2776 = vst [vmem:[%s2703] ss:$4 sm:$0xff] %v2344
        %2777 = vst [vmem:[%s2705] ss:$4 sm:$0xff] %v2347
        %2778 = vst [vmem:[%s2707] ss:$4 sm:$0xff] %v2379
        %v2779 = vld.sshfl [vmem:[#allocation1] sm:$0xff pattern:$0x73625140]
        %v2780 = vld.sshfl [vmem:[#allocation1 + $0x20] sm:$0xff pattern:$0x73625140]
        %2781 = vrot.lane.b32.xlu0 %v2709, 4
        %v2782 = vpop.permute.xlu0 %2781
        %2783 = vrot.lane.b32.xlu0 %v2710, 4
        %v2784 = vpop.permute.xlu0 %2783
        %2785 = vrot.lane.b32.xlu0 %v2719, 4
        %v2786 = vpop.permute.xlu0 %2785
        %2787 = vrot.lane.b32.xlu0 %v2720, 4
        %v2788 = vpop.permute.xlu0 %2787
        %2789 = vrot.lane.b32.xlu0 %v2729, 4
        %v2790 = vpop.permute.xlu0 %2789
        %2791 = vrot.lane.b32.xlu0 %v2730, 4
        %v2792 = vpop.permute.xlu0 %2791
        %2793 = vrot.lane.b32.xlu0 %v2739, 4
        %v2794 = vpop.permute.xlu0 %2793
        %2795 = vrot.lane.b32.xlu0 %v2740, 4
        %v2796 = vpop.permute.xlu0 %2795
        %2797 = vrot.lane.b32.xlu0 %v2749, 4
        %v2798 = vpop.permute.xlu0 %2797
        %2799 = vrot.lane.b32.xlu0 %v2750, 4
        %v2800 = vpop.permute.xlu0 %2799
        %2801 = vrot.lane.b32.xlu0 %v2759, 4
        %v2802 = vpop.permute.xlu0 %2801
        %2803 = vrot.lane.b32.xlu0 %v2760, 4
        %v2804 = vpop.permute.xlu0 %2803
        %2805 = vrot.lane.b32.xlu0 %v2769, 4
        %v2806 = vpop.permute.xlu0 %2805
        %2807 = vrot.lane.b32.xlu0 %v2770, 4
        %v2808 = vpop.permute.xlu0 %2807
        %2809 = vrot.lane.b32.xlu0 %v2779, 4
        %v2810 = vpop.permute.xlu0 %2809
        %2811 = vrot.lane.b32.xlu0 %v2780, 4
        %v2812 = vpop.permute.xlu0 %2811
        %2829 = vst [vmem:[#allocation1] ss:$4 sm:$0xff] %v2176
        %s2830 = scalar_lea.vmem [#allocation1], 1
        %2831 = vst [vmem:[%s2830] ss:$4 sm:$0xff] %v2179
        %s2832 = scalar_lea.vmem [#allocation1], 2
        %2833 = vst [vmem:[%s2832] ss:$4 sm:$0xff] %v2182
        %s2834 = scalar_lea.vmem [#allocation1], 3
        %2835 = vst [vmem:[%s2834] ss:$4 sm:$0xff] %v2185
        %s2836 = scalar_lea.vmem [#allocation1], 32
        %2837 = vst [vmem:[%s2836] ss:$4 sm:$0xff] %v2188
        %s2838 = scalar_lea.vmem [#allocation1], 33
        %2839 = vst [vmem:[%s2838] ss:$4 sm:$0xff] %v2191
        %s2840 = scalar_lea.vmem [#allocation1], 34
        %2841 = vst [vmem:[%s2840] ss:$4 sm:$0xff] %v2194
        %s2842 = scalar_lea.vmem [#allocation1], 35
        %2843 = vst [vmem:[%s2842] ss:$4 sm:$0xff] %v2197
        %v2844 = vld.sshfl [vmem:[#allocation1] sm:$0xff pattern:$0x73625140]
        %v2845 = vld.sshfl [vmem:[#allocation1 + $0x20] sm:$0xff pattern:$0x73625140]
        %2846 = vst [vmem:[#allocation1] ss:$4 sm:$0xff] %v2201
        %2847 = vst [vmem:[%s2830] ss:$4 sm:$0xff] %v2204
        %2848 = vst [vmem:[%s2832] ss:$4 sm:$0xff] %v2207
        %2849 = vst [vmem:[%s2834] ss:$4 sm:$0xff] %v2210
        %2850 = vst [vmem:[%s2836] ss:$4 sm:$0xff] %v2213
        %2851 = vst [vmem:[%s2838] ss:$4 sm:$0xff] %v2216
        %2852 = vst [vmem:[%s2840] ss:$4 sm:$0xff] %v2219
        %2853 = vst [vmem:[%s2842] ss:$4 sm:$0xff] %v2222
        %v2854 = vld.sshfl [vmem:[#allocation1] sm:$0xff pattern:$0x73625140]
        %v2855 = vld.sshfl [vmem:[#allocation1 + $0x20] sm:$0xff pattern:$0x73625140]
        %2856 = vst [vmem:[#allocation1] ss:$4 sm:$0xff] %v2226
        %2857 = vst [vmem:[%s2830] ss:$4 sm:$0xff] %v2229
        %2858 = vst [vmem:[%s2832] ss:$4 sm:$0xff] %v2232
        %2859 = vst [vmem:[%s2834] ss:$4 sm:$0xff] %v2235
        %2860 = vst [vmem:[%s2836] ss:$4 sm:$0xff] %v2238
        %2861 = vst [vmem:[%s2838] ss:$4 sm:$0xff] %v2241
        %2862 = vst [vmem:[%s2840] ss:$4 sm:$0xff] %v2244
        %2863 = vst [vmem:[%s2842] ss:$4 sm:$0xff] %v2247
        %v2864 = vld.sshfl [vmem:[#allocation1] sm:$0xff pattern:$0x73625140]
        %v2865 = vld.sshfl [vmem:[#allocation1 + $0x20] sm:$0xff pattern:$0x73625140]
        %2866 = vst [vmem:[#allocation1] ss:$4 sm:$0xff] %v2251
        %2867 = vst [vmem:[%s2830] ss:$4 sm:$0xff] %v2254
        %2868 = vst [vmem:[%s2832] ss:$4 sm:$0xff] %v2257
        %2869 = vst [vmem:[%s2834] ss:$4 sm:$0xff] %v2260
        %2870 = vst [vmem:[%s2836] ss:$4 sm:$0xff] %v2263
        %2871 = vst [vmem:[%s2838] ss:$4 sm:$0xff] %v2266
        %2872 = vst [vmem:[%s2840] ss:$4 sm:$0xff] %v2269
        %2873 = vst [vmem:[%s2842] ss:$4 sm:$0xff] %v2272
        %v2874 = vld.sshfl [vmem:[#allocation1] sm:$0xff pattern:$0x73625140]
        %v2875 = vld.sshfl [vmem:[#allocation1 + $0x20] sm:$0xff pattern:$0x73625140]
        %2876 = vst [vmem:[#allocation1] ss:$4 sm:$0xff] %v2276
        %2877 = vst [vmem:[%s2830] ss:$4 sm:$0xff] %v2279
        %2878 = vst [vmem:[%s2832] ss:$4 sm:$0xff] %v2282
        %2879 = vst [vmem:[%s2834] ss:$4 sm:$0xff] %v2285
        %2880 = vst [vmem:[%s2836] ss:$4 sm:$0xff] %v2288
        %2881 = vst [vmem:[%s2838] ss:$4 sm:$0xff] %v2291
        %2882 = vst [vmem:[%s2840] ss:$4 sm:$0xff] %v2294
        %2883 = vst [vmem:[%s2842] ss:$4 sm:$0xff] %v2297
        %v2884 = vld.sshfl [vmem:[#allocation1] sm:$0xff pattern:$0x73625140]
        %v2885 = vld.sshfl [vmem:[#allocation1 + $0x20] sm:$0xff pattern:$0x73625140]
        %2886 = vst [vmem:[#allocation1] ss:$4 sm:$0xff] %v2301
        %2887 = vst [vmem:[%s2830] ss:$4 sm:$0xff] %v2304
        %2888 = vst [vmem:[%s2832] ss:$4 sm:$0xff] %v2307
        %2889 = vst [vmem:[%s2834] ss:$4 sm:$0xff] %v2310
        %2890 = vst [vmem:[%s2836] ss:$4 sm:$0xff] %v2313
        %2891 = vst [vmem:[%s2838] ss:$4 sm:$0xff] %v2316
        %2892 = vst [vmem:[%s2840] ss:$4 sm:$0xff] %v2319
        %2893 = vst [vmem:[%s2842] ss:$4 sm:$0xff] %v2322
        %v2894 = vld.sshfl [vmem:[#allocation1] sm:$0xff pattern:$0x73625140]
        %v2895 = vld.sshfl [vmem:[#allocation1 + $0x20] sm:$0xff pattern:$0x73625140]
        %2896 = vst [vmem:[#allocation1] ss:$4 sm:$0xff] %v2326
        %2897 = vst [vmem:[%s2830] ss:$4 sm:$0xff] %v2329
        %2898 = vst [vmem:[%s2832] ss:$4 sm:$0xff] %v2332
        %2899 = vst [vmem:[%s2834] ss:$4 sm:$0xff] %v2335
        %2900 = vst [vmem:[%s2836] ss:$4 sm:$0xff] %v2338
        %2901 = vst [vmem:[%s2838] ss:$4 sm:$0xff] %v2341
        %2902 = vst [vmem:[%s2840] ss:$4 sm:$0xff] %v2344
        %2903 = vst [vmem:[%s2842] ss:$4 sm:$0xff] %v2347
        %v2904 = vld.sshfl [vmem:[#allocation1] sm:$0xff pattern:$0x73625140]
        %v2905 = vld.sshfl [vmem:[#allocation1 + $0x20] sm:$0xff pattern:$0x73625140]
        %2906 = vst [vmem:[#allocation1] ss:$4 sm:$0xff] %v2392
        %2907 = vst [vmem:[%s2830] ss:$4 sm:$0xff] %v2395
        %2908 = vst [vmem:[%s2832] ss:$4 sm:$0xff] %v2398
        %2909 = vst [vmem:[%s2834] ss:$4 sm:$0xff] %v2401
        %2910 = vst [vmem:[%s2836] ss:$4 sm:$0xff] %v2404
        %2911 = vst [vmem:[%s2838] ss:$4 sm:$0xff] %v2407
        %2912 = vst [vmem:[%s2840] ss:$4 sm:$0xff] %v2410
        %2913 = vst [vmem:[%s2842] ss:$4 sm:$0xff] %v2413
        %v2914 = vld.sshfl [vmem:[#allocation1] sm:$0xff pattern:$0x73625140]
        %v2915 = vld.sshfl [vmem:[#allocation1 + $0x20] sm:$0xff pattern:$0x73625140]
        %2916 = vrot.lane.b32.xlu0 %v2844, 6
        %v2917 = vpop.permute.xlu0 %2916
        %2918 = vrot.lane.b32.xlu0 %v2845, 6
        %v2919 = vpop.permute.xlu0 %2918
        %2920 = vrot.lane.b32.xlu0 %v2854, 6
        %v2921 = vpop.permute.xlu0 %2920
        %2922 = vrot.lane.b32.xlu0 %v2855, 6
        %v2923 = vpop.permute.xlu0 %2922
        %2924 = vrot.lane.b32.xlu0 %v2864, 6
        %v2925 = vpop.permute.xlu0 %2924
        %2926 = vrot.lane.b32.xlu0 %v2865, 6
        %v2927 = vpop.permute.xlu0 %2926
        %2928 = vrot.lane.b32.xlu0 %v2874, 6
        %v2929 = vpop.permute.xlu0 %2928
        %2930 = vrot.lane.b32.xlu0 %v2875, 6
        %v2931 = vpop.permute.xlu0 %2930
        %2932 = vrot.lane.b32.xlu0 %v2884, 6
        %v2933 = vpop.permute.xlu0 %2932
        %2934 = vrot.lane.b32.xlu0 %v2885, 6
        %v2935 = vpop.permute.xlu0 %2934
        %2936 = vrot.lane.b32.xlu0 %v2894, 6
        %v2937 = vpop.permute.xlu0 %2936
        %2938 = vrot.lane.b32.xlu0 %v2895, 6
        %v2939 = vpop.permute.xlu0 %2938
        %2940 = vrot.lane.b32.xlu0 %v2904, 6
        %v2941 = vpop.permute.xlu0 %2940
        %2942 = vrot.lane.b32.xlu0 %v2905, 6
        %v2943 = vpop.permute.xlu0 %2942
        %2944 = vrot.lane.b32.xlu0 %v2914, 6
        %v2945 = vpop.permute.xlu0 %2944
        %2946 = vrot.lane.b32.xlu0 %v2915, 6
        %v2947 = vpop.permute.xlu0 %2946
        %2964 = vst [vmem:[#allocation1] ss:$4 sm:$0xff] %v1980
        %s2965 = scalar_lea.vmem [#allocation1], 1
        %2966 = vst [vmem:[%s2965] ss:$4 sm:$0xff] %v1981
        %s2967 = scalar_lea.vmem [#allocation1], 2
        %2968 = vst [vmem:[%s2967] ss:$4 sm:$0xff] %v1982
        %s2969 = scalar_lea.vmem [#allocation1], 3
        %2970 = vst [vmem:[%s2969] ss:$4 sm:$0xff] %v1983
        %s2971 = scalar_lea.vmem [#allocation1], 32
        %2972 = vst [vmem:[%s2971] ss:$4 sm:$0xff] %v1984
        %s2973 = scalar_lea.vmem [#allocation1], 33
        %2974 = vst [vmem:[%s2973] ss:$4 sm:$0xff] %v1985
        %s2975 = scalar_lea.vmem [#allocation1], 34
        %2976 = vst [vmem:[%s2975] ss:$4 sm:$0xff] %v1986
        %s2977 = scalar_lea.vmem [#allocation1], 35
        %2978 = vst [vmem:[%s2977] ss:$4 sm:$0xff] %v1987
        %v2979 = vld.sshfl [vmem:[#allocation1] sm:$0xff pattern:$0x73625140]
        %v2980 = vld.sshfl [vmem:[#allocation1 + $0x20] sm:$0xff pattern:$0x73625140]
        %2981 = vst [vmem:[#allocation1] ss:$4 sm:$0xff] %v1990
        %2982 = vst [vmem:[%s2965] ss:$4 sm:$0xff] %v1991
        %2983 = vst [vmem:[%s2967] ss:$4 sm:$0xff] %v1992
        %2984 = vst [vmem:[%s2969] ss:$4 sm:$0xff] %v1993
        %2985 = vst [vmem:[%s2971] ss:$4 sm:$0xff] %v1994
        %2986 = vst [vmem:[%s2973] ss:$4 sm:$0xff] %v1995
        %2987 = vst [vmem:[%s2975] ss:$4 sm:$0xff] %v1996
        %2988 = vst [vmem:[%s2977] ss:$4 sm:$0xff] %v1997
        %v2989 = vld.sshfl [vmem:[#allocation1] sm:$0xff pattern:$0x73625140]
        %v2990 = vld.sshfl [vmem:[#allocation1 + $0x20] sm:$0xff pattern:$0x73625140]
        %2991 = vst [vmem:[#allocation1] ss:$4 sm:$0xff] %v2000
        %2992 = vst [vmem:[%s2965] ss:$4 sm:$0xff] %v2001
        %2993 = vst [vmem:[%s2967] ss:$4 sm:$0xff] %v2002
        %2994 = vst [vmem:[%s2969] ss:$4 sm:$0xff] %v2003
        %2995 = vst [vmem:[%s2971] ss:$4 sm:$0xff] %v2004
        %2996 = vst [vmem:[%s2973] ss:$4 sm:$0xff] %v2005
        %2997 = vst [vmem:[%s2975] ss:$4 sm:$0xff] %v2006
        %2998 = vst [vmem:[%s2977] ss:$4 sm:$0xff] %v2007
        %v2999 = vld.sshfl [vmem:[#allocation1] sm:$0xff pattern:$0x73625140]
        %v3000 = vld.sshfl [vmem:[#allocation1 + $0x20] sm:$0xff pattern:$0x73625140]
        %3001 = vst [vmem:[#allocation1] ss:$4 sm:$0xff] %v2010
        %3002 = vst [vmem:[%s2965] ss:$4 sm:$0xff] %v2011
        %3003 = vst [vmem:[%s2967] ss:$4 sm:$0xff] %v2012
        %3004 = vst [vmem:[%s2969] ss:$4 sm:$0xff] %v2013
        %3005 = vst [vmem:[%s2971] ss:$4 sm:$0xff] %v2014
        %3006 = vst [vmem:[%s2973] ss:$4 sm:$0xff] %v2015
        %3007 = vst [vmem:[%s2975] ss:$4 sm:$0xff] %v2016
        %3008 = vst [vmem:[%s2977] ss:$4 sm:$0xff] %v2017
        %v3009 = vld.sshfl [vmem:[#allocation1] sm:$0xff pattern:$0x73625140]
        %v3010 = vld.sshfl [vmem:[#allocation1 + $0x20] sm:$0xff pattern:$0x73625140]
        %3011 = vst [vmem:[#allocation1] ss:$4 sm:$0xff] %v2020
        %3012 = vst [vmem:[%s2965] ss:$4 sm:$0xff] %v2021
        %3013 = vst [vmem:[%s2967] ss:$4 sm:$0xff] %v2022
        %3014 = vst [vmem:[%s2969] ss:$4 sm:$0xff] %v2023
        %3015 = vst [vmem:[%s2971] ss:$4 sm:$0xff] %v2024
        %3016 = vst [vmem:[%s2973] ss:$4 sm:$0xff] %v2025
        %3017 = vst [vmem:[%s2975] ss:$4 sm:$0xff] %v2026
        %3018 = vst [vmem:[%s2977] ss:$4 sm:$0xff] %v2027
        %v3019 = vld.sshfl [vmem:[#allocation1] sm:$0xff pattern:$0x73625140]
        %v3020 = vld.sshfl [vmem:[#allocation1 + $0x20] sm:$0xff pattern:$0x73625140]
        %3021 = vst [vmem:[#allocation1] ss:$4 sm:$0xff] %v2030
        %3022 = vst [vmem:[%s2965] ss:$4 sm:$0xff] %v2031
        %3023 = vst [vmem:[%s2967] ss:$4 sm:$0xff] %v2032
        %3024 = vst [vmem:[%s2969] ss:$4 sm:$0xff] %v2033
        %3025 = vst [vmem:[%s2971] ss:$4 sm:$0xff] %v2034
        %3026 = vst [vmem:[%s2973] ss:$4 sm:$0xff] %v2035
        %3027 = vst [vmem:[%s2975] ss:$4 sm:$0xff] %v2036
        %3028 = vst [vmem:[%s2977] ss:$4 sm:$0xff] %v2037
        %v3029 = vld.sshfl [vmem:[#allocation1] sm:$0xff pattern:$0x73625140]
        %v3030 = vld.sshfl [vmem:[#allocation1 + $0x20] sm:$0xff pattern:$0x73625140]
        %3031 = vst [vmem:[#allocation1] ss:$4 sm:$0xff] %v2040
        %3032 = vst [vmem:[%s2965] ss:$4 sm:$0xff] %v2041
        %3033 = vst [vmem:[%s2967] ss:$4 sm:$0xff] %v2042
        %3034 = vst [vmem:[%s2969] ss:$4 sm:$0xff] %v2043
        %3035 = vst [vmem:[%s2971] ss:$4 sm:$0xff] %v2044
        %3036 = vst [vmem:[%s2973] ss:$4 sm:$0xff] %v2045
        %3037 = vst [vmem:[%s2975] ss:$4 sm:$0xff] %v2046
        %3038 = vst [vmem:[%s2977] ss:$4 sm:$0xff] %v2047
        %v3039 = vld.sshfl [vmem:[#allocation1] sm:$0xff pattern:$0x73625140]
        %v3040 = vld.sshfl [vmem:[#allocation1 + $0x20] sm:$0xff pattern:$0x73625140]
        %3041 = vst [vmem:[#allocation1] ss:$4 sm:$0xff] %v2050
        %3042 = vst [vmem:[%s2965] ss:$4 sm:$0xff] %v2051
        %3043 = vst [vmem:[%s2967] ss:$4 sm:$0xff] %v2052
        %3044 = vst [vmem:[%s2969] ss:$4 sm:$0xff] %v2053
        %3045 = vst [vmem:[%s2971] ss:$4 sm:$0xff] %v2054
        %3046 = vst [vmem:[%s2973] ss:$4 sm:$0xff] %v2055
        %3047 = vst [vmem:[%s2975] ss:$4 sm:$0xff] %v2056
        %3048 = vst [vmem:[%s2977] ss:$4 sm:$0xff] %v2057
        %v3049 = vld.sshfl [vmem:[#allocation1] sm:$0xff pattern:$0x73625140]
        %v3050 = vld.sshfl [vmem:[#allocation1 + $0x20] sm:$0xff pattern:$0x73625140]
        %3051 = vrot.lane.b32.xlu0 %v2979, 8
        %v3052 = vpop.permute.xlu0 %3051
        %3053 = vrot.lane.b32.xlu0 %v2980, 8
        %v3054 = vpop.permute.xlu0 %3053
        %3055 = vrot.lane.b32.xlu0 %v2989, 8
        %v3056 = vpop.permute.xlu0 %3055
        %3057 = vrot.lane.b32.xlu0 %v2990, 8
        %v3058 = vpop.permute.xlu0 %3057
        %3059 = vrot.lane.b32.xlu0 %v2999, 8
        %v3060 = vpop.permute.xlu0 %3059
        %3061 = vrot.lane.b32.xlu0 %v3000, 8
        %v3062 = vpop.permute.xlu0 %3061
        %3063 = vrot.lane.b32.xlu0 %v3009, 8
        %v3064 = vpop.permute.xlu0 %3063
        %3065 = vrot.lane.b32.xlu0 %v3010, 8
        %v3066 = vpop.permute.xlu0 %3065
        %3067 = vrot.lane.b32.xlu0 %v3019, 8
        %v3068 = vpop.permute.xlu0 %3067
        %3069 = vrot.lane.b32.xlu0 %v3020, 8
        %v3070 = vpop.permute.xlu0 %3069
        %3071 = vrot.lane.b32.xlu0 %v3029, 8
        %v3072 = vpop.permute.xlu0 %3071
        %3073 = vrot.lane.b32.xlu0 %v3030, 8
        %v3074 = vpop.permute.xlu0 %3073
        %3075 = vrot.lane.b32.xlu0 %v3039, 8
        %v3076 = vpop.permute.xlu0 %3075
        %3077 = vrot.lane.b32.xlu0 %v3040, 8
        %v3078 = vpop.permute.xlu0 %3077
        %3079 = vrot.lane.b32.xlu0 %v3049, 8
        %v3080 = vpop.permute.xlu0 %3079
        %3081 = vrot.lane.b32.xlu0 %v3050, 8
        %v3082 = vpop.permute.xlu0 %3081
        %3099 = vst [vmem:[#allocation1] ss:$4 sm:$0xff] %v2179
        %s3100 = scalar_lea.vmem [#allocation1], 1
        %3101 = vst [vmem:[%s3100] ss:$4 sm:$0xff] %v2182
        %s3102 = scalar_lea.vmem [#allocation1], 2
        %3103 = vst [vmem:[%s3102] ss:$4 sm:$0xff] %v2185
        %s3104 = scalar_lea.vmem [#allocation1], 3
        %3105 = vst [vmem:[%s3104] ss:$4 sm:$0xff] %v2188
        %s3106 = scalar_lea.vmem [#allocation1], 32
        %3107 = vst [vmem:[%s3106] ss:$4 sm:$0xff] %v2191
        %s3108 = scalar_lea.vmem [#allocation1], 33
        %3109 = vst [vmem:[%s3108] ss:$4 sm:$0xff] %v2194
        %s3110 = scalar_lea.vmem [#allocation1], 34
        %3111 = vst [vmem:[%s3110] ss:$4 sm:$0xff] %v2197
        %s3112 = scalar_lea.vmem [#allocation1], 35
        %3113 = vst [vmem:[%s3112] ss:$4 sm:$0xff] %v2361
        %v3114 = vld.sshfl [vmem:[#allocation1] sm:$0xff pattern:$0x73625140]
        %v3115 = vld.sshfl [vmem:[#allocation1 + $0x20] sm:$0xff pattern:$0x73625140]
        %3116 = vst [vmem:[#allocation1] ss:$4 sm:$0xff] %v2204
        %3117 = vst [vmem:[%s3100] ss:$4 sm:$0xff] %v2207
        %3118 = vst [vmem:[%s3102] ss:$4 sm:$0xff] %v2210
        %3119 = vst [vmem:[%s3104] ss:$4 sm:$0xff] %v2213
        %3120 = vst [vmem:[%s3106] ss:$4 sm:$0xff] %v2216
        %3121 = vst [vmem:[%s3108] ss:$4 sm:$0xff] %v2219
        %3122 = vst [vmem:[%s3110] ss:$4 sm:$0xff] %v2222
        %3123 = vst [vmem:[%s3112] ss:$4 sm:$0xff] %v2364
        %v3124 = vld.sshfl [vmem:[#allocation1] sm:$0xff pattern:$0x73625140]
        %v3125 = vld.sshfl [vmem:[#allocation1 + $0x20] sm:$0xff pattern:$0x73625140]
        %3126 = vst [vmem:[#allocation1] ss:$4 sm:$0xff] %v2229
        %3127 = vst [vmem:[%s3100] ss:$4 sm:$0xff] %v2232
        %3128 = vst [vmem:[%s3102] ss:$4 sm:$0xff] %v2235
        %3129 = vst [vmem:[%s3104] ss:$4 sm:$0xff] %v2238
        %3130 = vst [vmem:[%s3106] ss:$4 sm:$0xff] %v2241
        %3131 = vst [vmem:[%s3108] ss:$4 sm:$0xff] %v2244
        %3132 = vst [vmem:[%s3110] ss:$4 sm:$0xff] %v2247
        %3133 = vst [vmem:[%s3112] ss:$4 sm:$0xff] %v2367
        %v3134 = vld.sshfl [vmem:[#allocation1] sm:$0xff pattern:$0x73625140]
        %v3135 = vld.sshfl [vmem:[#allocation1 + $0x20] sm:$0xff pattern:$0x73625140]
        %3136 = vst [vmem:[#allocation1] ss:$4 sm:$0xff] %v2254
        %3137 = vst [vmem:[%s3100] ss:$4 sm:$0xff] %v2257
        %3138 = vst [vmem:[%s3102] ss:$4 sm:$0xff] %v2260
        %3139 = vst [vmem:[%s3104] ss:$4 sm:$0xff] %v2263
        %3140 = vst [vmem:[%s3106] ss:$4 sm:$0xff] %v2266
        %3141 = vst [vmem:[%s3108] ss:$4 sm:$0xff] %v2269
        %3142 = vst [vmem:[%s3110] ss:$4 sm:$0xff] %v2272
        %3143 = vst [vmem:[%s3112] ss:$4 sm:$0xff] %v2370
        %v3144 = vld.sshfl [vmem:[#allocation1] sm:$0xff pattern:$0x73625140]
        %v3145 = vld.sshfl [vmem:[#allocation1 + $0x20] sm:$0xff pattern:$0x73625140]
        %3146 = vst [vmem:[#allocation1] ss:$4 sm:$0xff] %v2279
        %3147 = vst [vmem:[%s3100] ss:$4 sm:$0xff] %v2282
        %3148 = vst [vmem:[%s3102] ss:$4 sm:$0xff] %v2285
        %3149 = vst [vmem:[%s3104] ss:$4 sm:$0xff] %v2288
        %3150 = vst [vmem:[%s3106] ss:$4 sm:$0xff] %v2291
        %3151 = vst [vmem:[%s3108] ss:$4 sm:$0xff] %v2294
        %3152 = vst [vmem:[%s3110] ss:$4 sm:$0xff] %v2297
        %3153 = vst [vmem:[%s3112] ss:$4 sm:$0xff] %v2373
        %v3154 = vld.sshfl [vmem:[#allocation1] sm:$0xff pattern:$0x73625140]
        %v3155 = vld.sshfl [vmem:[#allocation1 + $0x20] sm:$0xff pattern:$0x73625140]
        %3156 = vst [vmem:[#allocation1] ss:$4 sm:$0xff] %v2304
        %3157 = vst [vmem:[%s3100] ss:$4 sm:$0xff] %v2307
        %3158 = vst [vmem:[%s3102] ss:$4 sm:$0xff] %v2310
        %3159 = vst [vmem:[%s3104] ss:$4 sm:$0xff] %v2313
        %3160 = vst [vmem:[%s3106] ss:$4 sm:$0xff] %v2316
        %3161 = vst [vmem:[%s3108] ss:$4 sm:$0xff] %v2319
        %3162 = vst [vmem:[%s3110] ss:$4 sm:$0xff] %v2322
        %3163 = vst [vmem:[%s3112] ss:$4 sm:$0xff] %v2376
        %v3164 = vld.sshfl [vmem:[#allocation1] sm:$0xff pattern:$0x73625140]
        %v3165 = vld.sshfl [vmem:[#allocation1 + $0x20] sm:$0xff pattern:$0x73625140]
        %3166 = vst [vmem:[#allocation1] ss:$4 sm:$0xff] %v2329
        %3167 = vst [vmem:[%s3100] ss:$4 sm:$0xff] %v2332
        %3168 = vst [vmem:[%s3102] ss:$4 sm:$0xff] %v2335
        %3169 = vst [vmem:[%s3104] ss:$4 sm:$0xff] %v2338
        %3170 = vst [vmem:[%s3106] ss:$4 sm:$0xff] %v2341
        %3171 = vst [vmem:[%s3108] ss:$4 sm:$0xff] %v2344
        %3172 = vst [vmem:[%s3110] ss:$4 sm:$0xff] %v2347
        %3173 = vst [vmem:[%s3112] ss:$4 sm:$0xff] %v2379
        %v3174 = vld.sshfl [vmem:[#allocation1] sm:$0xff pattern:$0x73625140]
        %v3175 = vld.sshfl [vmem:[#allocation1 + $0x20] sm:$0xff pattern:$0x73625140]
        %3176 = vst [vmem:[#allocation1] ss:$4 sm:$0xff] %v2395
        %3177 = vst [vmem:[%s3100] ss:$4 sm:$0xff] %v2398
        %3178 = vst [vmem:[%s3102] ss:$4 sm:$0xff] %v2401
        %3179 = vst [vmem:[%s3104] ss:$4 sm:$0xff] %v2404
        %3180 = vst [vmem:[%s3106] ss:$4 sm:$0xff] %v2407
        %3181 = vst [vmem:[%s3108] ss:$4 sm:$0xff] %v2410
        %3182 = vst [vmem:[%s3110] ss:$4 sm:$0xff] %v2413
        %3183 = vst [vmem:[%s3112] ss:$4 sm:$0xff] %v2417
        %v3184 = vld.sshfl [vmem:[#allocation1] sm:$0xff pattern:$0x73625140]
        %v3185 = vld.sshfl [vmem:[#allocation1 + $0x20] sm:$0xff pattern:$0x73625140]
        %3186 = vrot.lane.b32.xlu0 %v3114, 10
        %v3187 = vpop.permute.xlu0 %3186
        %3188 = vrot.lane.b32.xlu0 %v3115, 10
        %v3189 = vpop.permute.xlu0 %3188
        %3190 = vrot.lane.b32.xlu0 %v3124, 10
        %v3191 = vpop.permute.xlu0 %3190
        %3192 = vrot.lane.b32.xlu0 %v3125, 10
        %v3193 = vpop.permute.xlu0 %3192
        %3194 = vrot.lane.b32.xlu0 %v3134, 10
        %v3195 = vpop.permute.xlu0 %3194
        %3196 = vrot.lane.b32.xlu0 %v3135, 10
        %v3197 = vpop.permute.xlu0 %3196
        %3198 = vrot.lane.b32.xlu0 %v3144, 10
        %v3199 = vpop.permute.xlu0 %3198
        %3200 = vrot.lane.b32.xlu0 %v3145, 10
        %v3201 = vpop.permute.xlu0 %3200
        %3202 = vrot.lane.b32.xlu0 %v3154, 10
        %v3203 = vpop.permute.xlu0 %3202
        %3204 = vrot.lane.b32.xlu0 %v3155, 10
        %v3205 = vpop.permute.xlu0 %3204
        %3206 = vrot.lane.b32.xlu0 %v3164, 10
        %v3207 = vpop.permute.xlu0 %3206
        %3208 = vrot.lane.b32.xlu0 %v3165, 10
        %v3209 = vpop.permute.xlu0 %3208
        %3210 = vrot.lane.b32.xlu0 %v3174, 10
        %v3211 = vpop.permute.xlu0 %3210
        %3212 = vrot.lane.b32.xlu0 %v3175, 10
        %v3213 = vpop.permute.xlu0 %3212
        %3214 = vrot.lane.b32.xlu0 %v3184, 10
        %v3215 = vpop.permute.xlu0 %3214
        %3216 = vrot.lane.b32.xlu0 %v3185, 10
        %v3217 = vpop.permute.xlu0 %3216
        %3234 = vst [vmem:[#allocation1] ss:$4 sm:$0xff] %v2201
        %s3235 = scalar_lea.vmem [#allocation1], 1
        %3236 = vst [vmem:[%s3235] ss:$4 sm:$0xff] %v2204
        %s3237 = scalar_lea.vmem [#allocation1], 2
        %3238 = vst [vmem:[%s3237] ss:$4 sm:$0xff] %v2207
        %s3239 = scalar_lea.vmem [#allocation1], 3
        %3240 = vst [vmem:[%s3239] ss:$4 sm:$0xff] %v2210
        %s3241 = scalar_lea.vmem [#allocation1], 32
        %3242 = vst [vmem:[%s3241] ss:$4 sm:$0xff] %v2213
        %s3243 = scalar_lea.vmem [#allocation1], 33
        %3244 = vst [vmem:[%s3243] ss:$4 sm:$0xff] %v2216
        %s3245 = scalar_lea.vmem [#allocation1], 34
        %3246 = vst [vmem:[%s3245] ss:$4 sm:$0xff] %v2219
        %s3247 = scalar_lea.vmem [#allocation1], 35
        %3248 = vst [vmem:[%s3247] ss:$4 sm:$0xff] %v2222
        %v3249 = vld.sshfl [vmem:[#allocation1] sm:$0xff pattern:$0x73625140]
        %v3250 = vld.sshfl [vmem:[#allocation1 + $0x20] sm:$0xff pattern:$0x73625140]
        %3251 = vst [vmem:[#allocation1] ss:$4 sm:$0xff] %v2226
        %3252 = vst [vmem:[%s3235] ss:$4 sm:$0xff] %v2229
        %3253 = vst [vmem:[%s3237] ss:$4 sm:$0xff] %v2232
        %3254 = vst [vmem:[%s3239] ss:$4 sm:$0xff] %v2235
        %3255 = vst [vmem:[%s3241] ss:$4 sm:$0xff] %v2238
        %3256 = vst [vmem:[%s3243] ss:$4 sm:$0xff] %v2241
        %3257 = vst [vmem:[%s3245] ss:$4 sm:$0xff] %v2244
        %3258 = vst [vmem:[%s3247] ss:$4 sm:$0xff] %v2247
        %v3259 = vld.sshfl [vmem:[#allocation1] sm:$0xff pattern:$0x73625140]
        %v3260 = vld.sshfl [vmem:[#allocation1 + $0x20] sm:$0xff pattern:$0x73625140]
        %3261 = vst [vmem:[#allocation1] ss:$4 sm:$0xff] %v2251
        %3262 = vst [vmem:[%s3235] ss:$4 sm:$0xff] %v2254
        %3263 = vst [vmem:[%s3237] ss:$4 sm:$0xff] %v2257
        %3264 = vst [vmem:[%s3239] ss:$4 sm:$0xff] %v2260
        %3265 = vst [vmem:[%s3241] ss:$4 sm:$0xff] %v2263
        %3266 = vst [vmem:[%s3243] ss:$4 sm:$0xff] %v2266
        %3267 = vst [vmem:[%s3245] ss:$4 sm:$0xff] %v2269
        %3268 = vst [vmem:[%s3247] ss:$4 sm:$0xff] %v2272
        %v3269 = vld.sshfl [vmem:[#allocation1] sm:$0xff pattern:$0x73625140]
        %v3270 = vld.sshfl [vmem:[#allocation1 + $0x20] sm:$0xff pattern:$0x73625140]
        %3271 = vst [vmem:[#allocation1] ss:$4 sm:$0xff] %v2276
        %3272 = vst [vmem:[%s3235] ss:$4 sm:$0xff] %v2279
        %3273 = vst [vmem:[%s3237] ss:$4 sm:$0xff] %v2282
        %3274 = vst [vmem:[%s3239] ss:$4 sm:$0xff] %v2285
        %3275 = vst [vmem:[%s3241] ss:$4 sm:$0xff] %v2288
        %3276 = vst [vmem:[%s3243] ss:$4 sm:$0xff] %v2291
        %3277 = vst [vmem:[%s3245] ss:$4 sm:$0xff] %v2294
        %3278 = vst [vmem:[%s3247] ss:$4 sm:$0xff] %v2297
        %v3279 = vld.sshfl [vmem:[#allocation1] sm:$0xff pattern:$0x73625140]
        %v3280 = vld.sshfl [vmem:[#allocation1 + $0x20] sm:$0xff pattern:$0x73625140]
        %3281 = vst [vmem:[#allocation1] ss:$4 sm:$0xff] %v2301
        %3282 = vst [vmem:[%s3235] ss:$4 sm:$0xff] %v2304
        %3283 = vst [vmem:[%s3237] ss:$4 sm:$0xff] %v2307
        %3284 = vst [vmem:[%s3239] ss:$4 sm:$0xff] %v2310
        %3285 = vst [vmem:[%s3241] ss:$4 sm:$0xff] %v2313
        %3286 = vst [vmem:[%s3243] ss:$4 sm:$0xff] %v2316
        %3287 = vst [vmem:[%s3245] ss:$4 sm:$0xff] %v2319
        %3288 = vst [vmem:[%s3247] ss:$4 sm:$0xff] %v2322
        %v3289 = vld.sshfl [vmem:[#allocation1] sm:$0xff pattern:$0x73625140]
        %v3290 = vld.sshfl [vmem:[#allocation1 + $0x20] sm:$0xff pattern:$0x73625140]
        %3291 = vst [vmem:[#allocation1] ss:$4 sm:$0xff] %v2326
        %3292 = vst [vmem:[%s3235] ss:$4 sm:$0xff] %v2329
        %3293 = vst [vmem:[%s3237] ss:$4 sm:$0xff] %v2332
        %3294 = vst [vmem:[%s3239] ss:$4 sm:$0xff] %v2335
        %3295 = vst [vmem:[%s3241] ss:$4 sm:$0xff] %v2338
        %3296 = vst [vmem:[%s3243] ss:$4 sm:$0xff] %v2341
        %3297 = vst [vmem:[%s3245] ss:$4 sm:$0xff] %v2344
        %3298 = vst [vmem:[%s3247] ss:$4 sm:$0xff] %v2347
        %v3299 = vld.sshfl [vmem:[#allocation1] sm:$0xff pattern:$0x73625140]
        %v3300 = vld.sshfl [vmem:[#allocation1 + $0x20] sm:$0xff pattern:$0x73625140]
        %3301 = vst [vmem:[#allocation1] ss:$4 sm:$0xff] %v2392
        %3302 = vst [vmem:[%s3235] ss:$4 sm:$0xff] %v2395
        %3303 = vst [vmem:[%s3237] ss:$4 sm:$0xff] %v2398
        %3304 = vst [vmem:[%s3239] ss:$4 sm:$0xff] %v2401
        %3305 = vst [vmem:[%s3241] ss:$4 sm:$0xff] %v2404
        %3306 = vst [vmem:[%s3243] ss:$4 sm:$0xff] %v2407
        %3307 = vst [vmem:[%s3245] ss:$4 sm:$0xff] %v2410
        %3308 = vst [vmem:[%s3247] ss:$4 sm:$0xff] %v2413
        %v3309 = vld.sshfl [vmem:[#allocation1] sm:$0xff pattern:$0x73625140]
        %v3310 = vld.sshfl [vmem:[#allocation1 + $0x20] sm:$0xff pattern:$0x73625140]
        %3311 = vst [vmem:[#allocation1] ss:$4 sm:$0xff] %v2430
        %3312 = vst [vmem:[%s3235] ss:$4 sm:$0xff] %v2433
        %3313 = vst [vmem:[%s3237] ss:$4 sm:$0xff] %v2436
        %3314 = vst [vmem:[%s3239] ss:$4 sm:$0xff] %v2439
        %3315 = vst [vmem:[%s3241] ss:$4 sm:$0xff] %v2442
        %3316 = vst [vmem:[%s3243] ss:$4 sm:$0xff] %v2445
        %3317 = vst [vmem:[%s3245] ss:$4 sm:$0xff] %v2448
        %3318 = vst [vmem:[%s3247] ss:$4 sm:$0xff] %v2451
        %v3319 = vld.sshfl [vmem:[#allocation1] sm:$0xff pattern:$0x73625140]
        %v3320 = vld.sshfl [vmem:[#allocation1 + $0x20] sm:$0xff pattern:$0x73625140]
        %3321 = vrot.lane.b32.xlu0 %v3249, 12
        %v3322 = vpop.permute.xlu0 %3321
        %3323 = vrot.lane.b32.xlu0 %v3250, 12
        %v3324 = vpop.permute.xlu0 %3323
        %3325 = vrot.lane.b32.xlu0 %v3259, 12
        %v3326 = vpop.permute.xlu0 %3325
        %3327 = vrot.lane.b32.xlu0 %v3260, 12
        %v3328 = vpop.permute.xlu0 %3327
        %3329 = vrot.lane.b32.xlu0 %v3269, 12
        %v3330 = vpop.permute.xlu0 %3329
        %3331 = vrot.lane.b32.xlu0 %v3270, 12
        %v3332 = vpop.permute.xlu0 %3331
        %3333 = vrot.lane.b32.xlu0 %v3279, 12
        %v3334 = vpop.permute.xlu0 %3333
        %3335 = vrot.lane.b32.xlu0 %v3280, 12
        %v3336 = vpop.permute.xlu0 %3335
        %3337 = vrot.lane.b32.xlu0 %v3289, 12
        %v3338 = vpop.permute.xlu0 %3337
        %3339 = vrot.lane.b32.xlu0 %v3290, 12
        %v3340 = vpop.permute.xlu0 %3339
        %3341 = vrot.lane.b32.xlu0 %v3299, 12
        %v3342 = vpop.permute.xlu0 %3341
        %3343 = vrot.lane.b32.xlu0 %v3300, 12
        %v3344 = vpop.permute.xlu0 %3343
        %3345 = vrot.lane.b32.xlu0 %v3309, 12
        %v3346 = vpop.permute.xlu0 %3345
        %3347 = vrot.lane.b32.xlu0 %v3310, 12
        %v3348 = vpop.permute.xlu0 %3347
        %3349 = vrot.lane.b32.xlu0 %v3319, 12
        %v3350 = vpop.permute.xlu0 %3349
        %3351 = vrot.lane.b32.xlu0 %v3320, 12
        %v3352 = vpop.permute.xlu0 %3351
        %3369 = vst [vmem:[#allocation1] ss:$4 sm:$0xff] %v1990
        %s3370 = scalar_lea.vmem [#allocation1], 1
        %3371 = vst [vmem:[%s3370] ss:$4 sm:$0xff] %v1991
        %s3372 = scalar_lea.vmem [#allocation1], 2
        %3373 = vst [vmem:[%s3372] ss:$4 sm:$0xff] %v1992
        %s3374 = scalar_lea.vmem [#allocation1], 3
        %3375 = vst [vmem:[%s3374] ss:$4 sm:$0xff] %v1993
        %s3376 = scalar_lea.vmem [#allocation1], 32
        %3377 = vst [vmem:[%s3376] ss:$4 sm:$0xff] %v1994
        %s3378 = scalar_lea.vmem [#allocation1], 33
        %3379 = vst [vmem:[%s3378] ss:$4 sm:$0xff] %v1995
        %s3380 = scalar_lea.vmem [#allocation1], 34
        %3381 = vst [vmem:[%s3380] ss:$4 sm:$0xff] %v1996
        %s3382 = scalar_lea.vmem [#allocation1], 35
        %3383 = vst [vmem:[%s3382] ss:$4 sm:$0xff] %v1997
        %v3384 = vld.sshfl [vmem:[#allocation1] sm:$0xff pattern:$0x73625140]
        %v3385 = vld.sshfl [vmem:[#allocation1 + $0x20] sm:$0xff pattern:$0x73625140]
        %3386 = vst [vmem:[#allocation1] ss:$4 sm:$0xff] %v2000
        %3387 = vst [vmem:[%s3370] ss:$4 sm:$0xff] %v2001
        %3388 = vst [vmem:[%s3372] ss:$4 sm:$0xff] %v2002
        %3389 = vst [vmem:[%s3374] ss:$4 sm:$0xff] %v2003
        %3390 = vst [vmem:[%s3376] ss:$4 sm:$0xff] %v2004
        %3391 = vst [vmem:[%s3378] ss:$4 sm:$0xff] %v2005
        %3392 = vst [vmem:[%s3380] ss:$4 sm:$0xff] %v2006
        %3393 = vst [vmem:[%s3382] ss:$4 sm:$0xff] %v2007
        %v3394 = vld.sshfl [vmem:[#allocation1] sm:$0xff pattern:$0x73625140]
        %v3395 = vld.sshfl [vmem:[#allocation1 + $0x20] sm:$0xff pattern:$0x73625140]
        %3396 = vst [vmem:[#allocation1] ss:$4 sm:$0xff] %v2010
        %3397 = vst [vmem:[%s3370] ss:$4 sm:$0xff] %v2011
        %3398 = vst [vmem:[%s3372] ss:$4 sm:$0xff] %v2012
        %3399 = vst [vmem:[%s3374] ss:$4 sm:$0xff] %v2013
        %3400 = vst [vmem:[%s3376] ss:$4 sm:$0xff] %v2014
        %3401 = vst [vmem:[%s3378] ss:$4 sm:$0xff] %v2015
        %3402 = vst [vmem:[%s3380] ss:$4 sm:$0xff] %v2016
        %3403 = vst [vmem:[%s3382] ss:$4 sm:$0xff] %v2017
        %v3404 = vld.sshfl [vmem:[#allocation1] sm:$0xff pattern:$0x73625140]
        %v3405 = vld.sshfl [vmem:[#allocation1 + $0x20] sm:$0xff pattern:$0x73625140]
        %3406 = vst [vmem:[#allocation1] ss:$4 sm:$0xff] %v2020
        %3407 = vst [vmem:[%s3370] ss:$4 sm:$0xff] %v2021
        %3408 = vst [vmem:[%s3372] ss:$4 sm:$0xff] %v2022
        %3409 = vst [vmem:[%s3374] ss:$4 sm:$0xff] %v2023
        %3410 = vst [vmem:[%s3376] ss:$4 sm:$0xff] %v2024
        %3411 = vst [vmem:[%s3378] ss:$4 sm:$0xff] %v2025
        %3412 = vst [vmem:[%s3380] ss:$4 sm:$0xff] %v2026
        %3413 = vst [vmem:[%s3382] ss:$4 sm:$0xff] %v2027
        %v3414 = vld.sshfl [vmem:[#allocation1] sm:$0xff pattern:$0x73625140]
        %v3415 = vld.sshfl [vmem:[#allocation1 + $0x20] sm:$0xff pattern:$0x73625140]
        %3416 = vst [vmem:[#allocation1] ss:$4 sm:$0xff] %v2030
        %3417 = vst [vmem:[%s3370] ss:$4 sm:$0xff] %v2031
        %3418 = vst [vmem:[%s3372] ss:$4 sm:$0xff] %v2032
        %3419 = vst [vmem:[%s3374] ss:$4 sm:$0xff] %v2033
        %3420 = vst [vmem:[%s3376] ss:$4 sm:$0xff] %v2034
        %3421 = vst [vmem:[%s3378] ss:$4 sm:$0xff] %v2035
        %3422 = vst [vmem:[%s3380] ss:$4 sm:$0xff] %v2036
        %3423 = vst [vmem:[%s3382] ss:$4 sm:$0xff] %v2037
        %v3424 = vld.sshfl [vmem:[#allocation1] sm:$0xff pattern:$0x73625140]
        %v3425 = vld.sshfl [vmem:[#allocation1 + $0x20] sm:$0xff pattern:$0x73625140]
        %3426 = vst [vmem:[#allocation1] ss:$4 sm:$0xff] %v2040
        %3427 = vst [vmem:[%s3370] ss:$4 sm:$0xff] %v2041
        %3428 = vst [vmem:[%s3372] ss:$4 sm:$0xff] %v2042
        %3429 = vst [vmem:[%s3374] ss:$4 sm:$0xff] %v2043
        %3430 = vst [vmem:[%s3376] ss:$4 sm:$0xff] %v2044
        %3431 = vst [vmem:[%s3378] ss:$4 sm:$0xff] %v2045
        %3432 = vst [vmem:[%s3380] ss:$4 sm:$0xff] %v2046
        %3433 = vst [vmem:[%s3382] ss:$4 sm:$0xff] %v2047
        %v3434 = vld.sshfl [vmem:[#allocation1] sm:$0xff pattern:$0x73625140]
        %v3435 = vld.sshfl [vmem:[#allocation1 + $0x20] sm:$0xff pattern:$0x73625140]
        %3436 = vst [vmem:[#allocation1] ss:$4 sm:$0xff] %v2050
        %3437 = vst [vmem:[%s3370] ss:$4 sm:$0xff] %v2051
        %3438 = vst [vmem:[%s3372] ss:$4 sm:$0xff] %v2052
        %3439 = vst [vmem:[%s3374] ss:$4 sm:$0xff] %v2053
        %3440 = vst [vmem:[%s3376] ss:$4 sm:$0xff] %v2054
        %3441 = vst [vmem:[%s3378] ss:$4 sm:$0xff] %v2055
        %3442 = vst [vmem:[%s3380] ss:$4 sm:$0xff] %v2056
        %3443 = vst [vmem:[%s3382] ss:$4 sm:$0xff] %v2057
        %v3444 = vld.sshfl [vmem:[#allocation1] sm:$0xff pattern:$0x73625140]
        %v3445 = vld.sshfl [vmem:[#allocation1 + $0x20] sm:$0xff pattern:$0x73625140]
        %3446 = vst [vmem:[#allocation1] ss:$4 sm:$0xff] %v2060
        %3447 = vst [vmem:[%s3370] ss:$4 sm:$0xff] %v2061
        %3448 = vst [vmem:[%s3372] ss:$4 sm:$0xff] %v2062
        %3449 = vst [vmem:[%s3374] ss:$4 sm:$0xff] %v2063
        %3450 = vst [vmem:[%s3376] ss:$4 sm:$0xff] %v2064
        %3451 = vst [vmem:[%s3378] ss:$4 sm:$0xff] %v2065
        %3452 = vst [vmem:[%s3380] ss:$4 sm:$0xff] %v2066
        %3453 = vst [vmem:[%s3382] ss:$4 sm:$0xff] %v2067
        %v3454 = vld.sshfl [vmem:[#allocation1] sm:$0xff pattern:$0x73625140]
        %v3455 = vld.sshfl [vmem:[#allocation1 + $0x20] sm:$0xff pattern:$0x73625140]
        %3456 = vrot.lane.b32.xlu0 %v3384, 14
        %v3457 = vpop.permute.xlu0 %3456
        %3458 = vrot.lane.b32.xlu0 %v3385, 14
        %v3459 = vpop.permute.xlu0 %3458
        %3460 = vrot.lane.b32.xlu0 %v3394, 14
        %v3461 = vpop.permute.xlu0 %3460
        %3462 = vrot.lane.b32.xlu0 %v3395, 14
        %v3463 = vpop.permute.xlu0 %3462
        %3464 = vrot.lane.b32.xlu0 %v3404, 14
        %v3465 = vpop.permute.xlu0 %3464
        %3466 = vrot.lane.b32.xlu0 %v3405, 14
        %v3467 = vpop.permute.xlu0 %3466
        %3468 = vrot.lane.b32.xlu0 %v3414, 14
        %v3469 = vpop.permute.xlu0 %3468
        %3470 = vrot.lane.b32.xlu0 %v3415, 14
        %v3471 = vpop.permute.xlu0 %3470
        %3472 = vrot.lane.b32.xlu0 %v3424, 14
        %v3473 = vpop.permute.xlu0 %3472
        %3474 = vrot.lane.b32.xlu0 %v3425, 14
        %v3475 = vpop.permute.xlu0 %3474
        %3476 = vrot.lane.b32.xlu0 %v3434, 14
        %v3477 = vpop.permute.xlu0 %3476
        %3478 = vrot.lane.b32.xlu0 %v3435, 14
        %v3479 = vpop.permute.xlu0 %3478
        %3480 = vrot.lane.b32.xlu0 %v3444, 14
        %v3481 = vpop.permute.xlu0 %3480
        %3482 = vrot.lane.b32.xlu0 %v3445, 14
        %v3483 = vpop.permute.xlu0 %3482
        %3484 = vrot.lane.b32.xlu0 %v3454, 14
        %v3485 = vpop.permute.xlu0 %3484
        %3486 = vrot.lane.b32.xlu0 %v3455, 14
        %v3487 = vpop.permute.xlu0 %3486
        %3504 = vst [vmem:[#allocation1] ss:$4 sm:$0xff] %v2204
        %s3505 = scalar_lea.vmem [#allocation1], 1
        %3506 = vst [vmem:[%s3505] ss:$4 sm:$0xff] %v2207
        %s3507 = scalar_lea.vmem [#allocation1], 2
        %3508 = vst [vmem:[%s3507] ss:$4 sm:$0xff] %v2210
        %s3509 = scalar_lea.vmem [#allocation1], 3
        %3510 = vst [vmem:[%s3509] ss:$4 sm:$0xff] %v2213
        %s3511 = scalar_lea.vmem [#allocation1], 32
        %3512 = vst [vmem:[%s3511] ss:$4 sm:$0xff] %v2216
        %s3513 = scalar_lea.vmem [#allocation1], 33
        %3514 = vst [vmem:[%s3513] ss:$4 sm:$0xff] %v2219
        %s3515 = scalar_lea.vmem [#allocation1], 34
        %3516 = vst [vmem:[%s3515] ss:$4 sm:$0xff] %v2222
        %s3517 = scalar_lea.vmem [#allocation1], 35
        %3518 = vst [vmem:[%s3517] ss:$4 sm:$0xff] %v2364
        %v3519 = vld.sshfl [vmem:[#allocation1] sm:$0xff pattern:$0x73625140]
        %v3520 = vld.sshfl [vmem:[#allocation1 + $0x20] sm:$0xff pattern:$0x73625140]
        %3521 = vst [vmem:[#allocation1] ss:$4 sm:$0xff] %v2229
        %3522 = vst [vmem:[%s3505] ss:$4 sm:$0xff] %v2232
        %3523 = vst [vmem:[%s3507] ss:$4 sm:$0xff] %v2235
        %3524 = vst [vmem:[%s3509] ss:$4 sm:$0xff] %v2238
        %3525 = vst [vmem:[%s3511] ss:$4 sm:$0xff] %v2241
        %3526 = vst [vmem:[%s3513] ss:$4 sm:$0xff] %v2244
        %3527 = vst [vmem:[%s3515] ss:$4 sm:$0xff] %v2247
        %3528 = vst [vmem:[%s3517] ss:$4 sm:$0xff] %v2367
        %v3529 = vld.sshfl [vmem:[#allocation1] sm:$0xff pattern:$0x73625140]
        %v3530 = vld.sshfl [vmem:[#allocation1 + $0x20] sm:$0xff pattern:$0x73625140]
        %3531 = vst [vmem:[#allocation1] ss:$4 sm:$0xff] %v2254
        %3532 = vst [vmem:[%s3505] ss:$4 sm:$0xff] %v2257
        %3533 = vst [vmem:[%s3507] ss:$4 sm:$0xff] %v2260
        %3534 = vst [vmem:[%s3509] ss:$4 sm:$0xff] %v2263
        %3535 = vst [vmem:[%s3511] ss:$4 sm:$0xff] %v2266
        %3536 = vst [vmem:[%s3513] ss:$4 sm:$0xff] %v2269
        %3537 = vst [vmem:[%s3515] ss:$4 sm:$0xff] %v2272
        %3538 = vst [vmem:[%s3517] ss:$4 sm:$0xff] %v2370
        %v3539 = vld.sshfl [vmem:[#allocation1] sm:$0xff pattern:$0x73625140]
        %v3540 = vld.sshfl [vmem:[#allocation1 + $0x20] sm:$0xff pattern:$0x73625140]
        %3541 = vst [vmem:[#allocation1] ss:$4 sm:$0xff] %v2279
        %3542 = vst [vmem:[%s3505] ss:$4 sm:$0xff] %v2282
        %3543 = vst [vmem:[%s3507] ss:$4 sm:$0xff] %v2285
        %3544 = vst [vmem:[%s3509] ss:$4 sm:$0xff] %v2288
        %3545 = vst [vmem:[%s3511] ss:$4 sm:$0xff] %v2291
        %3546 = vst [vmem:[%s3513] ss:$4 sm:$0xff] %v2294
        %3547 = vst [vmem:[%s3515] ss:$4 sm:$0xff] %v2297
        %3548 = vst [vmem:[%s3517] ss:$4 sm:$0xff] %v2373
        %v3549 = vld.sshfl [vmem:[#allocation1] sm:$0xff pattern:$0x73625140]
        %v3550 = vld.sshfl [vmem:[#allocation1 + $0x20] sm:$0xff pattern:$0x73625140]
        %3551 = vst [vmem:[#allocation1] ss:$4 sm:$0xff] %v2304
        %3552 = vst [vmem:[%s3505] ss:$4 sm:$0xff] %v2307
        %3553 = vst [vmem:[%s3507] ss:$4 sm:$0xff] %v2310
        %3554 = vst [vmem:[%s3509] ss:$4 sm:$0xff] %v2313
        %3555 = vst [vmem:[%s3511] ss:$4 sm:$0xff] %v2316
        %3556 = vst [vmem:[%s3513] ss:$4 sm:$0xff] %v2319
        %3557 = vst [vmem:[%s3515] ss:$4 sm:$0xff] %v2322
        %3558 = vst [vmem:[%s3517] ss:$4 sm:$0xff] %v2376
        %v3559 = vld.sshfl [vmem:[#allocation1] sm:$0xff pattern:$0x73625140]
        %v3560 = vld.sshfl [vmem:[#allocation1 + $0x20] sm:$0xff pattern:$0x73625140]
        %3561 = vst [vmem:[#allocation1] ss:$4 sm:$0xff] %v2329
        %3562 = vst [vmem:[%s3505] ss:$4 sm:$0xff] %v2332
        %3563 = vst [vmem:[%s3507] ss:$4 sm:$0xff] %v2335
        %3564 = vst [vmem:[%s3509] ss:$4 sm:$0xff] %v2338
        %3565 = vst [vmem:[%s3511] ss:$4 sm:$0xff] %v2341
        %3566 = vst [vmem:[%s3513] ss:$4 sm:$0xff] %v2344
        %3567 = vst [vmem:[%s3515] ss:$4 sm:$0xff] %v2347
        %3568 = vst [vmem:[%s3517] ss:$4 sm:$0xff] %v2379
        %v3569 = vld.sshfl [vmem:[#allocation1] sm:$0xff pattern:$0x73625140]
        %v3570 = vld.sshfl [vmem:[#allocation1 + $0x20] sm:$0xff pattern:$0x73625140]
        %3571 = vst [vmem:[#allocation1] ss:$4 sm:$0xff] %v2395
        %3572 = vst [vmem:[%s3505] ss:$4 sm:$0xff] %v2398
        %3573 = vst [vmem:[%s3507] ss:$4 sm:$0xff] %v2401
        %3574 = vst [vmem:[%s3509] ss:$4 sm:$0xff] %v2404
        %3575 = vst [vmem:[%s3511] ss:$4 sm:$0xff] %v2407
        %3576 = vst [vmem:[%s3513] ss:$4 sm:$0xff] %v2410
        %3577 = vst [vmem:[%s3515] ss:$4 sm:$0xff] %v2413
        %3578 = vst [vmem:[%s3517] ss:$4 sm:$0xff] %v2417
        %v3579 = vld.sshfl [vmem:[#allocation1] sm:$0xff pattern:$0x73625140]
        %v3580 = vld.sshfl [vmem:[#allocation1 + $0x20] sm:$0xff pattern:$0x73625140]
        %3581 = vst [vmem:[#allocation1] ss:$4 sm:$0xff] %v2433
        %3582 = vst [vmem:[%s3505] ss:$4 sm:$0xff] %v2436
        %3583 = vst [vmem:[%s3507] ss:$4 sm:$0xff] %v2439
        %3584 = vst [vmem:[%s3509] ss:$4 sm:$0xff] %v2442
        %3585 = vst [vmem:[%s3511] ss:$4 sm:$0xff] %v2445
        %3586 = vst [vmem:[%s3513] ss:$4 sm:$0xff] %v2448
        %3587 = vst [vmem:[%s3515] ss:$4 sm:$0xff] %v2451
        %3588 = vst [vmem:[%s3517] ss:$4 sm:$0xff] %v2455
        %v3589 = vld.sshfl [vmem:[#allocation1] sm:$0xff pattern:$0x73625140]
        %v3590 = vld.sshfl [vmem:[#allocation1 + $0x20] sm:$0xff pattern:$0x73625140]
        %3591 = vrot.lane.b32.xlu0 %v3519, 16
        %v3592 = vpop.permute.xlu0 %3591
        %3593 = vrot.lane.b32.xlu0 %v3520, 16
        %v3594 = vpop.permute.xlu0 %3593
        %3595 = vrot.lane.b32.xlu0 %v3529, 16
        %v3596 = vpop.permute.xlu0 %3595
        %3597 = vrot.lane.b32.xlu0 %v3530, 16
        %v3598 = vpop.permute.xlu0 %3597
        %3599 = vrot.lane.b32.xlu0 %v3539, 16
        %v3600 = vpop.permute.xlu0 %3599
        %3601 = vrot.lane.b32.xlu0 %v3540, 16
        %v3602 = vpop.permute.xlu0 %3601
        %3603 = vrot.lane.b32.xlu0 %v3549, 16
        %v3604 = vpop.permute.xlu0 %3603
        %3605 = vrot.lane.b32.xlu0 %v3550, 16
        %v3606 = vpop.permute.xlu0 %3605
        %3607 = vrot.lane.b32.xlu0 %v3559, 16
        %v3608 = vpop.permute.xlu0 %3607
        %3609 = vrot.lane.b32.xlu0 %v3560, 16
        %v3610 = vpop.permute.xlu0 %3609
        %3611 = vrot.lane.b32.xlu0 %v3569, 16
        %v3612 = vpop.permute.xlu0 %3611
        %3613 = vrot.lane.b32.xlu0 %v3570, 16
        %v3614 = vpop.permute.xlu0 %3613
        %3615 = vrot.lane.b32.xlu0 %v3579, 16
        %v3616 = vpop.permute.xlu0 %3615
        %3617 = vrot.lane.b32.xlu0 %v3580, 16
        %v3618 = vpop.permute.xlu0 %3617
        %3619 = vrot.lane.b32.xlu0 %v3589, 16
        %v3620 = vpop.permute.xlu0 %3619
        %3621 = vrot.lane.b32.xlu0 %v3590, 16
        %v3622 = vpop.permute.xlu0 %3621
        %vm3639 = vcmask 15360
        %v3640 = vsel %vm3639, %v2471, %v2647
        %v3641 = vsel %vm3639, %v2472, %v2649
        %v3642 = vsel %vm3639, %v2481, %v2651
        %v3643 = vsel %vm3639, %v2482, %v2653
        %v3644 = vsel %vm3639, %v2491, %v2655
        %v3645 = vsel %vm3639, %v2492, %v2657
        %v3646 = vsel %vm3639, %v2501, %v2659
        %v3647 = vsel %vm3639, %v2502, %v2661
        %v3648 = vsel %vm3639, %v2511, %v2663
        %v3649 = vsel %vm3639, %v2512, %v2665
        %v3650 = vsel %vm3639, %v2521, %v2667
        %v3651 = vsel %vm3639, %v2522, %v2669
        %v3652 = vsel %vm3639, %v2531, %v2671
        %v3653 = vsel %vm3639, %v2532, %v2673
        %v3654 = vsel %vm3639, %v2541, %v2675
        %v3655 = vsel %vm3639, %v2542, %v2677
        %vm3656 = vcmask 31744
        %v3657 = vsel %vm3656, %v3640, %v2782
        %v3658 = vsel %vm3656, %v3641, %v2784
        %v3659 = vsel %vm3656, %v3642, %v2786
        %v3660 = vsel %vm3656, %v3643, %v2788
        %v3661 = vsel %vm3656, %v3644, %v2790
        %v3662 = vsel %vm3656, %v3645, %v2792
        %v3663 = vsel %vm3656, %v3646, %v2794
        %v3664 = vsel %vm3656, %v3647, %v2796
        %v3665 = vsel %vm3656, %v3648, %v2798
        %v3666 = vsel %vm3656, %v3649, %v2800
        %v3667 = vsel %vm3656, %v3650, %v2802
        %v3668 = vsel %vm3656, %v3651, %v2804
        %v3669 = vsel %vm3656, %v3652, %v2806
        %v3670 = vsel %vm3656, %v3653, %v2808
        %v3671 = vsel %vm3656, %v3654, %v2810
        %v3672 = vsel %vm3656, %v3655, %v2812
        %vm3673 = vcmask 48128
        %v3674 = vsel %vm3673, %v3657, %v2917
        %v3675 = vsel %vm3673, %v3658, %v2919
        %v3676 = vsel %vm3673, %v3659, %v2921
        %v3677 = vsel %vm3673, %v3660, %v2923
        %v3678 = vsel %vm3673, %v3661, %v2925
        %v3679 = vsel %vm3673, %v3662, %v2927
        %v3680 = vsel %vm3673, %v3663, %v2929
        %v3681 = vsel %vm3673, %v3664, %v2931
        %v3682 = vsel %vm3673, %v3665, %v2933
        %v3683 = vsel %vm3673, %v3666, %v2935
        %v3684 = vsel %vm3673, %v3667, %v2937
        %v3685 = vsel %vm3673, %v3668, %v2939
        %v3686 = vsel %vm3673, %v3669, %v2941
        %v3687 = vsel %vm3673, %v3670, %v2943
        %v3688 = vsel %vm3673, %v3671, %v2945
        %v3689 = vsel %vm3673, %v3672, %v2947
        %vm3690 = vcmask 64512
        %v3691 = vsel %vm3690, %v3674, %v3052
        %v3692 = vsel %vm3690, %v3675, %v3054
        %v3693 = vsel %vm3690, %v3676, %v3056
        %v3694 = vsel %vm3690, %v3677, %v3058
        %v3695 = vsel %vm3690, %v3678, %v3060
        %v3696 = vsel %vm3690, %v3679, %v3062
        %v3697 = vsel %vm3690, %v3680, %v3064
        %v3698 = vsel %vm3690, %v3681, %v3066
        %v3699 = vsel %vm3690, %v3682, %v3068
        %v3700 = vsel %vm3690, %v3683, %v3070
        %v3701 = vsel %vm3690, %v3684, %v3072
        %v3702 = vsel %vm3690, %v3685, %v3074
        %v3703 = vsel %vm3690, %v3686, %v3076
        %v3704 = vsel %vm3690, %v3687, %v3078
        %v3705 = vsel %vm3690, %v3688, %v3080
        %v3706 = vsel %vm3690, %v3689, %v3082
        %vm3707 = vcmask 80896
        %v3708 = vsel %vm3707, %v3691, %v3187
        %v3709 = vsel %vm3707, %v3692, %v3189
        %v3710 = vsel %vm3707, %v3693, %v3191
        %v3711 = vsel %vm3707, %v3694, %v3193
        %v3712 = vsel %vm3707, %v3695, %v3195
        %v3713 = vsel %vm3707, %v3696, %v3197
        %v3714 = vsel %vm3707, %v3697, %v3199
        %v3715 = vsel %vm3707, %v3698, %v3201
        %v3716 = vsel %vm3707, %v3699, %v3203
        %v3717 = vsel %vm3707, %v3700, %v3205
        %v3718 = vsel %vm3707, %v3701, %v3207
        %v3719 = vsel %vm3707, %v3702, %v3209
        %v3720 = vsel %vm3707, %v3703, %v3211
        %v3721 = vsel %vm3707, %v3704, %v3213
        %v3722 = vsel %vm3707, %v3705, %v3215
        %v3723 = vsel %vm3707, %v3706, %v3217
        %vm3724 = vcmask 97280
        %v3725 = vsel %vm3724, %v3708, %v3322
        %v3726 = vsel %vm3724, %v3709, %v3324
        %v3727 = vsel %vm3724, %v3710, %v3326
        %v3728 = vsel %vm3724, %v3711, %v3328
        %v3729 = vsel %vm3724, %v3712, %v3330
        %v3730 = vsel %vm3724, %v3713, %v3332
        %v3731 = vsel %vm3724, %v3714, %v3334
        %v3732 = vsel %vm3724, %v3715, %v3336
        %v3733 = vsel %vm3724, %v3716, %v3338
        %v3734 = vsel %vm3724, %v3717, %v3340
        %v3735 = vsel %vm3724, %v3718, %v3342
        %v3736 = vsel %vm3724, %v3719, %v3344
        %v3737 = vsel %vm3724, %v3720, %v3346
        %v3738 = vsel %vm3724, %v3721, %v3348
        %v3739 = vsel %vm3724, %v3722, %v3350
        %v3740 = vsel %vm3724, %v3723, %v3352
        %vm3741 = vcmask 113664
        %v3742 = vsel %vm3741, %v3725, %v3457
        %v3743 = vsel %vm3741, %v3726, %v3459
        %v3744 = vsel %vm3741, %v3727, %v3461
        %v3745 = vsel %vm3741, %v3728, %v3463
        %v3746 = vsel %vm3741, %v3729, %v3465
        %v3747 = vsel %vm3741, %v3730, %v3467
        %v3748 = vsel %vm3741, %v3731, %v3469
        %v3749 = vsel %vm3741, %v3732, %v3471
        %v3750 = vsel %vm3741, %v3733, %v3473
        %v3751 = vsel %vm3741, %v3734, %v3475
        %v3752 = vsel %vm3741, %v3735, %v3477
        %v3753 = vsel %vm3741, %v3736, %v3479
        %v3754 = vsel %vm3741, %v3737, %v3481
        %v3755 = vsel %vm3741, %v3738, %v3483
        %v3756 = vsel %vm3741, %v3739, %v3485
        %v3757 = vsel %vm3741, %v3740, %v3487
        %vm3758 = vcmask 130048
        %v3759 = vsel %vm3758, %v3742, %v3592
        %v3760 = vsel %vm3758, %v3743, %v3594
        %v3761 = vsel %vm3758, %v3744, %v3596
        %v3762 = vsel %vm3758, %v3745, %v3598
        %v3763 = vsel %vm3758, %v3746, %v3600
        %v3764 = vsel %vm3758, %v3747, %v3602
        %v3765 = vsel %vm3758, %v3748, %v3604
        %v3766 = vsel %vm3758, %v3749, %v3606
        %v3767 = vsel %vm3758, %v3750, %v3608
        %v3768 = vsel %vm3758, %v3751, %v3610
        %v3769 = vsel %vm3758, %v3752, %v3612
        %v3770 = vsel %vm3758, %v3753, %v3614
        %v3771 = vsel %vm3758, %v3754, %v3616
        %v3772 = vsel %vm3758, %v3755, %v3618
        %v3773 = vsel %vm3758, %v3756, %v3620
        %v3774 = vsel %vm3758, %v3757, %v3622
        %v3775 = vld [vmem:[%s3] sm:$0xff]
        %v3776 = vld [vmem:[%s3 + $0x8] sm:$0xff]
        %v3777 = vld [vmem:[%s3 + $0x10] sm:$0x3]
        %v3778 = vld [vmem:[%s4] sm:$0x1]
        %v3780 = vperm.slane %v3778, 0
        %vm3782 = vcmask 146432
        %v3784 = vsel %vm3782, %v3759, 0
        %v3787 = vsel %vm3782, %v3760, 0
        %v3790 = vsel %vm3782, %v3761, 0
        %v3793 = vsel %vm3782, %v3762, 0
        %v3796 = vsel %vm3782, %v3763, 0
        %v3799 = vsel %vm3782, %v3764, 0
        %v3802 = vsel %vm3782, %v3765, 0
        %v3805 = vsel %vm3782, %v3766, 0
        %v3808 = vsel %vm3782, %v3767, 0
        %v3811 = vsel %vm3782, %v3768, 0
        %v3814 = vsel %vm3782, %v3769, 0
        %v3817 = vsel %vm3782, %v3770, 0
        %v3820 = vsel %vm3782, %v3771, 0
        %v3823 = vsel %vm3782, %v3772, 0
        %v3826 = vsel %vm3782, %v3773, 0
        %v3829 = vsel %vm3782, %v3774, 0
        %vm3831 = vcmask 1041408
        %v3833 = vsel %vm3831, %v3777, 0
        %3835 = vmatpush.msra.mxu0 0.0
        %3836 = vmatpush.msra.mxu0 0.0
        %3837 = vmatpush.msra.mxu0 0.0
        %3838 = vmatpush.msra.mxu0 0.0
        %3839 = vmatpush.msra.mxu0 0.0
        %3840 = vmatpush.msra.mxu0 0.0
        %3841 = vmatpush.msra.mxu0 0.0
        %3842 = vmatpush.msra.mxu0 0.0
        %3843 = vmatpush.msra.mxu0 0.0
        %3844 = vmatpush.msra.mxu0 0.0
        %3845 = vmatpush.msra.mxu0 0.0
        %3846 = vmatpush.msra.mxu0 0.0
        %3847 = vmatpush.msra.mxu0 0.0
        %3848 = vmatpush.msra.mxu0 %v3833
        %3849 = vmatpush.msra.mxu0 %v3776
        %3850 = vmatpush.msra.mxu0 %v3775
        %3851 = vmatmul.f32.gmra.mxu0 %v3784
        %v3852 = vpop.f32.mrf.mxu0
        %v3853 = vadd.f32 %v3780, %v3852
        %3854 = vmatmul.f32.gmra.mxu0 %v3787
        %v3855 = vpop.f32.mrf.mxu0
        %v3856 = vadd.f32 %v3780, %v3855
        %3857 = vmatmul.f32.gmra.mxu0 %v3790
        %v3858 = vpop.f32.mrf.mxu0
        %v3859 = vadd.f32 %v3780, %v3858
        %3860 = vmatmul.f32.gmra.mxu0 %v3793
        %v3861 = vpop.f32.mrf.mxu0
        %v3862 = vadd.f32 %v3780, %v3861
        %3863 = vmatmul.f32.gmra.mxu0 %v3796
        %v3864 = vpop.f32.mrf.mxu0
        %v3865 = vadd.f32 %v3780, %v3864
        %3866 = vmatmul.f32.gmra.mxu0 %v3799
        %v3867 = vpop.f32.mrf.mxu0
        %v3868 = vadd.f32 %v3780, %v3867
        %3869 = vmatmul.f32.gmra.mxu0 %v3802
        %v3870 = vpop.f32.mrf.mxu0
        %v3871 = vadd.f32 %v3780, %v3870
        %3872 = vmatmul.f32.gmra.mxu0 %v3805
        %v3873 = vpop.f32.mrf.mxu0
        %v3874 = vadd.f32 %v3780, %v3873
        %3875 = vmatmul.f32.gmra.mxu0 %v3808
        %v3876 = vpop.f32.mrf.mxu0
        %v3877 = vadd.f32 %v3780, %v3876
        %3878 = vmatmul.f32.gmra.mxu0 %v3811
        %v3879 = vpop.f32.mrf.mxu0
        %v3880 = vadd.f32 %v3780, %v3879
        %3881 = vmatmul.f32.gmra.mxu0 %v3814
        %v3882 = vpop.f32.mrf.mxu0
        %v3883 = vadd.f32 %v3780, %v3882
        %3884 = vmatmul.f32.gmra.mxu0 %v3817
        %v3885 = vpop.f32.mrf.mxu0
        %v3886 = vadd.f32 %v3780, %v3885
        %3887 = vmatmul.f32.gmra.mxu0 %v3820
        %v3888 = vpop.f32.mrf.mxu0
        %v3889 = vadd.f32 %v3780, %v3888
        %3890 = vmatmul.f32.gmra.mxu0 %v3823
        %v3891 = vpop.f32.mrf.mxu0
        %v3892 = vadd.f32 %v3780, %v3891
        %3893 = vmatmul.f32.gmra.mxu0 %v3826
        %v3894 = vpop.f32.mrf.mxu0
        %v3895 = vadd.f32 %v3780, %v3894
        %3896 = vmatmul.f32.gmra.mxu0 %v3829
        %v3897 = vpop.f32.mrf.mxu0
        %v3898 = vadd.f32 %v3780, %v3897
        %3899 = vdwg.mxu0
        %v3900 = vmul.f32 %v3853, 0.5
        %v3901 = vmul.f32 %v3856, 0.5
        %v3902 = vmul.f32 %v3859, 0.5
        %v3903 = vmul.f32 %v3862, 0.5
        %v3904 = vmul.f32 %v3865, 0.5
        %v3905 = vmul.f32 %v3868, 0.5
        %v3906 = vmul.f32 %v3871, 0.5
        %v3907 = vmul.f32 %v3874, 0.5
        %v3908 = vmul.f32 %v3877, 0.5
        %v3909 = vmul.f32 %v3880, 0.5
        %v3910 = vmul.f32 %v3883, 0.5
        %v3911 = vmul.f32 %v3886, 0.5
        %v3912 = vmul.f32 %v3889, 0.5
        %v3913 = vmul.f32 %v3892, 0.5
        %v3914 = vmul.f32 %v3895, 0.5
        %v3915 = vmul.f32 %v3898, 0.5
        %v3916 = vmul.f32 %v3853, 0.70710677
        %v3917 = vmul.f32 %v3856, 0.70710677
        %v3918 = vmul.f32 %v3859, 0.70710677
        %v3919 = vmul.f32 %v3862, 0.70710677
        %v3920 = vmul.f32 %v3865, 0.70710677
        %v3921 = vmul.f32 %v3868, 0.70710677
        %v3922 = vmul.f32 %v3871, 0.70710677
        %v3923 = vmul.f32 %v3874, 0.70710677
        %v3924 = vmul.f32 %v3877, 0.70710677
        %v3925 = vmul.f32 %v3880, 0.70710677
        %v3926 = vmul.f32 %v3883, 0.70710677
        %v3927 = vmul.f32 %v3886, 0.70710677
        %v3928 = vmul.f32 %v3889, 0.70710677
        %v3929 = vmul.f32 %v3892, 0.70710677
        %v3930 = vmul.f32 %v3895, 0.70710677
        %v3931 = vmul.f32 %v3898, 0.70710677
        %v3932 = vmul.f32 %v3916, %v3916
        %v3933 = vmin.f32 16.0, %v3932
        %v3934 = vmul.f32 %v3933, 2.1237322e-06
        %v3935 = vadd.f32 %v3934, 0.00028619796
        %v3936 = vmul.f32 %v3933, %v3935
        %v3937 = vadd.f32 %v3936, 0.0036580483
        %v3938 = vmul.f32 %v3933, %v3937
        %v3939 = vadd.f32 %v3938, 0.05243302
        %v3940 = vmul.f32 %v3933, %v3939
        %v3941 = vadd.f32 %v3940, 0.18741608
        %v3942 = vmul.f32 %v3933, %v3941
        %v3943 = vadd.f32 %v3942, 1.1283791
        %v3944 = vmul.f32 %v3916, %v3943
        %v3945 = vmul.f32 %v3933, 3.8918573e-05
        %v3946 = vadd.f32 %v3945, 0.001143296
        %v3947 = vmul.f32 %v3933, %v3946
        %v3948 = vadd.f32 %v3947, 0.014752088
        %v3949 = vmul.f32 %v3933, %v3948
        %v3950 = vadd.f32 %v3949, 0.112945676
        %v3951 = vmul.f32 %v3933, %v3950
        %v3952 = vadd.f32 %v3951, 0.4994258
        %v3953 = vmul.f32 %v3933, %v3952
        %v3954 = vadd.f32 %v3953, 1.0
        %v3955 = vrcp.pop %v3954
        %v3956 = vmul.f32 %v3954, %v3955
        %v3957 = vsub.f32 1.0, %v3956
        %v3958 = vmul.f32 %v3955, %v3957
        %v3959 = vadd.f32 %v3955, %v3958
        %vm3960 = vweird.f32 %v3954
        %vm3961 = vweird.f32 %v3955
        %vm3962 = vmor %vm3960, %vm3961
        %v3963 = vsel %vm3962, %v3955, %v3959
        %v3964 = vand.u32 2147483647, %v3954
        %vm3965 = vcmp.eq.f32.partialorder %v3964, 8.507059e+37
        %v3966 = vand.u32 %v3954, 2147483648
        %v3967 = vor.u32 1.1754944e-38, %v3966
        %v3968 = vsel %vm3965, %v3967, %v3963
        %v3969 = vmul.f32 %v3944, %v3968
        %v3970 = vmin.f32 %v3969, 1.0
        %v3971 = vmax.f32 %v3970, -1.0
        %v3972 = vmul.f32 %v3917, %v3917
        %v3973 = vmin.f32 16.0, %v3972
        %v3974 = vmul.f32 %v3973, 2.1237322e-06
        %v3975 = vadd.f32 %v3974, 0.00028619796
        %v3976 = vmul.f32 %v3973, %v3975
        %v3977 = vadd.f32 %v3976, 0.0036580483
        %v3978 = vmul.f32 %v3973, %v3977
        %v3979 = vadd.f32 %v3978, 0.05243302
        %v3980 = vmul.f32 %v3973, %v3979
        %v3981 = vadd.f32 %v3980, 0.18741608
        %v3982 = vmul.f32 %v3973, %v3981
        %v3983 = vadd.f32 %v3982, 1.1283791
        %v3984 = vmul.f32 %v3917, %v3983
        %v3985 = vmul.f32 %v3973, 3.8918573e-05
        %v3986 = vadd.f32 %v3985, 0.001143296
        %v3987 = vmul.f32 %v3973, %v3986
        %v3988 = vadd.f32 %v3987, 0.014752088
        %v3989 = vmul.f32 %v3973, %v3988
        %v3990 = vadd.f32 %v3989, 0.112945676
        %v3991 = vmul.f32 %v3973, %v3990
        %v3992 = vadd.f32 %v3991, 0.4994258
        %v3993 = vmul.f32 %v3973, %v3992
        %v3994 = vadd.f32 %v3993, 1.0
        %v3995 = vrcp.pop %v3994
        %v3996 = vmul.f32 %v3994, %v3995
        %v3997 = vsub.f32 1.0, %v3996
        %v3998 = vmul.f32 %v3995, %v3997
        %v3999 = vadd.f32 %v3995, %v3998
        %vm4000 = vweird.f32 %v3994
        %vm4001 = vweird.f32 %v3995
        %vm4002 = vmor %vm4000, %vm4001
        %v4003 = vsel %vm4002, %v3995, %v3999
        %v4004 = vand.u32 2147483647, %v3994
        %vm4005 = vcmp.eq.f32.partialorder %v4004, 8.507059e+37
        %v4006 = vand.u32 %v3994, 2147483648
        %v4007 = vor.u32 1.1754944e-38, %v4006
        %v4008 = vsel %vm4005, %v4007, %v4003
        %v4009 = vmul.f32 %v3984, %v4008
        %v4010 = vmin.f32 %v4009, 1.0
        %v4011 = vmax.f32 %v4010, -1.0
        %v4012 = vmul.f32 %v3918, %v3918
        %v4013 = vmin.f32 16.0, %v4012
        %v4014 = vmul.f32 %v4013, 2.1237322e-06
        %v4015 = vadd.f32 %v4014, 0.00028619796
        %v4016 = vmul.f32 %v4013, %v4015
        %v4017 = vadd.f32 %v4016, 0.0036580483
        %v4018 = vmul.f32 %v4013, %v4017
        %v4019 = vadd.f32 %v4018, 0.05243302
        %v4020 = vmul.f32 %v4013, %v4019
        %v4021 = vadd.f32 %v4020, 0.18741608
        %v4022 = vmul.f32 %v4013, %v4021
        %v4023 = vadd.f32 %v4022, 1.1283791
        %v4024 = vmul.f32 %v3918, %v4023
        %v4025 = vmul.f32 %v4013, 3.8918573e-05
        %v4026 = vadd.f32 %v4025, 0.001143296
        %v4027 = vmul.f32 %v4013, %v4026
        %v4028 = vadd.f32 %v4027, 0.014752088
        %v4029 = vmul.f32 %v4013, %v4028
        %v4030 = vadd.f32 %v4029, 0.112945676
        %v4031 = vmul.f32 %v4013, %v4030
        %v4032 = vadd.f32 %v4031, 0.4994258
        %v4033 = vmul.f32 %v4013, %v4032
        %v4034 = vadd.f32 %v4033, 1.0
        %v4035 = vrcp.pop %v4034
        %v4036 = vmul.f32 %v4034, %v4035
        %v4037 = vsub.f32 1.0, %v4036
        %v4038 = vmul.f32 %v4035, %v4037
        %v4039 = vadd.f32 %v4035, %v4038
        %vm4040 = vweird.f32 %v4034
        %vm4041 = vweird.f32 %v4035
        %vm4042 = vmor %vm4040, %vm4041
        %v4043 = vsel %vm4042, %v4035, %v4039
        %v4044 = vand.u32 2147483647, %v4034
        %vm4045 = vcmp.eq.f32.partialorder %v4044, 8.507059e+37
        %v4046 = vand.u32 %v4034, 2147483648
        %v4047 = vor.u32 1.1754944e-38, %v4046
        %v4048 = vsel %vm4045, %v4047, %v4043
        %v4049 = vmul.f32 %v4024, %v4048
        %v4050 = vmin.f32 %v4049, 1.0
        %v4051 = vmax.f32 %v4050, -1.0
        %v4052 = vmul.f32 %v3919, %v3919
        %v4053 = vmin.f32 16.0, %v4052
        %v4054 = vmul.f32 %v4053, 2.1237322e-06
        %v4055 = vadd.f32 %v4054, 0.00028619796
        %v4056 = vmul.f32 %v4053, %v4055
        %v4057 = vadd.f32 %v4056, 0.0036580483
        %v4058 = vmul.f32 %v4053, %v4057
        %v4059 = vadd.f32 %v4058, 0.05243302
        %v4060 = vmul.f32 %v4053, %v4059
        %v4061 = vadd.f32 %v4060, 0.18741608
        %v4062 = vmul.f32 %v4053, %v4061
        %v4063 = vadd.f32 %v4062, 1.1283791
        %v4064 = vmul.f32 %v3919, %v4063
        %v4065 = vmul.f32 %v4053, 3.8918573e-05
        %v4066 = vadd.f32 %v4065, 0.001143296
        %v4067 = vmul.f32 %v4053, %v4066
        %v4068 = vadd.f32 %v4067, 0.014752088
        %v4069 = vmul.f32 %v4053, %v4068
        %v4070 = vadd.f32 %v4069, 0.112945676
        %v4071 = vmul.f32 %v4053, %v4070
        %v4072 = vadd.f32 %v4071, 0.4994258
        %v4073 = vmul.f32 %v4053, %v4072
        %v4074 = vadd.f32 %v4073, 1.0
        %v4075 = vrcp.pop %v4074
        %v4076 = vmul.f32 %v4074, %v4075
        %v4077 = vsub.f32 1.0, %v4076
        %v4078 = vmul.f32 %v4075, %v4077
        %v4079 = vadd.f32 %v4075, %v4078
        %vm4080 = vweird.f32 %v4074
        %vm4081 = vweird.f32 %v4075
        %vm4082 = vmor %vm4080, %vm4081
        %v4083 = vsel %vm4082, %v4075, %v4079
        %v4084 = vand.u32 2147483647, %v4074
        %vm4085 = vcmp.eq.f32.partialorder %v4084, 8.507059e+37
        %v4086 = vand.u32 %v4074, 2147483648
        %v4087 = vor.u32 1.1754944e-38, %v4086
        %v4088 = vsel %vm4085, %v4087, %v4083
        %v4089 = vmul.f32 %v4064, %v4088
        %v4090 = vmin.f32 %v4089, 1.0
        %v4091 = vmax.f32 %v4090, -1.0
        %v4092 = vmul.f32 %v3920, %v3920
        %v4093 = vmin.f32 16.0, %v4092
        %v4094 = vmul.f32 %v4093, 2.1237322e-06
        %v4095 = vadd.f32 %v4094, 0.00028619796
        %v4096 = vmul.f32 %v4093, %v4095
        %v4097 = vadd.f32 %v4096, 0.0036580483
        %v4098 = vmul.f32 %v4093, %v4097
        %v4099 = vadd.f32 %v4098, 0.05243302
        %v4100 = vmul.f32 %v4093, %v4099
        %v4101 = vadd.f32 %v4100, 0.18741608
        %v4102 = vmul.f32 %v4093, %v4101
        %v4103 = vadd.f32 %v4102, 1.1283791
        %v4104 = vmul.f32 %v3920, %v4103
        %v4105 = vmul.f32 %v4093, 3.8918573e-05
        %v4106 = vadd.f32 %v4105, 0.001143296
        %v4107 = vmul.f32 %v4093, %v4106
        %v4108 = vadd.f32 %v4107, 0.014752088
        %v4109 = vmul.f32 %v4093, %v4108
        %v4110 = vadd.f32 %v4109, 0.112945676
        %v4111 = vmul.f32 %v4093, %v4110
        %v4112 = vadd.f32 %v4111, 0.4994258
        %v4113 = vmul.f32 %v4093, %v4112
        %v4114 = vadd.f32 %v4113, 1.0
        %v4115 = vrcp.pop %v4114
        %v4116 = vmul.f32 %v4114, %v4115
        %v4117 = vsub.f32 1.0, %v4116
        %v4118 = vmul.f32 %v4115, %v4117
        %v4119 = vadd.f32 %v4115, %v4118
        %vm4120 = vweird.f32 %v4114
        %vm4121 = vweird.f32 %v4115
        %vm4122 = vmor %vm4120, %vm4121
        %v4123 = vsel %vm4122, %v4115, %v4119
        %v4124 = vand.u32 2147483647, %v4114
        %vm4125 = vcmp.eq.f32.partialorder %v4124, 8.507059e+37
        %v4126 = vand.u32 %v4114, 2147483648
        %v4127 = vor.u32 1.1754944e-38, %v4126
        %v4128 = vsel %vm4125, %v4127, %v4123
        %v4129 = vmul.f32 %v4104, %v4128
        %v4130 = vmin.f32 %v4129, 1.0
        %v4131 = vmax.f32 %v4130, -1.0
        %v4132 = vmul.f32 %v3921, %v3921
        %v4133 = vmin.f32 16.0, %v4132
        %v4134 = vmul.f32 %v4133, 2.1237322e-06
        %v4135 = vadd.f32 %v4134, 0.00028619796
        %v4136 = vmul.f32 %v4133, %v4135
        %v4137 = vadd.f32 %v4136, 0.0036580483
        %v4138 = vmul.f32 %v4133, %v4137
        %v4139 = vadd.f32 %v4138, 0.05243302
        %v4140 = vmul.f32 %v4133, %v4139
        %v4141 = vadd.f32 %v4140, 0.18741608
        %v4142 = vmul.f32 %v4133, %v4141
        %v4143 = vadd.f32 %v4142, 1.1283791
        %v4144 = vmul.f32 %v3921, %v4143
        %v4145 = vmul.f32 %v4133, 3.8918573e-05
        %v4146 = vadd.f32 %v4145, 0.001143296
        %v4147 = vmul.f32 %v4133, %v4146
        %v4148 = vadd.f32 %v4147, 0.014752088
        %v4149 = vmul.f32 %v4133, %v4148
        %v4150 = vadd.f32 %v4149, 0.112945676
        %v4151 = vmul.f32 %v4133, %v4150
        %v4152 = vadd.f32 %v4151, 0.4994258
        %v4153 = vmul.f32 %v4133, %v4152
        %v4154 = vadd.f32 %v4153, 1.0
        %v4155 = vrcp.pop %v4154
        %v4156 = vmul.f32 %v4154, %v4155
        %v4157 = vsub.f32 1.0, %v4156
        %v4158 = vmul.f32 %v4155, %v4157
        %v4159 = vadd.f32 %v4155, %v4158
        %vm4160 = vweird.f32 %v4154
        %vm4161 = vweird.f32 %v4155
        %vm4162 = vmor %vm4160, %vm4161
        %v4163 = vsel %vm4162, %v4155, %v4159
        %v4164 = vand.u32 2147483647, %v4154
        %vm4165 = vcmp.eq.f32.partialorder %v4164, 8.507059e+37
        %v4166 = vand.u32 %v4154, 2147483648
        %v4167 = vor.u32 1.1754944e-38, %v4166
        %v4168 = vsel %vm4165, %v4167, %v4163
        %v4169 = vmul.f32 %v4144, %v4168
        %v4170 = vmin.f32 %v4169, 1.0
        %v4171 = vmax.f32 %v4170, -1.0
        %v4172 = vmul.f32 %v3922, %v3922
        %v4173 = vmin.f32 16.0, %v4172
        %v4174 = vmul.f32 %v4173, 2.1237322e-06
        %v4175 = vadd.f32 %v4174, 0.00028619796
        %v4176 = vmul.f32 %v4173, %v4175
        %v4177 = vadd.f32 %v4176, 0.0036580483
        %v4178 = vmul.f32 %v4173, %v4177
        %v4179 = vadd.f32 %v4178, 0.05243302
        %v4180 = vmul.f32 %v4173, %v4179
        %v4181 = vadd.f32 %v4180, 0.18741608
        %v4182 = vmul.f32 %v4173, %v4181
        %v4183 = vadd.f32 %v4182, 1.1283791
        %v4184 = vmul.f32 %v3922, %v4183
        %v4185 = vmul.f32 %v4173, 3.8918573e-05
        %v4186 = vadd.f32 %v4185, 0.001143296
        %v4187 = vmul.f32 %v4173, %v4186
        %v4188 = vadd.f32 %v4187, 0.014752088
        %v4189 = vmul.f32 %v4173, %v4188
        %v4190 = vadd.f32 %v4189, 0.112945676
        %v4191 = vmul.f32 %v4173, %v4190
        %v4192 = vadd.f32 %v4191, 0.4994258
        %v4193 = vmul.f32 %v4173, %v4192
        %v4194 = vadd.f32 %v4193, 1.0
        %v4195 = vrcp.pop %v4194
        %v4196 = vmul.f32 %v4194, %v4195
        %v4197 = vsub.f32 1.0, %v4196
        %v4198 = vmul.f32 %v4195, %v4197
        %v4199 = vadd.f32 %v4195, %v4198
        %vm4200 = vweird.f32 %v4194
        %vm4201 = vweird.f32 %v4195
        %vm4202 = vmor %vm4200, %vm4201
        %v4203 = vsel %vm4202, %v4195, %v4199
        %v4204 = vand.u32 2147483647, %v4194
        %vm4205 = vcmp.eq.f32.partialorder %v4204, 8.507059e+37
        %v4206 = vand.u32 %v4194, 2147483648
        %v4207 = vor.u32 1.1754944e-38, %v4206
        %v4208 = vsel %vm4205, %v4207, %v4203
        %v4209 = vmul.f32 %v4184, %v4208
        %v4210 = vmin.f32 %v4209, 1.0
        %v4211 = vmax.f32 %v4210, -1.0
        %v4212 = vmul.f32 %v3923, %v3923
        %v4213 = vmin.f32 16.0, %v4212
        %v4214 = vmul.f32 %v4213, 2.1237322e-06
        %v4215 = vadd.f32 %v4214, 0.00028619796
        %v4216 = vmul.f32 %v4213, %v4215
        %v4217 = vadd.f32 %v4216, 0.0036580483
        %v4218 = vmul.f32 %v4213, %v4217
        %v4219 = vadd.f32 %v4218, 0.05243302
        %v4220 = vmul.f32 %v4213, %v4219
        %v4221 = vadd.f32 %v4220, 0.18741608
        %v4222 = vmul.f32 %v4213, %v4221
        %v4223 = vadd.f32 %v4222, 1.1283791
        %v4224 = vmul.f32 %v3923, %v4223
        %v4225 = vmul.f32 %v4213, 3.8918573e-05
        %v4226 = vadd.f32 %v4225, 0.001143296
        %v4227 = vmul.f32 %v4213, %v4226
        %v4228 = vadd.f32 %v4227, 0.014752088
        %v4229 = vmul.f32 %v4213, %v4228
        %v4230 = vadd.f32 %v4229, 0.112945676
        %v4231 = vmul.f32 %v4213, %v4230
        %v4232 = vadd.f32 %v4231, 0.4994258
        %v4233 = vmul.f32 %v4213, %v4232
        %v4234 = vadd.f32 %v4233, 1.0
        %v4235 = vrcp.pop %v4234
        %v4236 = vmul.f32 %v4234, %v4235
        %v4237 = vsub.f32 1.0, %v4236
        %v4238 = vmul.f32 %v4235, %v4237
        %v4239 = vadd.f32 %v4235, %v4238
        %vm4240 = vweird.f32 %v4234
        %vm4241 = vweird.f32 %v4235
        %vm4242 = vmor %vm4240, %vm4241
        %v4243 = vsel %vm4242, %v4235, %v4239
        %v4244 = vand.u32 2147483647, %v4234
        %vm4245 = vcmp.eq.f32.partialorder %v4244, 8.507059e+37
        %v4246 = vand.u32 %v4234, 2147483648
        %v4247 = vor.u32 1.1754944e-38, %v4246
        %v4248 = vsel %vm4245, %v4247, %v4243
        %v4249 = vmul.f32 %v4224, %v4248
        %v4250 = vmin.f32 %v4249, 1.0
        %v4251 = vmax.f32 %v4250, -1.0
        %v4252 = vmul.f32 %v3924, %v3924
        %v4253 = vmin.f32 16.0, %v4252
        %v4254 = vmul.f32 %v4253, 2.1237322e-06
        %v4255 = vadd.f32 %v4254, 0.00028619796
        %v4256 = vmul.f32 %v4253, %v4255
        %v4257 = vadd.f32 %v4256, 0.0036580483
        %v4258 = vmul.f32 %v4253, %v4257
        %v4259 = vadd.f32 %v4258, 0.05243302
        %v4260 = vmul.f32 %v4253, %v4259
        %v4261 = vadd.f32 %v4260, 0.18741608
        %v4262 = vmul.f32 %v4253, %v4261
        %v4263 = vadd.f32 %v4262, 1.1283791
        %v4264 = vmul.f32 %v3924, %v4263
        %v4265 = vmul.f32 %v4253, 3.8918573e-05
        %v4266 = vadd.f32 %v4265, 0.001143296
        %v4267 = vmul.f32 %v4253, %v4266
        %v4268 = vadd.f32 %v4267, 0.014752088
        %v4269 = vmul.f32 %v4253, %v4268
        %v4270 = vadd.f32 %v4269, 0.112945676
        %v4271 = vmul.f32 %v4253, %v4270
        %v4272 = vadd.f32 %v4271, 0.4994258
        %v4273 = vmul.f32 %v4253, %v4272
        %v4274 = vadd.f32 %v4273, 1.0
        %v4275 = vrcp.pop %v4274
        %v4276 = vmul.f32 %v4274, %v4275
        %v4277 = vsub.f32 1.0, %v4276
        %v4278 = vmul.f32 %v4275, %v4277
        %v4279 = vadd.f32 %v4275, %v4278
        %vm4280 = vweird.f32 %v4274
        %vm4281 = vweird.f32 %v4275
        %vm4282 = vmor %vm4280, %vm4281
        %v4283 = vsel %vm4282, %v4275, %v4279
        %v4284 = vand.u32 2147483647, %v4274
        %vm4285 = vcmp.eq.f32.partialorder %v4284, 8.507059e+37
        %v4286 = vand.u32 %v4274, 2147483648
        %v4287 = vor.u32 1.1754944e-38, %v4286
        %v4288 = vsel %vm4285, %v4287, %v4283
        %v4289 = vmul.f32 %v4264, %v4288
        %v4290 = vmin.f32 %v4289, 1.0
        %v4291 = vmax.f32 %v4290, -1.0
        %v4292 = vmul.f32 %v3925, %v3925
        %v4293 = vmin.f32 16.0, %v4292
        %v4294 = vmul.f32 %v4293, 2.1237322e-06
        %v4295 = vadd.f32 %v4294, 0.00028619796
        %v4296 = vmul.f32 %v4293, %v4295
        %v4297 = vadd.f32 %v4296, 0.0036580483
        %v4298 = vmul.f32 %v4293, %v4297
        %v4299 = vadd.f32 %v4298, 0.05243302
        %v4300 = vmul.f32 %v4293, %v4299
        %v4301 = vadd.f32 %v4300, 0.18741608
        %v4302 = vmul.f32 %v4293, %v4301
        %v4303 = vadd.f32 %v4302, 1.1283791
        %v4304 = vmul.f32 %v3925, %v4303
        %v4305 = vmul.f32 %v4293, 3.8918573e-05
        %v4306 = vadd.f32 %v4305, 0.001143296
        %v4307 = vmul.f32 %v4293, %v4306
        %v4308 = vadd.f32 %v4307, 0.014752088
        %v4309 = vmul.f32 %v4293, %v4308
        %v4310 = vadd.f32 %v4309, 0.112945676
        %v4311 = vmul.f32 %v4293, %v4310
        %v4312 = vadd.f32 %v4311, 0.4994258
        %v4313 = vmul.f32 %v4293, %v4312
        %v4314 = vadd.f32 %v4313, 1.0
        %v4315 = vrcp.pop %v4314
        %v4316 = vmul.f32 %v4314, %v4315
        %v4317 = vsub.f32 1.0, %v4316
        %v4318 = vmul.f32 %v4315, %v4317
        %v4319 = vadd.f32 %v4315, %v4318
        %vm4320 = vweird.f32 %v4314
        %vm4321 = vweird.f32 %v4315
        %vm4322 = vmor %vm4320, %vm4321
        %v4323 = vsel %vm4322, %v4315, %v4319
        %v4324 = vand.u32 2147483647, %v4314
        %vm4325 = vcmp.eq.f32.partialorder %v4324, 8.507059e+37
        %v4326 = vand.u32 %v4314, 2147483648
        %v4327 = vor.u32 1.1754944e-38, %v4326
        %v4328 = vsel %vm4325, %v4327, %v4323
        %v4329 = vmul.f32 %v4304, %v4328
        %v4330 = vmin.f32 %v4329, 1.0
        %v4331 = vmax.f32 %v4330, -1.0
        %v4332 = vmul.f32 %v3926, %v3926
        %v4333 = vmin.f32 16.0, %v4332
        %v4334 = vmul.f32 %v4333, 2.1237322e-06
        %v4335 = vadd.f32 %v4334, 0.00028619796
        %v4336 = vmul.f32 %v4333, %v4335
        %v4337 = vadd.f32 %v4336, 0.0036580483
        %v4338 = vmul.f32 %v4333, %v4337
        %v4339 = vadd.f32 %v4338, 0.05243302
        %v4340 = vmul.f32 %v4333, %v4339
        %v4341 = vadd.f32 %v4340, 0.18741608
        %v4342 = vmul.f32 %v4333, %v4341
        %v4343 = vadd.f32 %v4342, 1.1283791
        %v4344 = vmul.f32 %v3926, %v4343
        %v4345 = vmul.f32 %v4333, 3.8918573e-05
        %v4346 = vadd.f32 %v4345, 0.001143296
        %v4347 = vmul.f32 %v4333, %v4346
        %v4348 = vadd.f32 %v4347, 0.014752088
        %v4349 = vmul.f32 %v4333, %v4348
        %v4350 = vadd.f32 %v4349, 0.112945676
        %v4351 = vmul.f32 %v4333, %v4350
        %v4352 = vadd.f32 %v4351, 0.4994258
        %v4353 = vmul.f32 %v4333, %v4352
        %v4354 = vadd.f32 %v4353, 1.0
        %v4355 = vrcp.pop %v4354
        %v4356 = vmul.f32 %v4354, %v4355
        %v4357 = vsub.f32 1.0, %v4356
        %v4358 = vmul.f32 %v4355, %v4357
        %v4359 = vadd.f32 %v4355, %v4358
        %vm4360 = vweird.f32 %v4354
        %vm4361 = vweird.f32 %v4355
        %vm4362 = vmor %vm4360, %vm4361
        %v4363 = vsel %vm4362, %v4355, %v4359
        %v4364 = vand.u32 2147483647, %v4354
        %vm4365 = vcmp.eq.f32.partialorder %v4364, 8.507059e+37
        %v4366 = vand.u32 %v4354, 2147483648
        %v4367 = vor.u32 1.1754944e-38, %v4366
        %v4368 = vsel %vm4365, %v4367, %v4363
        %v4369 = vmul.f32 %v4344, %v4368
        %v4370 = vmin.f32 %v4369, 1.0
        %v4371 = vmax.f32 %v4370, -1.0
        %v4372 = vmul.f32 %v3927, %v3927
        %v4373 = vmin.f32 16.0, %v4372
        %v4374 = vmul.f32 %v4373, 2.1237322e-06
        %v4375 = vadd.f32 %v4374, 0.00028619796
        %v4376 = vmul.f32 %v4373, %v4375
        %v4377 = vadd.f32 %v4376, 0.0036580483
        %v4378 = vmul.f32 %v4373, %v4377
        %v4379 = vadd.f32 %v4378, 0.05243302
        %v4380 = vmul.f32 %v4373, %v4379
        %v4381 = vadd.f32 %v4380, 0.18741608
        %v4382 = vmul.f32 %v4373, %v4381
        %v4383 = vadd.f32 %v4382, 1.1283791
        %v4384 = vmul.f32 %v3927, %v4383
        %v4385 = vmul.f32 %v4373, 3.8918573e-05
        %v4386 = vadd.f32 %v4385, 0.001143296
        %v4387 = vmul.f32 %v4373, %v4386
        %v4388 = vadd.f32 %v4387, 0.014752088
        %v4389 = vmul.f32 %v4373, %v4388
        %v4390 = vadd.f32 %v4389, 0.112945676
        %v4391 = vmul.f32 %v4373, %v4390
        %v4392 = vadd.f32 %v4391, 0.4994258
        %v4393 = vmul.f32 %v4373, %v4392
        %v4394 = vadd.f32 %v4393, 1.0
        %v4395 = vrcp.pop %v4394
        %v4396 = vmul.f32 %v4394, %v4395
        %v4397 = vsub.f32 1.0, %v4396
        %v4398 = vmul.f32 %v4395, %v4397
        %v4399 = vadd.f32 %v4395, %v4398
        %vm4400 = vweird.f32 %v4394
        %vm4401 = vweird.f32 %v4395
        %vm4402 = vmor %vm4400, %vm4401
        %v4403 = vsel %vm4402, %v4395, %v4399
        %v4404 = vand.u32 2147483647, %v4394
        %vm4405 = vcmp.eq.f32.partialorder %v4404, 8.507059e+37
        %v4406 = vand.u32 %v4394, 2147483648
        %v4407 = vor.u32 1.1754944e-38, %v4406
        %v4408 = vsel %vm4405, %v4407, %v4403
        %v4409 = vmul.f32 %v4384, %v4408
        %v4410 = vmin.f32 %v4409, 1.0
        %v4411 = vmax.f32 %v4410, -1.0
        %v4412 = vmul.f32 %v3928, %v3928
        %v4413 = vmin.f32 16.0, %v4412
        %v4414 = vmul.f32 %v4413, 2.1237322e-06
        %v4415 = vadd.f32 %v4414, 0.00028619796
        %v4416 = vmul.f32 %v4413, %v4415
        %v4417 = vadd.f32 %v4416, 0.0036580483
        %v4418 = vmul.f32 %v4413, %v4417
        %v4419 = vadd.f32 %v4418, 0.05243302
        %v4420 = vmul.f32 %v4413, %v4419
        %v4421 = vadd.f32 %v4420, 0.18741608
        %v4422 = vmul.f32 %v4413, %v4421
        %v4423 = vadd.f32 %v4422, 1.1283791
        %v4424 = vmul.f32 %v3928, %v4423
        %v4425 = vmul.f32 %v4413, 3.8918573e-05
        %v4426 = vadd.f32 %v4425, 0.001143296
        %v4427 = vmul.f32 %v4413, %v4426
        %v4428 = vadd.f32 %v4427, 0.014752088
        %v4429 = vmul.f32 %v4413, %v4428
        %v4430 = vadd.f32 %v4429, 0.112945676
        %v4431 = vmul.f32 %v4413, %v4430
        %v4432 = vadd.f32 %v4431, 0.4994258
        %v4433 = vmul.f32 %v4413, %v4432
        %v4434 = vadd.f32 %v4433, 1.0
        %v4435 = vrcp.pop %v4434
        %v4436 = vmul.f32 %v4434, %v4435
        %v4437 = vsub.f32 1.0, %v4436
        %v4438 = vmul.f32 %v4435, %v4437
        %v4439 = vadd.f32 %v4435, %v4438
        %vm4440 = vweird.f32 %v4434
        %vm4441 = vweird.f32 %v4435
        %vm4442 = vmor %vm4440, %vm4441
        %v4443 = vsel %vm4442, %v4435, %v4439
        %v4444 = vand.u32 2147483647, %v4434
        %vm4445 = vcmp.eq.f32.partialorder %v4444, 8.507059e+37
        %v4446 = vand.u32 %v4434, 2147483648
        %v4447 = vor.u32 1.1754944e-38, %v4446
        %v4448 = vsel %vm4445, %v4447, %v4443
        %v4449 = vmul.f32 %v4424, %v4448
        %v4450 = vmin.f32 %v4449, 1.0
        %v4451 = vmax.f32 %v4450, -1.0
        %v4452 = vmul.f32 %v3929, %v3929
        %v4453 = vmin.f32 16.0, %v4452
        %v4454 = vmul.f32 %v4453, 2.1237322e-06
        %v4455 = vadd.f32 %v4454, 0.00028619796
        %v4456 = vmul.f32 %v4453, %v4455
        %v4457 = vadd.f32 %v4456, 0.0036580483
        %v4458 = vmul.f32 %v4453, %v4457
        %v4459 = vadd.f32 %v4458, 0.05243302
        %v4460 = vmul.f32 %v4453, %v4459
        %v4461 = vadd.f32 %v4460, 0.18741608
        %v4462 = vmul.f32 %v4453, %v4461
        %v4463 = vadd.f32 %v4462, 1.1283791
        %v4464 = vmul.f32 %v3929, %v4463
        %v4465 = vmul.f32 %v4453, 3.8918573e-05
        %v4466 = vadd.f32 %v4465, 0.001143296
        %v4467 = vmul.f32 %v4453, %v4466
        %v4468 = vadd.f32 %v4467, 0.014752088
        %v4469 = vmul.f32 %v4453, %v4468
        %v4470 = vadd.f32 %v4469, 0.112945676
        %v4471 = vmul.f32 %v4453, %v4470
        %v4472 = vadd.f32 %v4471, 0.4994258
        %v4473 = vmul.f32 %v4453, %v4472
        %v4474 = vadd.f32 %v4473, 1.0
        %v4475 = vrcp.pop %v4474
        %v4476 = vmul.f32 %v4474, %v4475
        %v4477 = vsub.f32 1.0, %v4476
        %v4478 = vmul.f32 %v4475, %v4477
        %v4479 = vadd.f32 %v4475, %v4478
        %vm4480 = vweird.f32 %v4474
        %vm4481 = vweird.f32 %v4475
        %vm4482 = vmor %vm4480, %vm4481
        %v4483 = vsel %vm4482, %v4475, %v4479
        %v4484 = vand.u32 2147483647, %v4474
        %vm4485 = vcmp.eq.f32.partialorder %v4484, 8.507059e+37
        %v4486 = vand.u32 %v4474, 2147483648
        %v4487 = vor.u32 1.1754944e-38, %v4486
        %v4488 = vsel %vm4485, %v4487, %v4483
        %v4489 = vmul.f32 %v4464, %v4488
        %v4490 = vmin.f32 %v4489, 1.0
        %v4491 = vmax.f32 %v4490, -1.0
        %v4492 = vmul.f32 %v3930, %v3930
        %v4493 = vmin.f32 16.0, %v4492
        %v4494 = vmul.f32 %v4493, 2.1237322e-06
        %v4495 = vadd.f32 %v4494, 0.00028619796
        %v4496 = vmul.f32 %v4493, %v4495
        %v4497 = vadd.f32 %v4496, 0.0036580483
        %v4498 = vmul.f32 %v4493, %v4497
        %v4499 = vadd.f32 %v4498, 0.05243302
        %v4500 = vmul.f32 %v4493, %v4499
        %v4501 = vadd.f32 %v4500, 0.18741608
        %v4502 = vmul.f32 %v4493, %v4501
        %v4503 = vadd.f32 %v4502, 1.1283791
        %v4504 = vmul.f32 %v3930, %v4503
        %v4505 = vmul.f32 %v4493, 3.8918573e-05
        %v4506 = vadd.f32 %v4505, 0.001143296
        %v4507 = vmul.f32 %v4493, %v4506
        %v4508 = vadd.f32 %v4507, 0.014752088
        %v4509 = vmul.f32 %v4493, %v4508
        %v4510 = vadd.f32 %v4509, 0.112945676
        %v4511 = vmul.f32 %v4493, %v4510
        %v4512 = vadd.f32 %v4511, 0.4994258
        %v4513 = vmul.f32 %v4493, %v4512
        %v4514 = vadd.f32 %v4513, 1.0
        %v4515 = vrcp.pop %v4514
        %v4516 = vmul.f32 %v4514, %v4515
        %v4517 = vsub.f32 1.0, %v4516
        %v4518 = vmul.f32 %v4515, %v4517
        %v4519 = vadd.f32 %v4515, %v4518
        %vm4520 = vweird.f32 %v4514
        %vm4521 = vweird.f32 %v4515
        %vm4522 = vmor %vm4520, %vm4521
        %v4523 = vsel %vm4522, %v4515, %v4519
        %v4524 = vand.u32 2147483647, %v4514
        %vm4525 = vcmp.eq.f32.partialorder %v4524, 8.507059e+37
        %v4526 = vand.u32 %v4514, 2147483648
        %v4527 = vor.u32 1.1754944e-38, %v4526
        %v4528 = vsel %vm4525, %v4527, %v4523
        %v4529 = vmul.f32 %v4504, %v4528
        %v4530 = vmin.f32 %v4529, 1.0
        %v4531 = vmax.f32 %v4530, -1.0
        %v4532 = vmul.f32 %v3931, %v3931
        %v4533 = vmin.f32 16.0, %v4532
        %v4534 = vmul.f32 %v4533, 2.1237322e-06
        %v4535 = vadd.f32 %v4534, 0.00028619796
        %v4536 = vmul.f32 %v4533, %v4535
        %v4537 = vadd.f32 %v4536, 0.0036580483
        %v4538 = vmul.f32 %v4533, %v4537
        %v4539 = vadd.f32 %v4538, 0.05243302
        %v4540 = vmul.f32 %v4533, %v4539
        %v4541 = vadd.f32 %v4540, 0.18741608
        %v4542 = vmul.f32 %v4533, %v4541
        %v4543 = vadd.f32 %v4542, 1.1283791
        %v4544 = vmul.f32 %v3931, %v4543
        %v4545 = vmul.f32 %v4533, 3.8918573e-05
        %v4546 = vadd.f32 %v4545, 0.001143296
        %v4547 = vmul.f32 %v4533, %v4546
        %v4548 = vadd.f32 %v4547, 0.014752088
        %v4549 = vmul.f32 %v4533, %v4548
        %v4550 = vadd.f32 %v4549, 0.112945676
        %v4551 = vmul.f32 %v4533, %v4550
        %v4552 = vadd.f32 %v4551, 0.4994258
        %v4553 = vmul.f32 %v4533, %v4552
        %v4554 = vadd.f32 %v4553, 1.0
        %v4555 = vrcp.pop %v4554
        %v4556 = vmul.f32 %v4554, %v4555
        %v4557 = vsub.f32 1.0, %v4556
        %v4558 = vmul.f32 %v4555, %v4557
        %v4559 = vadd.f32 %v4555, %v4558
        %vm4560 = vweird.f32 %v4554
        %vm4561 = vweird.f32 %v4555
        %vm4562 = vmor %vm4560, %vm4561
        %v4563 = vsel %vm4562, %v4555, %v4559
        %v4564 = vand.u32 2147483647, %v4554
        %vm4565 = vcmp.eq.f32.partialorder %v4564, 8.507059e+37
        %v4566 = vand.u32 %v4554, 2147483648
        %v4567 = vor.u32 1.1754944e-38, %v4566
        %v4568 = vsel %vm4565, %v4567, %v4563
        %v4569 = vmul.f32 %v4544, %v4568
        %v4570 = vmin.f32 %v4569, 1.0
        %v4571 = vmax.f32 %v4570, -1.0
        %v4572 = vadd.f32 %v3971, 1.0
        %v4573 = vadd.f32 %v4011, 1.0
        %v4574 = vadd.f32 %v4051, 1.0
        %v4575 = vadd.f32 %v4091, 1.0
        %v4576 = vadd.f32 %v4131, 1.0
        %v4577 = vadd.f32 %v4171, 1.0
        %v4578 = vadd.f32 %v4211, 1.0
        %v4579 = vadd.f32 %v4251, 1.0
        %v4580 = vadd.f32 %v4291, 1.0
        %v4581 = vadd.f32 %v4331, 1.0
        %v4582 = vadd.f32 %v4371, 1.0
        %v4583 = vadd.f32 %v4411, 1.0
        %v4584 = vadd.f32 %v4451, 1.0
        %v4585 = vadd.f32 %v4491, 1.0
        %v4586 = vadd.f32 %v4531, 1.0
        %v4587 = vadd.f32 %v4571, 1.0
        %v4588 = vmul.f32 %v3900, %v4572
        %v4589 = vmul.f32 %v3901, %v4573
        %v4590 = vmul.f32 %v3902, %v4574
        %v4591 = vmul.f32 %v3903, %v4575
        %v4592 = vmul.f32 %v3904, %v4576
        %v4593 = vmul.f32 %v3905, %v4577
        %v4594 = vmul.f32 %v3906, %v4578
        %v4595 = vmul.f32 %v3907, %v4579
        %v4596 = vmul.f32 %v3908, %v4580
        %v4597 = vmul.f32 %v3909, %v4581
        %v4598 = vmul.f32 %v3910, %v4582
        %v4599 = vmul.f32 %v3911, %v4583
        %v4600 = vmul.f32 %v3912, %v4584
        %v4601 = vmul.f32 %v3913, %v4585
        %v4602 = vmul.f32 %v3914, %v4586
        %v4603 = vmul.f32 %v3915, %v4587
        %4604 = vxpose.xlu0.b32.start [1/16] %v4588, 128
        %4605 = vxpose.xlu0.b32.cont [2/16] %v4589, 128
        %4606 = vxpose.xlu0.b32.cont [3/16] %v4590, 128
        %4607 = vxpose.xlu0.b32.cont [4/16] %v4591, 128
        %4608 = vxpose.xlu0.b32.cont [5/16] %v4592, 128
        %4609 = vxpose.xlu0.b32.cont [6/16] %v4593, 128
        %4610 = vxpose.xlu0.b32.cont [7/16] %v4594, 128
        %4611 = vxpose.xlu0.b32.cont [8/16] %v4595, 128
        %4612 = vxpose.xlu0.b32.cont [9/16] %v4596, 128
        %4613 = vxpose.xlu0.b32.cont [10/16] %v4597, 128
        %4614 = vxpose.xlu0.b32.cont [11/16] %v4598, 128
        %4615 = vxpose.xlu0.b32.cont [12/16] %v4599, 128
        %4616 = vxpose.xlu0.b32.cont [13/16] %v4600, 128
        %4617 = vxpose.xlu0.b32.cont [14/16] %v4601, 128
        %4618 = vxpose.xlu0.b32.cont [15/16] %v4602, 128
        %4619 = vxpose.xlu0.b32.end [16/16] %v4603, 128
        %v4620 = vpop.trf.xlu0
        %v4621 = vpop.trf.xlu0
        %v4622 = vpop.trf.xlu0
        %v4623 = vpop.trf.xlu0
        %v4624 = vpop.trf.xlu0
        %v4625 = vpop.trf.xlu0
        %v4626 = vpop.trf.xlu0
        %v4627 = vpop.trf.xlu0
        %v4628 = vpop.trf.xlu0
        %v4629 = vpop.trf.xlu0
        %v4630 = vpop.trf.xlu0
        %v4631 = vpop.trf.xlu0
        %v4632 = vpop.trf.xlu0
        %v4633 = vpop.trf.xlu0
        %v4634 = vpop.trf.xlu0
        %v4635 = vpop.trf.xlu0
        %4636 = vst [vmem:[%s258] sm:$0xff] %v4620
        %4637 = vst [vmem:[%s258 + $0x8] sm:$0xff] %v4621
        %s4638 = sand.u32 %s154, 1
        %s4639 = scalar_lea.sflag [#allocation6], %s4638
        %s4640 = sand.u32 %s154, 1
        %s4641 = smul.addr %s4640, 16
        %s4642 = scalar_lea.vmem [#allocation7], %s4641
        // Predicated region
        $region49: #{tpu_custom_call.1} parent=39 // pred_check
          %p4643 = pneg %p164
        $region50: #{tpu_custom_call.1} parent=39 // pred_check_branch
          %4645 = sbr.rel (%p4643) target = $region52
        $region51: #{tpu_custom_call.1} parent=39 // pred_region
          %4647 = vsyncadd %s4639, 0
          %s4648 = smul.addr %s26, 4
          %s4649 = sadd.s32 %s27, %s4648
          %s4650 = smul.addr %s4649, 8
          %s4651 = scalar_lea.hbm %s5, %s4650
          %s4652 = sshll.u32 %s4642, 4
          %s4653 = int_to_ptr.vmem [resolvable:$true] %s4652
          %s4654 = sshll.u32 %s4651, 4
          %s4655 = int_to_ptr.hbm [resolvable:$true] %s4654
          %4660 = dma.vmem_to_hbm [thread:$0]  %s4653, 256, %s4655, %s4639, 128, 256, 8
        $region52: #{tpu_custom_call.1} parent=39 // pred_fallthru
          _
      $region40: #{tpu_custom_call.1} parent=5 // pred_fallthru
        _
      %p4661 = scmp.le.s32.totalorder 2, %s17
      // Predicated region
      $region53: #{tpu_custom_call.1} parent=5 // pred_check
        %p4662 = pneg %p4661
      $region54: #{tpu_custom_call.1} parent=5 // pred_check_branch
        %4664 = sbr.rel (%p4662) target = $region56
      $region55: #{tpu_custom_call.1} parent=5 // pred_region
        %s4665 = ssub.s32 %s17, 2
        // Predicated region
        $region57: #{tpu_custom_call.1} parent=55 // pred_check
          %p4666 = pneg %p170
        $region58: #{tpu_custom_call.1} parent=55 // pred_check_branch
          %4668 = sbr.rel (%p4666) target = $region60
        $region59: #{tpu_custom_call.1} parent=55 // pred_region
          %s4669 = sand.u32 %s155, 1
          %s4670 = scalar_lea.sflag [#allocation6], %s4669
          %s4671 = sand.u32 %s155, 1
          %s4672 = smul.addr %s4671, 16
          %s4673 = scalar_lea.vmem [#allocation7], %s4672
          %4675 = dma.done %s4670, 256
        $region60: #{tpu_custom_call.1} parent=55 // pred_fallthru
          _
      $region56: #{tpu_custom_call.1} parent=5 // pred_fallthru
        _
    $region6: #{tpu_custom_call.1} parent=1 // loop_footer
      %s21 = sadd.s32 1, %s17
    $region7: #{tpu_custom_call.1} parent=1 // loop_footer_branch
      %16 = sbr.rel target = $region3
    $region8: #{tpu_custom_call.1} parent=1 // loop_exit
      _
    %4676 = vsyncpa [#allocation5], 1
    %s4677 = scalar_lea.sflag [#allocation5], 1
    %4678 = vsyncpa %s4677, 1
    %4679 = vsyncpa [#allocation6], 1
    %s4680 = scalar_lea.sflag [#allocation6], 1
    %4681 = vsyncpa %s4680, 1

</llo_original>
